<compile_context>
chip_gen: v5e
topology: v5e:2x2
jax: 0.10.0
libtpu: 0.0.40
codegen_flags: <defaults>
</compile_context>

<pallas_src>
import functools

import jax
import jax.numpy as jnp
from jax.experimental import pallas as pl
from jax.experimental.pallas import tpu as pltpu

EPS = 1e-5
LANE = 128
TILE_M = 512  # rows per 1x1/stats tile (measured ~85% of HBM roofline at 512+)


def _vmem_limit_bytes():
    # v5e/v6e: 128 MiB physical VMEM -> 64 MiB scoped budget; v7x: 64 MiB/TC
    # physical -> 32 MiB.  Fall back conservatively if the query is unavailable.
    try:
        info = pltpu.get_tpu_info()
        cap = int(getattr(info, "vmem_capacity_bytes", 128 * 1024 * 1024))
        return min(64 * 1024 * 1024, cap // 2)
    except Exception:
        return 64 * 1024 * 1024


VMEM_LIMIT = _vmem_limit_bytes()


def _round_up(n, m=LANE):
    return ((n + m - 1) // m) * m


def _pad_axis_to(a, axis, size):
    pad = size - a.shape[axis]
    if pad == 0:
        return a
    widths = [(0, 0)] * a.ndim
    widths[axis] = (0, pad)
    return jnp.pad(a, widths)


def _choose_tile_m(m, target=TILE_M):
    """Largest row tile <= target that divides m and keeps (tile, C) blocks
    (8,128)-legal; falls back to a single full block."""
    if m <= target:
        return m
    if m % target == 0:
        return target
    for t in range(target - target % 8, 7, -8):
        if m % t == 0:
            return t
    # TODO(synk): pad M up to a tile multiple instead of a full-M fallback.
    return m


# -----------------------------------------------------------------------------
# Per-tile (sum, centered M2) partials -> exact parallel-variance merge.
# -----------------------------------------------------------------------------
def _merge_stats(psum, pm2, rows_per_tile, total_rows):
    """psum/pm2: (T, C) per-tile sum and sum((x - tile_mean)^2)."""
    mean_t = psum / rows_per_tile
    mean = jnp.sum(psum, axis=0, keepdims=True) / total_rows
    m2 = (jnp.sum(pm2, axis=0, keepdims=True)
          + rows_per_tile * jnp.sum(jnp.square(mean_t - mean), axis=0,
                                    keepdims=True))
    var = jnp.maximum(m2 / total_rows, 0.0)
    return mean, var


def _fold_bn(mean, var, gamma, beta):
    scale = gamma * jax.lax.rsqrt(var + EPS)
    shift = beta - mean * scale
    return scale, shift


# -----------------------------------------------------------------------------
# Kernel 1: per-channel partial stats of a (M, C) slab (used only for the input
# x; every other BN gets its stats fused into the producer kernel).
# -----------------------------------------------------------------------------
def _stats_kernel(x_ref, psum_ref, pm2_ref):
    x = x_ref[...].astype(jnp.float32)
    rows = x.shape[0]
    s = jnp.sum(x, axis=0, keepdims=True)
    mu = s * (1.0 / rows)
    m2 = jnp.sum(jnp.square(x - mu), axis=0, keepdims=True)
    psum_ref[...] = s.reshape(1, 1, -1)
    pm2_ref[...] = m2.reshape(1, 1, -1)


def channel_stats(x2d):
    m, c = x2d.shape
    tm = _choose_tile_m(m)
    nt = m // tm
    psum, pm2 = pl.pallas_call(
        _stats_kernel,
        out_shape=(jax.ShapeDtypeStruct((nt, 1, c), jnp.float32),
                   jax.ShapeDtypeStruct((nt, 1, c), jnp.float32)),
        grid=(nt,),
        in_specs=[pl.BlockSpec((tm, c), lambda i: (i, 0))],
        out_specs=(pl.BlockSpec((1, 1, c), lambda i: (i, 0, 0)),
                   pl.BlockSpec((1, 1, c), lambda i: (i, 0, 0))),
        compiler_params=pltpu.CompilerParams(
            dimension_semantics=("parallel",),
            vmem_limit_bytes=VMEM_LIMIT),
    )(x2d)
    return _merge_stats(psum[:, 0, :], pm2[:, 0, :], tm, m)


# -----------------------------------------------------------------------------
# Kernel 2: out = relu(x*scale + shift) @ W  [+ shortcut] [+ fused stats]
# (fused BN/ReLU/1x1).  bf16 MXU operands, f32 accumulation.
# -----------------------------------------------------------------------------
def _ssr_mm_kernel(x_ref, s_ref, t_ref, w_ref, o_ref):
    act = jnp.maximum(x_ref[...].astype(jnp.float32) * s_ref[...] + t_ref[...],
                      0.0)
    o_ref[...] = jnp.dot(act.astype(jnp.bfloat16), w_ref[...],
                         preferred_element_type=jnp.float32).astype(o_ref.dtype)


def _ssr_mm_add_kernel(x_ref, s_ref, t_ref, w_ref, sc_ref, o_ref):
    act = jnp.maximum(x_ref[...].astype(jnp.float32) * s_ref[...] + t_ref[...],
                      0.0)
    out = jnp.dot(act.astype(jnp.bfloat16), w_ref[...],
                  preferred_element_type=jnp.float32)
    o_ref[...] = (out + sc_ref[...].astype(jnp.float32)).astype(o_ref.dtype)


def _ssr_mm_stats_kernel(x_ref, s_ref, t_ref, w_ref, o_ref, psum_ref, pm2_ref):
    act = jnp.maximum(x_ref[...].astype(jnp.float32) * s_ref[...] + t_ref[...],
                      0.0)
    out = jnp.dot(act.astype(jnp.bfloat16), w_ref[...],
                  preferred_element_type=jnp.float32)
    rows = out.shape[0]
    s = jnp.sum(out, axis=0, keepdims=True)
    mu = s * (1.0 / rows)
    m2 = jnp.sum(jnp.square(out - mu), axis=0, keepdims=True)
    psum_ref[...] = s.reshape(1, 1, -1)
    pm2_ref[...] = m2.reshape(1, 1, -1)
    o_ref[...] = out.astype(o_ref.dtype)


def ssr_matmul(x2d, scale, shift, w, shortcut=None, out_dtype=jnp.float32,
               with_stats=False):
    assert not (with_stats and shortcut is not None)
    m, cin = x2d.shape
    cout = w.shape[1]
    tm = _choose_tile_m(m)
    nt = m // tm
    row_spec = pl.BlockSpec((tm, cin), lambda i: (i, 0))
    vec_spec = pl.BlockSpec((1, cin), lambda i: (0, 0))
    w_spec = pl.BlockSpec((cin, cout), lambda i: (0, 0))
    out_spec = pl.BlockSpec((tm, cout), lambda i: (i, 0))
    stat_spec = pl.BlockSpec((1, 1, cout), lambda i: (i, 0, 0))
    cp = pltpu.CompilerParams(dimension_semantics=("parallel",),
                              vmem_limit_bytes=VMEM_LIMIT)

    if with_stats:
        out, psum, pm2 = pl.pallas_call(
            _ssr_mm_stats_kernel,
            out_shape=(jax.ShapeDtypeStruct((m, cout), out_dtype),
                       jax.ShapeDtypeStruct((nt, 1, cout), jnp.float32),
                       jax.ShapeDtypeStruct((nt, 1, cout), jnp.float32)),
            grid=(nt,),
            in_specs=[row_spec, vec_spec, vec_spec, w_spec],
            out_specs=(out_spec, stat_spec, stat_spec),
            compiler_params=cp,
        )(x2d, scale, shift, w)
        mean, var = _merge_stats(psum[:, 0, :], pm2[:, 0, :], tm, m)
        return out, mean, var

    if shortcut is None:
        return pl.pallas_call(
            _ssr_mm_kernel,
            out_shape=jax.ShapeDtypeStruct((m, cout), out_dtype),
            grid=(nt,),
            in_specs=[row_spec, vec_spec, vec_spec, w_spec],
            out_specs=out_spec,
            compiler_params=cp,
        )(x2d, scale, shift, w)

    sc_spec = pl.BlockSpec((tm, cout), lambda i: (i, 0))
    return pl.pallas_call(
        _ssr_mm_add_kernel,
        out_shape=jax.ShapeDtypeStruct((m, cout), out_dtype),
        grid=(nt,),
        in_specs=[row_spec, vec_spec, vec_spec, w_spec, sc_spec],
        out_specs=out_spec,
        compiler_params=cp,
    )(x2d, scale, shift, w, shortcut)


# -----------------------------------------------------------------------------
# Kernel 3: y2 = conv3x3(relu(x*scale + shift), stride, pad=1) + fused stats.
# Grid over batch ("parallel").  Per step: halo-padded f32 activation in VMEM
# (direct interior store + thin zero bands), the 3 dj taps folded into the
# matmul K dim -> 3 bf16 MXU passes per image, one output store.
# -----------------------------------------------------------------------------
def _ssr_conv3x3_kernel(x_ref, s_ref, t_ref, w_ref, o_ref, psum_ref, pm2_ref,
                        pad_ref, *, stride):
    _, H, W, C = x_ref.shape
    Ho = (H - 1) // stride + 1
    Wo = (W - 1) // stride + 1

    s = s_ref[...].reshape(1, 1, C)
    t = t_ref[...].reshape(1, 1, C)
    act = jnp.maximum(x_ref[0].astype(jnp.float32) * s + t, 0.0)   # (H, W, C)

    # Halo fill: direct interior store + 4 thin zero bands (no concat copy).
    zrow = jnp.zeros((1, W + 2, C), jnp.float32)
    zcol = jnp.zeros((H, 1, C), jnp.float32)
    pad_ref[0:1, :, :] = zrow
    pad_ref[H + 1:H + 2, :, :] = zrow
    pad_ref[1:H + 1, 0:1, :] = zcol
    pad_ref[1:H + 1, W + 1:W + 2, :] = zcol
    pad_ref[1:H + 1, 1:W + 1, :] = act

    # Fold the 3 dj taps into K: per di, lane-concat the 3 column-shifted
    # windows -> (Ho*Wo, 3C) @ (3C, C), accumulate 3 results, store once.
    acc = None
    if stride == 1:
        for di in range(3):
            patch = jnp.concatenate(
                [pad_ref[di:di + H, dj:dj + W, :] for dj in range(3)], axis=-1)
            contrib = jnp.dot(
                patch.reshape(H * W, 3 * C).astype(jnp.bfloat16), w_ref[di],
                preferred_element_type=jnp.float32)
            acc = contrib if acc is None else acc + contrib
    else:
        # TODO(synk): even/odd column pre-split for a gather-free stride-2 path.
        padv = pad_ref[...]
        for di in range(3):
            patch = jnp.concatenate(
                [padv[di:di + (Ho - 1) * stride + 1:stride,
                      dj:dj + (Wo - 1) * stride + 1:stride, :]
                 for dj in range(3)], axis=-1)
            contrib = jnp.dot(
                patch.reshape(Ho * Wo, 3 * C).astype(jnp.bfloat16), w_ref[di],
                preferred_element_type=jnp.float32)
            acc = contrib if acc is None else acc + contrib

    rows = Ho * Wo
    ssum = jnp.sum(acc, axis=0, keepdims=True)
    mu = ssum * (1.0 / rows)
    m2 = jnp.sum(jnp.square(acc - mu), axis=0, keepdims=True)
    psum_ref[...] = ssum.reshape(1, 1, C)
    pm2_ref[...] = m2.reshape(1, 1, C)
    o_ref[...] = acc.reshape(1, Ho, Wo, C).astype(o_ref.dtype)


def ssr_conv3x3(x4d, scale, shift, w3x3, stride, out_dtype=jnp.bfloat16):
    n, h, wd, c = x4d.shape
    ho = (h - 1) // stride + 1
    wo = (wd - 1) // stride + 1
    kernel = functools.partial(_ssr_conv3x3_kernel, stride=stride)
    out, psum, pm2 = pl.pallas_call(
        kernel,
        out_shape=(jax.ShapeDtypeStruct((n, ho, wo, c), out_dtype),
                   jax.ShapeDtypeStruct((n, 1, c), jnp.float32),
                   jax.ShapeDtypeStruct((n, 1, c), jnp.float32)),
        grid=(n,),
        in_specs=[
            pl.BlockSpec((1, h, wd, c), lambda i: (i, 0, 0, 0)),
            pl.BlockSpec((1, c), lambda i: (0, 0)),
            pl.BlockSpec((1, c), lambda i: (0, 0)),
            pl.BlockSpec((3, 3 * c, c), lambda i: (0, 0, 0)),
        ],
        out_specs=(pl.BlockSpec((1, ho, wo, c), lambda i: (i, 0, 0, 0)),
                   pl.BlockSpec((1, 1, c), lambda i: (i, 0, 0)),
                   pl.BlockSpec((1, 1, c), lambda i: (i, 0, 0))),
        scratch_shapes=[pltpu.VMEM((h + 2, wd + 2, c), jnp.float32)],
        compiler_params=pltpu.CompilerParams(
            dimension_semantics=("parallel",),
            vmem_limit_bytes=VMEM_LIMIT),
    )(x4d, scale, shift, w3x3)
    mean, var = _merge_stats(psum[:, 0, :], pm2[:, 0, :], ho * wo, n * ho * wo)
    return out.reshape(n * ho * wo, c), mean, var


# -----------------------------------------------------------------------------
# Full block.  NHWC core (no transposes); thin NCHW wrapper for PyTorch parity.
# -----------------------------------------------------------------------------
def bottleneck_block_nhwc(x_nhwc, params, stride=1):
    n, h, w, cin = x_nhwc.shape
    cmid = params["w1"].shape[1]
    planes = params["w3"].shape[1]

    cin_p = _round_up(cin)
    cmid_p = _round_up(cmid)
    cout_p = _round_up(planes)

    # Pad channel dims to 128 lanes (no-op at real ResNet widths).  Padded
    # gammas/betas/weights are zero, so padded channels stay exactly zero.
    xp = _pad_axis_to(x_nhwc.astype(jnp.float32), 3, cin_p)
    g1 = _pad_axis_to(params["g1"], 1, cin_p)
    b1 = _pad_axis_to(params["b1"], 1, cin_p)
    gs = _pad_axis_to(params["gs"], 1, cin_p)
    bs = _pad_axis_to(params["bs"], 1, cin_p)
    g2 = _pad_axis_to(params["g2"], 1, cmid_p)
    b2 = _pad_axis_to(params["b2"], 1, cmid_p)
    g3 = _pad_axis_to(params["g3"], 1, cmid_p)
    b3 = _pad_axis_to(params["b3"], 1, cmid_p)
    # Weights: pad then cast to bf16 once (halves weight DMA, MXU-native).
    w1 = _pad_axis_to(_pad_axis_to(params["w1"], 0, cin_p), 1, cmid_p)
    w1 = w1.astype(jnp.bfloat16)
    w2 = _pad_axis_to(_pad_axis_to(params["w2"], 2, cmid_p), 3, cmid_p)
    w2 = w2.reshape(3, 3 * cmid_p, cmid_p).astype(jnp.bfloat16)  # dj folded in K
    w3 = _pad_axis_to(_pad_axis_to(params["w3"], 0, cmid_p), 1, cout_p)
    w3 = w3.astype(jnp.bfloat16)
    ws = _pad_axis_to(_pad_axis_to(params["ws"], 0, cin_p), 1, cout_p)
    ws = ws.astype(jnp.bfloat16)

    x2d = xp.reshape(n * h * w, cin_p)

    # bn1 and the shortcut BN both see x -> one stats pass serves both.
    mean_x, var_x = channel_stats(x2d)
    s1, t1 = _fold_bn(mean_x, var_x, g1, b1)

    # stage 1: y1 = relu(bn1(x)) @ W1 — bn2 stats fused into the producer.
    y1_2d, mean1, var1 = ssr_matmul(x2d, s1, t1, w1,
                                    out_dtype=jnp.bfloat16, with_stats=True)
    s2, t2 = _fold_bn(mean1, var1, g2, b2)

    # stage 2: y2 = conv3x3(relu(bn2(y1)), stride, pad=1) — bn3 stats fused.
    y2_2d, mean2, var2 = ssr_conv3x3(y1_2d.reshape(n, h, w, cmid_p),
                                     s2, t2, w2, stride)
    s3, t3 = _fold_bn(mean2, var2, g3, b3)

    ho = (h - 1) // stride + 1
    wo = (w - 1) // stride + 1

    # shortcut branch
    if stride == 1 and cin == planes:
        sc2d = x2d                                            # identity
    else:
        ss, ts = _fold_bn(mean_x, var_x, gs, bs)
        if stride == 1:
            xs2d = x2d
        else:
            # only the strided output positions feed the 1x1 projection matmul
            xs2d = xp[:, ::stride, ::stride, :].reshape(n * ho * wo, cin_p)
        sc2d = ssr_matmul(xs2d, ss, ts, ws)                   # (Mout, cout_p)

    # stage 3: relu(bn3(y2)) @ W3 + shortcut    (residual add fused in-kernel)
    out2d = ssr_matmul(y2_2d, s3, t3, w3, shortcut=sc2d)

    return out2d.reshape(n, ho, wo, cout_p)[..., :planes]


def bottleneck_block(x_nchw, params, stride=1):
    # NCHW wrapper to match the PyTorch module; prefer bottleneck_block_nhwc
    # directly when the caller is already NHWC.
    x_nhwc = jnp.transpose(x_nchw, (0, 2, 3, 1))
    out = bottleneck_block_nhwc(x_nhwc, params, stride=stride)
    return jnp.transpose(out, (0, 3, 1, 2))


# -----------------------------------------------------------------------------
# Deterministic parameter init (shapes from the PyTorch __init__)
# -----------------------------------------------------------------------------
def init_params(key, inplanes, planes):
    cmid = planes // 4
    k1, k2, k3, k4, k5, k6 = jax.random.split(key, 6)
    return {
        "g1": 1.0 + 0.1 * jax.random.normal(k5, (1, inplanes), jnp.float32),
        "b1": 0.1 * jax.random.normal(k6, (1, inplanes), jnp.float32),
        "w1": 0.2 * jax.random.normal(k1, (inplanes, cmid), jnp.float32),    # conv1x1
        "g2": jnp.ones((1, cmid), jnp.float32),
        "b2": jnp.zeros((1, cmid), jnp.float32),
        "w2": 0.2 * jax.random.normal(k2, (3, 3, cmid, cmid), jnp.float32),  # conv3x3 HWIO
        "g3": jnp.ones((1, cmid), jnp.float32),
        "b3": jnp.zeros((1, cmid), jnp.float32),
        "w3": 0.2 * jax.random.normal(k3, (cmid, planes), jnp.float32),      # conv1x1
        "gs": jnp.ones((1, inplanes), jnp.float32),
        "bs": jnp.zeros((1, inplanes), jnp.float32),
        "ws": 0.2 * jax.random.normal(k4, (inplanes, planes), jnp.float32),  # shortcut 1x1
    }


# -----------------------------------------------------------------------------
# Pure-JAX reference for verification (f32 throughout)
# -----------------------------------------------------------------------------
def reference(x_nchw, params, stride=1):
    x = jnp.transpose(x_nchw, (0, 2, 3, 1)).astype(jnp.float32)

    def bn(v, g, b):
        mean = v.mean(axis=(0, 1, 2), keepdims=True)
        var = ((v - mean) ** 2).mean(axis=(0, 1, 2), keepdims=True)
        return (v - mean) * jax.lax.rsqrt(var + EPS) * g.reshape(1, 1, 1, -1) \
            + b.reshape(1, 1, 1, -1)

    def conv(v, w, s):
        p = (w.shape[0] - 1) // 2
        return jax.lax.conv_general_dilated(
            v, w, window_strides=(s, s), padding=[(p, p), (p, p)],
            dimension_numbers=("NHWC", "HWIO", "NHWC"))

    relu = lambda v: jnp.maximum(v, 0.0)
    w1 = params["w1"].reshape(1, 1, *params["w1"].shape)
    w3 = params["w3"].reshape(1, 1, *params["w3"].shape)
    ws = params["ws"].reshape(1, 1, *params["ws"].shape)

    out = conv(relu(bn(x, params["g1"], params["b1"])), w1, 1)
    out = conv(relu(bn(out, params["g2"], params["b2"])), params["w2"], stride)
    out = conv(relu(bn(out, params["g3"], params["b3"])), w3, 1)

    inplanes, planes = x.shape[-1], params["w3"].shape[1]
    if stride == 1 and inplanes == planes:
        sc = x
    else:
        sc = conv(relu(bn(x, params["gs"], params["bs"])), ws, stride)
    out = out + sc
    return jnp.transpose(out, (0, 3, 1, 2))


if __name__ == "__main__":
    key = jax.random.PRNGKey(0)
    kx, kp = jax.random.split(key)

    N, inplanes, H, W = 2, 4, 16, 16
    planes, stride = 16, 1

    x = jax.random.normal(kx, (N, inplanes, H, W), jnp.float32)
    params = init_params(kp, inplanes, planes)

    fwd = jax.jit(functools.partial(bottleneck_block, stride=stride))
    out = jax.block_until_ready(fwd(x, params))

    ref = reference(x, params, stride=stride)
    assert out.shape == ref.shape, (out.shape, ref.shape)
    # bf16 MXU operands (f32 accumulation) -> compare against the f32 reference
    # with a bf16-scale tolerance.
    if not jnp.allclose(out, ref, atol=5e-2, rtol=5e-2):
        max_err = float(jnp.max(jnp.abs(out - ref)))
        raise AssertionError(f"Pallas output mismatch, max abs err = {max_err}")
    print("KERNEL_OK")
</pallas_src>

<mosaic_0001>
module attributes {stable_mosaic.version = 11 : i64} {
  func.func @_stats_kernel(%arg0: i32, %arg1: memref<512x128xf32, #tpu.memory_space<vmem>>, %arg2: memref<1x1x128xf32, #tpu.memory_space<vmem>>, %arg3: memref<1x1x128xf32, #tpu.memory_space<vmem>>) attributes {dimension_semantics = [#tpu.dimension_semantics<parallel>], iteration_bounds = array<i64: 1>, scalar_prefetch = 0 : i64, scratch_operands = 0 : i64, tpu.core_type = #tpu.core_type<tc>, window_params = [{transform_indices = @transform_0, window_bounds = array<i64: 512, 128>}, {transform_indices = @transform_1, window_bounds = array<i64: 1, 1, 128>}, {transform_indices = @transform_2, window_bounds = array<i64: 1, 1, 128>}]} {
    %c0 = arith.constant 0 : index
    %c0_0 = arith.constant 0 : index
    %0 = vector.load %arg1[%c0, %c0_0] : memref<512x128xf32, #tpu.memory_space<vmem>>, vector<512x128xf32>
    %cst = arith.constant dense<0.000000e+00> : vector<128xf32>
    %1 = vector.multi_reduction <add>, %0, %cst [0] : vector<512x128xf32> to vector<128xf32>
    %2 = vector.shape_cast %1 : vector<128xf32> to vector<1x128xf32>
    %cst_1 = arith.constant 0.001953125 : f32
    %3 = vector.broadcast %cst_1 : f32 to vector<1x128xf32>
    %4 = arith.mulf %2, %3 : vector<1x128xf32>
    %5 = vector.broadcast %4 : vector<1x128xf32> to vector<512x128xf32>
    %6 = arith.subf %0, %5 : vector<512x128xf32>
    %7 = arith.mulf %6, %6 : vector<512x128xf32>
    %cst_2 = arith.constant dense<0.000000e+00> : vector<128xf32>
    %8 = vector.multi_reduction <add>, %7, %cst_2 [0] : vector<512x128xf32> to vector<128xf32>
    %9 = vector.shape_cast %8 : vector<128xf32> to vector<1x128xf32>
    %10 = vector.shape_cast %2 : vector<1x128xf32> to vector<1x1x128xf32>
    %c0_3 = arith.constant 0 : index
    %c0_4 = arith.constant 0 : index
    %c0_5 = arith.constant 0 : index
    %11 = vector.load %arg2[%c0_3, %c0_4, %c0_5] : memref<1x1x128xf32, #tpu.memory_space<vmem>>, vector<1x1x128xf32>
    tpu.vector_store %arg2[%c0_3, %c0_4, %c0_5], %10 {strides = array<i32>} : memref<1x1x128xf32, #tpu.memory_space<vmem>>, vector<1x1x128xf32>,
    %12 = vector.shape_cast %9 : vector<1x128xf32> to vector<1x1x128xf32>
    %c0_6 = arith.constant 0 : index
    %c0_7 = arith.constant 0 : index
    %c0_8 = arith.constant 0 : index
    %13 = vector.load %arg3[%c0_6, %c0_7, %c0_8] : memref<1x1x128xf32, #tpu.memory_space<vmem>>, vector<1x1x128xf32>
    tpu.vector_store %arg3[%c0_6, %c0_7, %c0_8], %12 {strides = array<i32>} : memref<1x1x128xf32, #tpu.memory_space<vmem>>, vector<1x1x128xf32>,
    return
  }
  func.func @transform_0(%arg0: i32) -> (i32, i32) {
    %c0_i32 = arith.constant 0 : i32
    %c0_i32_0 = arith.constant 0 : i32
    return %arg0, %c0_i32 : i32, i32
  }
  func.func @transform_1(%arg0: i32) -> (i32, i32, i32) {
    %c0_i32 = arith.constant 0 : i32
    %c0_i32_0 = arith.constant 0 : i32
    %c0_i32_1 = arith.constant 0 : i32
    return %arg0, %c0_i32, %c0_i32_0 : i32, i32, i32
  }
  func.func @transform_2(%arg0: i32) -> (i32, i32, i32) {
    %c0_i32 = arith.constant 0 : i32
    %c0_i32_0 = arith.constant 0 : i32
    %c0_i32_1 = arith.constant 0 : i32
    return %arg0, %c0_i32, %c0_i32_0 : i32, i32, i32
  }
}

module attributes {stable_mosaic.version = 11 : i64} {
  func.func @_ssr_mm_stats_kernel(%arg0: i32, %arg1: memref<512x128xf32, #tpu.memory_space<vmem>>, %arg2: memref<1x128xf32, #tpu.memory_space<vmem>>, %arg3: memref<1x128xf32, #tpu.memory_space<vmem>>, %arg4: memref<128x128xbf16, #tpu.memory_space<vmem>>, %arg5: memref<512x128xbf16, #tpu.memory_space<vmem>>, %arg6: memref<1x1x128xf32, #tpu.memory_space<vmem>>, %arg7: memref<1x1x128xf32, #tpu.memory_space<vmem>>) attributes {dimension_semantics = [#tpu.dimension_semantics<parallel>], iteration_bounds = array<i64: 1>, scalar_prefetch = 0 : i64, scratch_operands = 0 : i64, tpu.core_type = #tpu.core_type<tc>, window_params = [{transform_indices = @transform_0, window_bounds = array<i64: 512, 128>}, {pipeline_mode = #tpu.pipeline_mode<synchronous>, transform_indices = @transform_1, window_bounds = array<i64: 1, 128>}, {pipeline_mode = #tpu.pipeline_mode<synchronous>, transform_indices = @transform_2, window_bounds = array<i64: 1, 128>}, {pipeline_mode = #tpu.pipeline_mode<synchronous>, transform_indices = @transform_3, window_bounds = array<i64: 128, 128>}, {transform_indices = @transform_4, window_bounds = array<i64: 512, 128>}, {transform_indices = @transform_5, window_bounds = array<i64: 1, 1, 128>}, {transform_indices = @transform_6, window_bounds = array<i64: 1, 1, 128>}]} {
    %c0 = arith.constant 0 : index
    %c0_0 = arith.constant 0 : index
    %0 = vector.load %arg1[%c0, %c0_0] : memref<512x128xf32, #tpu.memory_space<vmem>>, vector<512x128xf32>
    %c0_1 = arith.constant 0 : index
    %c0_2 = arith.constant 0 : index
    %1 = vector.load %arg2[%c0_1, %c0_2] : memref<1x128xf32, #tpu.memory_space<vmem>>, vector<1x128xf32>
    %2 = vector.broadcast %1 : vector<1x128xf32> to vector<512x128xf32>
    %3 = arith.mulf %0, %2 : vector<512x128xf32>
    %c0_3 = arith.constant 0 : index
    %c0_4 = arith.constant 0 : index
    %4 = vector.load %arg3[%c0_3, %c0_4] : memref<1x128xf32, #tpu.memory_space<vmem>>, vector<1x128xf32>
    %5 = vector.broadcast %4 : vector<1x128xf32> to vector<512x128xf32>
    %6 = arith.addf %3, %5 : vector<512x128xf32>
    %cst = arith.constant 0.000000e+00 : f32
    %7 = vector.broadcast %cst : f32 to vector<512x128xf32>
    %8 = arith.maximumf %6, %7 : vector<512x128xf32>
    %9 = arith.truncf %8 : vector<512x128xf32> to vector<512x128xbf16>
    %c0_5 = arith.constant 0 : index
    %c0_6 = arith.constant 0 : index
    %10 = vector.load %arg4[%c0_5, %c0_6] : memref<128x128xbf16, #tpu.memory_space<vmem>>, vector<128x128xbf16>
    %cst_7 = arith.constant dense<0.000000e+00> : vector<512x128xf32>
    %11 = tpu.matmul %9, %10, %cst_7 {dimension_numbers = #tpu.dot_dimension_numbers<[1], [0], [0], [1], [0, 0, 1, 1], [], []>} : vector<512x128xbf16>, vector<128x128xbf16>, vector<512x128xf32> -> vector<512x128xf32>
    %cst_8 = arith.constant dense<0.000000e+00> : vector<128xf32>
    %12 = vector.multi_reduction <add>, %11, %cst_8 [0] : vector<512x128xf32> to vector<128xf32>
    %13 = vector.shape_cast %12 : vector<128xf32> to vector<1x128xf32>
    %cst_9 = arith.constant 0.001953125 : f32
    %14 = vector.broadcast %cst_9 : f32 to vector<1x128xf32>
    %15 = arith.mulf %13, %14 : vector<1x128xf32>
    %16 = vector.broadcast %15 : vector<1x128xf32> to vector<512x128xf32>
    %17 = arith.subf %11, %16 : vector<512x128xf32>
    %18 = arith.mulf %17, %17 : vector<512x128xf32>
    %cst_10 = arith.constant dense<0.000000e+00> : vector<128xf32>
    %19 = vector.multi_reduction <add>, %18, %cst_10 [0] : vector<512x128xf32> to vector<128xf32>
    %20 = vector.shape_cast %19 : vector<128xf32> to vector<1x128xf32>
    %21 = vector.shape_cast %13 : vector<1x128xf32> to vector<1x1x128xf32>
    %c0_11 = arith.constant 0 : index
    %c0_12 = arith.constant 0 : index
    %c0_13 = arith.constant 0 : index
    %22 = vector.load %arg6[%c0_11, %c0_12, %c0_13] : memref<1x1x128xf32, #tpu.memory_space<vmem>>, vector<1x1x128xf32>
    tpu.vector_store %arg6[%c0_11, %c0_12, %c0_13], %21 {strides = array<i32>} : memref<1x1x128xf32, #tpu.memory_space<vmem>>, vector<1x1x128xf32>,
    %23 = vector.shape_cast %20 : vector<1x128xf32> to vector<1x1x128xf32>
    %c0_14 = arith.constant 0 : index
    %c0_15 = arith.constant 0 : index
    %c0_16 = arith.constant 0 : index
    %24 = vector.load %arg7[%c0_14, %c0_15, %c0_16] : memref<1x1x128xf32, #tpu.memory_space<vmem>>, vector<1x1x128xf32>
    tpu.vector_store %arg7[%c0_14, %c0_15, %c0_16], %23 {strides = array<i32>} : memref<1x1x128xf32, #tpu.memory_space<vmem>>, vector<1x1x128xf32>,
    %25 = arith.truncf %11 : vector<512x128xf32> to vector<512x128xbf16>
    %c0_17 = arith.constant 0 : index
    %c0_18 = arith.constant 0 : index
    %26 = vector.load %arg5[%c0_17, %c0_18] : memref<512x128xbf16, #tpu.memory_space<vmem>>, vector<512x128xbf16>
    tpu.vector_store %arg5[%c0_17, %c0_18], %25 {strides = array<i32>} : memref<512x128xbf16, #tpu.memory_space<vmem>>, vector<512x128xbf16>,
    return
  }
  func.func @transform_0(%arg0: i32) -> (i32, i32) {
    %c0_i32 = arith.constant 0 : i32
    %c0_i32_0 = arith.constant 0 : i32
    return %arg0, %c0_i32 : i32, i32
  }
  func.func @transform_1(%arg0: i32) -> (i32, i32) {
    %c0_i32 = arith.constant 0 : i32
    %c0_i32_0 = arith.constant 0 : i32
    %c0_i32_1 = arith.constant 0 : i32
    return %c0_i32, %c0_i32_0 : i32, i32
  }
  func.func @transform_2(%arg0: i32) -> (i32, i32) {
    %c0_i32 = arith.constant 0 : i32
    %c0_i32_0 = arith.constant 0 : i32
    %c0_i32_1 = arith.constant 0 : i32
    return %c0_i32, %c0_i32_0 : i32, i32
  }
  func.func @transform_3(%arg0: i32) -> (i32, i32) {
    %c0_i32 = arith.constant 0 : i32
    %c0_i32_0 = arith.constant 0 : i32
    %c0_i32_1 = arith.constant 0 : i32
    return %c0_i32, %c0_i32_0 : i32, i32
  }
  func.func @transform_4(%arg0: i32) -> (i32, i32) {
    %c0_i32 = arith.constant 0 : i32
    %c0_i32_0 = arith.constant 0 : i32
    return %arg0, %c0_i32 : i32, i32
  }
  func.func @transform_5(%arg0: i32) -> (i32, i32, i32) {
    %c0_i32 = arith.constant 0 : i32
    %c0_i32_0 = arith.constant 0 : i32
    %c0_i32_1 = arith.constant 0 : i32
    return %arg0, %c0_i32, %c0_i32_0 : i32, i32, i32
  }
  func.func @transform_6(%arg0: i32) -> (i32, i32, i32) {
    %c0_i32 = arith.constant 0 : i32
    %c0_i32_0 = arith.constant 0 : i32
    %c0_i32_1 = arith.constant 0 : i32
    return %arg0, %c0_i32, %c0_i32_0 : i32, i32, i32
  }
}

module attributes {stable_mosaic.version = 11 : i64} {
  func.func @_ssr_conv3x3_kernel(%arg0: i32, %arg1: memref<1x16x16x128xbf16, #tpu.memory_space<vmem>>, %arg2: memref<1x128xf32, #tpu.memory_space<vmem>>, %arg3: memref<1x128xf32, #tpu.memory_space<vmem>>, %arg4: memref<3x384x128xbf16, #tpu.memory_space<vmem>>, %arg5: memref<1x16x16x128xbf16, #tpu.memory_space<vmem>>, %arg6: memref<1x1x128xf32, #tpu.memory_space<vmem>>, %arg7: memref<1x1x128xf32, #tpu.memory_space<vmem>>, %arg8: memref<18x18x128xf32, #tpu.memory_space<vmem>>) attributes {dimension_semantics = [#tpu.dimension_semantics<parallel>], iteration_bounds = array<i64: 2>, scalar_prefetch = 0 : i64, scratch_operands = 1 : i64, tpu.core_type = #tpu.core_type<tc>, window_params = [{transform_indices = @transform_0, window_bounds = array<i64: 1, 16, 16, 128>}, {pipeline_mode = #tpu.pipeline_mode<synchronous>, transform_indices = @transform_1, window_bounds = array<i64: 1, 128>}, {pipeline_mode = #tpu.pipeline_mode<synchronous>, transform_indices = @transform_2, window_bounds = array<i64: 1, 128>}, {pipeline_mode = #tpu.pipeline_mode<synchronous>, transform_indices = @transform_3, window_bounds = array<i64: 3, 384, 128>}, {transform_indices = @transform_4, window_bounds = array<i64: 1, 16, 16, 128>}, {transform_indices = @transform_5, window_bounds = array<i64: 1, 1, 128>}, {transform_indices = @transform_6, window_bounds = array<i64: 1, 1, 128>}]} {
    %c0 = arith.constant 0 : index
    %c0_0 = arith.constant 0 : index
    %0 = vector.load %arg2[%c0, %c0_0] : memref<1x128xf32, #tpu.memory_space<vmem>>, vector<1x128xf32>
    %1 = vector.shape_cast %0 : vector<1x128xf32> to vector<1x1x128xf32>
    %c0_1 = arith.constant 0 : index
    %c0_2 = arith.constant 0 : index
    %2 = vector.load %arg3[%c0_1, %c0_2] : memref<1x128xf32, #tpu.memory_space<vmem>>, vector<1x128xf32>
    %3 = vector.shape_cast %2 : vector<1x128xf32> to vector<1x1x128xf32>
    %c0_3 = arith.constant 0 : index
    %c0_4 = arith.constant 0 : index
    %c0_5 = arith.constant 0 : index
    %c0_6 = arith.constant 0 : index
    %4 = vector.load %arg1[%c0_3, %c0_4, %c0_5, %c0_6] : memref<1x16x16x128xbf16, #tpu.memory_space<vmem>>, vector<1x16x16x128xbf16>
    %5 = vector.shape_cast %4 : vector<1x16x16x128xbf16> to vector<16x16x128xbf16>
    %6 = arith.extf %5 : vector<16x16x128xbf16> to vector<16x16x128xf32>
    %7 = vector.broadcast %1 : vector<1x1x128xf32> to vector<16x16x128xf32>
    %8 = arith.mulf %6, %7 : vector<16x16x128xf32>
    %9 = vector.broadcast %3 : vector<1x1x128xf32> to vector<16x16x128xf32>
    %10 = arith.addf %8, %9 : vector<16x16x128xf32>
    %cst = arith.constant 0.000000e+00 : f32
    %11 = vector.broadcast %cst : f32 to vector<16x16x128xf32>
    %12 = arith.maximumf %10, %11 : vector<16x16x128xf32>
    %cst_7 = arith.constant 0.000000e+00 : f32
    %13 = vector.broadcast %cst_7 : f32 to vector<1x18x128xf32>
    %cst_8 = arith.constant 0.000000e+00 : f32
    %14 = vector.broadcast %cst_8 : f32 to vector<16x1x128xf32>
    %c0_9 = arith.constant 0 : index
    %c0_10 = arith.constant 0 : index
    %c0_11 = arith.constant 0 : index
    %15 = vector.load %arg8[%c0_9, %c0_10, %c0_11] : memref<18x18x128xf32, #tpu.memory_space<vmem>>, vector<1x18x128xf32>
    tpu.vector_store %arg8[%c0_9, %c0_10, %c0_11], %13 {strides = array<i32>} : memref<18x18x128xf32, #tpu.memory_space<vmem>>, vector<1x18x128xf32>,
    %c17 = arith.constant 17 : index
    %c0_12 = arith.constant 0 : index
    %c0_13 = arith.constant 0 : index
    %16 = vector.load %arg8[%c17, %c0_12, %c0_13] : memref<18x18x128xf32, #tpu.memory_space<vmem>>, vector<1x18x128xf32>
    tpu.vector_store %arg8[%c17, %c0_12, %c0_13], %13 {strides = array<i32>} : memref<18x18x128xf32, #tpu.memory_space<vmem>>, vector<1x18x128xf32>,
    %c1 = arith.constant 1 : index
    %c0_14 = arith.constant 0 : index
    %c0_15 = arith.constant 0 : index
    %17 = vector.load %arg8[%c1, %c0_14, %c0_15] : memref<18x18x128xf32, #tpu.memory_space<vmem>>, vector<16x1x128xf32>
    tpu.vector_store %arg8[%c1, %c0_14, %c0_15], %14 {strides = array<i32>} : memref<18x18x128xf32, #tpu.memory_space<vmem>>, vector<16x1x128xf32>,
    %c1_16 = arith.constant 1 : index
    %c17_17 = arith.constant 17 : index
    %c0_18 = arith.constant 0 : index
    %18 = vector.load %arg8[%c1_16, %c17_17, %c0_18] : memref<18x18x128xf32, #tpu.memory_space<vmem>>, vector<16x1x128xf32>
    tpu.vector_store %arg8[%c1_16, %c17_17, %c0_18], %14 {strides = array<i32>} : memref<18x18x128xf32, #tpu.memory_space<vmem>>, vector<16x1x128xf32>,
    %c1_19 = arith.constant 1 : index
    %c1_20 = arith.constant 1 : index
    %c0_21 = arith.constant 0 : index
    %19 = vector.load %arg8[%c1_19, %c1_20, %c0_21] : memref<18x18x128xf32, #tpu.memory_space<vmem>>, vector<16x16x128xf32>
    tpu.vector_store %arg8[%c1_19, %c1_20, %c0_21], %12 {strides = array<i32>} : memref<18x18x128xf32, #tpu.memory_space<vmem>>, vector<16x16x128xf32>,
    %c0_22 = arith.constant 0 : index
    %c0_23 = arith.constant 0 : index
    %c0_24 = arith.constant 0 : index
    %20 = vector.load %arg8[%c0_22, %c0_23, %c0_24] : memref<18x18x128xf32, #tpu.memory_space<vmem>>, vector<16x16x128xf32>
    %c0_25 = arith.constant 0 : index
    %c1_26 = arith.constant 1 : index
    %c0_27 = arith.constant 0 : index
    %21 = vector.load %arg8[%c0_25, %c1_26, %c0_27] : memref<18x18x128xf32, #tpu.memory_space<vmem>>, vector<16x16x128xf32>
    %c0_28 = arith.constant 0 : index
    %c2 = arith.constant 2 : index
    %c0_29 = arith.constant 0 : index
    %22 = vector.load %arg8[%c0_28, %c2, %c0_29] : memref<18x18x128xf32, #tpu.memory_space<vmem>>, vector<16x16x128xf32>
    %23 = tpu.concatenate %20, %21, %22 in 2 : vector<16x16x128xf32>, vector<16x16x128xf32>, vector<16x16x128xf32> -> vector<16x16x384xf32>
    %24 = vector.shape_cast %23 : vector<16x16x384xf32> to vector<256x384xf32>
    %25 = arith.truncf %24 : vector<256x384xf32> to vector<256x384xbf16>
    %c0_30 = arith.constant 0 : index
    %c0_31 = arith.constant 0 : index
    %c0_32 = arith.constant 0 : index
    %26 = vector.load %arg4[%c0_30, %c0_31, %c0_32] : memref<3x384x128xbf16, #tpu.memory_space<vmem>>, vector<1x384x128xbf16>
    %27 = vector.shape_cast %26 : vector<1x384x128xbf16> to vector<384x128xbf16>
    %cst_33 = arith.constant dense<0.000000e+00> : vector<256x128xf32>
    %28 = tpu.matmul %25, %27, %cst_33 {dimension_numbers = #tpu.dot_dimension_numbers<[1], [0], [0], [1], [0, 0, 1, 1], [], []>} : vector<256x384xbf16>, vector<384x128xbf16>, vector<256x128xf32> -> vector<256x128xf32>
    %c1_34 = arith.constant 1 : index
    %c0_35 = arith.constant 0 : index
    %c0_36 = arith.constant 0 : index
    %29 = vector.load %arg8[%c1_34, %c0_35, %c0_36] : memref<18x18x128xf32, #tpu.memory_space<vmem>>, vector<16x16x128xf32>
    %c1_37 = arith.constant 1 : index
    %c1_38 = arith.constant 1 : index
    %c0_39 = arith.constant 0 : index
    %30 = vector.load %arg8[%c1_37, %c1_38, %c0_39] : memref<18x18x128xf32, #tpu.memory_space<vmem>>, vector<16x16x128xf32>
    %c1_40 = arith.constant 1 : index
    %c2_41 = arith.constant 2 : index
    %c0_42 = arith.constant 0 : index
    %31 = vector.load %arg8[%c1_40, %c2_41, %c0_42] : memref<18x18x128xf32, #tpu.memory_space<vmem>>, vector<16x16x128xf32>
    %32 = tpu.concatenate %29, %30, %31 in 2 : vector<16x16x128xf32>, vector<16x16x128xf32>, vector<16x16x128xf32> -> vector<16x16x384xf32>
    %33 = vector.shape_cast %32 : vector<16x16x384xf32> to vector<256x384xf32>
    %34 = arith.truncf %33 : vector<256x384xf32> to vector<256x384xbf16>
    %c1_43 = arith.constant 1 : index
    %c0_44 = arith.constant 0 : index
    %c0_45 = arith.constant 0 : index
    %35 = vector.load %arg4[%c1_43, %c0_44, %c0_45] : memref<3x384x128xbf16, #tpu.memory_space<vmem>>, vector<1x384x128xbf16>
    %36 = vector.shape_cast %35 : vector<1x384x128xbf16> to vector<384x128xbf16>
    %cst_46 = arith.constant dense<0.000000e+00> : vector<256x128xf32>
    %37 = tpu.matmul %34, %36, %cst_46 {dimension_numbers = #tpu.dot_dimension_numbers<[1], [0], [0], [1], [0, 0, 1, 1], [], []>} : vector<256x384xbf16>, vector<384x128xbf16>, vector<256x128xf32> -> vector<256x128xf32>
    %38 = arith.addf %28, %37 : vector<256x128xf32>
    %c2_47 = arith.constant 2 : index
    %c0_48 = arith.constant 0 : index
    %c0_49 = arith.constant 0 : index
    %39 = vector.load %arg8[%c2_47, %c0_48, %c0_49] : memref<18x18x128xf32, #tpu.memory_space<vmem>>, vector<16x16x128xf32>
    %c2_50 = arith.constant 2 : index
    %c1_51 = arith.constant 1 : index
    %c0_52 = arith.constant 0 : index
    %40 = vector.load %arg8[%c2_50, %c1_51, %c0_52] : memref<18x18x128xf32, #tpu.memory_space<vmem>>, vector<16x16x128xf32>
    %c2_53 = arith.constant 2 : index
    %c2_54 = arith.constant 2 : index
    %c0_55 = arith.constant 0 : index
    %41 = vector.load %arg8[%c2_53, %c2_54, %c0_55] : memref<18x18x128xf32, #tpu.memory_space<vmem>>, vector<16x16x128xf32>
    %42 = tpu.concatenate %39, %40, %41 in 2 : vector<16x16x128xf32>, vector<16x16x128xf32>, vector<16x16x128xf32> -> vector<16x16x384xf32>
    %43 = vector.shape_cast %42 : vector<16x16x384xf32> to vector<256x384xf32>
    %44 = arith.truncf %43 : vector<256x384xf32> to vector<256x384xbf16>
    %c2_56 = arith.constant 2 : index
    %c0_57 = arith.constant 0 : index
    %c0_58 = arith.constant 0 : index
    %45 = vector.load %arg4[%c2_56, %c0_57, %c0_58] : memref<3x384x128xbf16, #tpu.memory_space<vmem>>, vector<1x384x128xbf16>
    %46 = vector.shape_cast %45 : vector<1x384x128xbf16> to vector<384x128xbf16>
    %cst_59 = arith.constant dense<0.000000e+00> : vector<256x128xf32>
    %47 = tpu.matmul %44, %46, %cst_59 {dimension_numbers = #tpu.dot_dimension_numbers<[1], [0], [0], [1], [0, 0, 1, 1], [], []>} : vector<256x384xbf16>, vector<384x128xbf16>, vector<256x128xf32> -> vector<256x128xf32>
    %48 = arith.addf %38, %47 : vector<256x128xf32>
    %cst_60 = arith.constant dense<0.000000e+00> : vector<128xf32>
    %49 = vector.multi_reduction <add>, %48, %cst_60 [0] : vector<256x128xf32> to vector<128xf32>
    %50 = vector.shape_cast %49 : vector<128xf32> to vector<1x128xf32>
    %cst_61 = arith.constant 3.906250e-03 : f32
    %51 = vector.broadcast %cst_61 : f32 to vector<1x128xf32>
    %52 = arith.mulf %50, %51 : vector<1x128xf32>
    %53 = vector.broadcast %52 : vector<1x128xf32> to vector<256x128xf32>
    %54 = arith.subf %48, %53 : vector<256x128xf32>
    %55 = arith.mulf %54, %54 : vector<256x128xf32>
    %cst_62 = arith.constant dense<0.000000e+00> : vector<128xf32>
    %56 = vector.multi_reduction <add>, %55, %cst_62 [0] : vector<256x128xf32> to vector<128xf32>
    %57 = vector.shape_cast %56 : vector<128xf32> to vector<1x128xf32>
    %58 = vector.shape_cast %50 : vector<1x128xf32> to vector<1x1x128xf32>
    %c0_63 = arith.constant 0 : index
    %c0_64 = arith.constant 0 : index
    %c0_65 = arith.constant 0 : index
    %59 = vector.load %arg6[%c0_63, %c0_64, %c0_65] : memref<1x1x128xf32, #tpu.memory_space<vmem>>, vector<1x1x128xf32>
    tpu.vector_store %arg6[%c0_63, %c0_64, %c0_65], %58 {strides = array<i32>} : memref<1x1x128xf32, #tpu.memory_space<vmem>>, vector<1x1x128xf32>,
    %60 = vector.shape_cast %57 : vector<1x128xf32> to vector<1x1x128xf32>
    %c0_66 = arith.constant 0 : index
    %c0_67 = arith.constant 0 : index
    %c0_68 = arith.constant 0 : index
    %61 = vector.load %arg7[%c0_66, %c0_67, %c0_68] : memref<1x1x128xf32, #tpu.memory_space<vmem>>, vector<1x1x128xf32>
    tpu.vector_store %arg7[%c0_66, %c0_67, %c0_68], %60 {strides = array<i32>} : memref<1x1x128xf32, #tpu.memory_space<vmem>>, vector<1x1x128xf32>,
    %62 = vector.shape_cast %48 : vector<256x128xf32> to vector<1x16x16x128xf32>
    %63 = arith.truncf %62 : vector<1x16x16x128xf32> to vector<1x16x16x128xbf16>
    %c0_69 = arith.constant 0 : index
    %c0_70 = arith.constant 0 : index
    %c0_71 = arith.constant 0 : index
    %c0_72 = arith.constant 0 : index
    %64 = vector.load %arg5[%c0_69, %c0_70, %c0_71, %c0_72] : memref<1x16x16x128xbf16, #tpu.memory_space<vmem>>, vector<1x16x16x128xbf16>
    tpu.vector_store %arg5[%c0_69, %c0_70, %c0_71, %c0_72], %63 {strides = array<i32>} : memref<1x16x16x128xbf16, #tpu.memory_space<vmem>>, vector<1x16x16x128xbf16>,
    return
  }
  func.func @transform_0(%arg0: i32) -> (i32, i32, i32, i32) {
    %c0_i32 = arith.constant 0 : i32
    %c0_i32_0 = arith.constant 0 : i32
    %c0_i32_1 = arith.constant 0 : i32
    %c0_i32_2 = arith.constant 0 : i32
    return %arg0, %c0_i32, %c0_i32_0, %c0_i32_1 : i32, i32, i32, i32
  }
  func.func @transform_1(%arg0: i32) -> (i32, i32) {
    %c0_i32 = arith.constant 0 : i32
    %c0_i32_0 = arith.constant 0 : i32
    %c0_i32_1 = arith.constant 0 : i32
    return %c0_i32, %c0_i32_0 : i32, i32
  }
  func.func @transform_2(%arg0: i32) -> (i32, i32) {
    %c0_i32 = arith.constant 0 : i32
    %c0_i32_0 = arith.constant 0 : i32
    %c0_i32_1 = arith.constant 0 : i32
    return %c0_i32, %c0_i32_0 : i32, i32
  }
  func.func @transform_3(%arg0: i32) -> (i32, i32, i32) {
    %c0_i32 = arith.constant 0 : i32
    %c0_i32_0 = arith.constant 0 : i32
    %c0_i32_1 = arith.constant 0 : i32
    %c0_i32_2 = arith.constant 0 : i32
    return %c0_i32, %c0_i32_0, %c0_i32_1 : i32, i32, i32
  }
  func.func @transform_4(%arg0: i32) -> (i32, i32, i32, i32) {
    %c0_i32 = arith.constant 0 : i32
    %c0_i32_0 = arith.constant 0 : i32
    %c0_i32_1 = arith.constant 0 : i32
    %c0_i32_2 = arith.constant 0 : i32
    return %arg0, %c0_i32, %c0_i32_0, %c0_i32_1 : i32, i32, i32, i32
  }
  func.func @transform_5(%arg0: i32) -> (i32, i32, i32) {
    %c0_i32 = arith.constant 0 : i32
    %c0_i32_0 = arith.constant 0 : i32
    %c0_i32_1 = arith.constant 0 : i32
    return %arg0, %c0_i32, %c0_i32_0 : i32, i32, i32
  }
  func.func @transform_6(%arg0: i32) -> (i32, i32, i32) {
    %c0_i32 = arith.constant 0 : i32
    %c0_i32_0 = arith.constant 0 : i32
    %c0_i32_1 = arith.constant 0 : i32
    return %arg0, %c0_i32, %c0_i32_0 : i32, i32, i32
  }
}

module attributes {stable_mosaic.version = 11 : i64} {
  func.func @_ssr_mm_kernel(%arg0: i32, %arg1: memref<512x128xf32, #tpu.memory_space<vmem>>, %arg2: memref<1x128xf32, #tpu.memory_space<vmem>>, %arg3: memref<1x128xf32, #tpu.memory_space<vmem>>, %arg4: memref<128x128xbf16, #tpu.memory_space<vmem>>, %arg5: memref<512x128xf32, #tpu.memory_space<vmem>>) attributes {dimension_semantics = [#tpu.dimension_semantics<parallel>], iteration_bounds = array<i64: 1>, scalar_prefetch = 0 : i64, scratch_operands = 0 : i64, tpu.core_type = #tpu.core_type<tc>, window_params = [{transform_indices = @transform_0, window_bounds = array<i64: 512, 128>}, {pipeline_mode = #tpu.pipeline_mode<synchronous>, transform_indices = @transform_1, window_bounds = array<i64: 1, 128>}, {pipeline_mode = #tpu.pipeline_mode<synchronous>, transform_indices = @transform_2, window_bounds = array<i64: 1, 128>}, {pipeline_mode = #tpu.pipeline_mode<synchronous>, transform_indices = @transform_3, window_bounds = array<i64: 128, 128>}, {transform_indices = @transform_4, window_bounds = array<i64: 512, 128>}]} {
    %c0 = arith.constant 0 : index
    %c0_0 = arith.constant 0 : index
    %0 = vector.load %arg1[%c0, %c0_0] : memref<512x128xf32, #tpu.memory_space<vmem>>, vector<512x128xf32>
    %c0_1 = arith.constant 0 : index
    %c0_2 = arith.constant 0 : index
    %1 = vector.load %arg2[%c0_1, %c0_2] : memref<1x128xf32, #tpu.memory_space<vmem>>, vector<1x128xf32>
    %2 = vector.broadcast %1 : vector<1x128xf32> to vector<512x128xf32>
    %3 = arith.mulf %0, %2 : vector<512x128xf32>
    %c0_3 = arith.constant 0 : index
    %c0_4 = arith.constant 0 : index
    %4 = vector.load %arg3[%c0_3, %c0_4] : memref<1x128xf32, #tpu.memory_space<vmem>>, vector<1x128xf32>
    %5 = vector.broadcast %4 : vector<1x128xf32> to vector<512x128xf32>
    %6 = arith.addf %3, %5 : vector<512x128xf32>
    %cst = arith.constant 0.000000e+00 : f32
    %7 = vector.broadcast %cst : f32 to vector<512x128xf32>
    %8 = arith.maximumf %6, %7 : vector<512x128xf32>
    %9 = arith.truncf %8 : vector<512x128xf32> to vector<512x128xbf16>
    %c0_5 = arith.constant 0 : index
    %c0_6 = arith.constant 0 : index
    %10 = vector.load %arg4[%c0_5, %c0_6] : memref<128x128xbf16, #tpu.memory_space<vmem>>, vector<128x128xbf16>
    %cst_7 = arith.constant dense<0.000000e+00> : vector<512x128xf32>
    %11 = tpu.matmul %9, %10, %cst_7 {dimension_numbers = #tpu.dot_dimension_numbers<[1], [0], [0], [1], [0, 0, 1, 1], [], []>} : vector<512x128xbf16>, vector<128x128xbf16>, vector<512x128xf32> -> vector<512x128xf32>
    %c0_8 = arith.constant 0 : index
    %c0_9 = arith.constant 0 : index
    %12 = vector.load %arg5[%c0_8, %c0_9] : memref<512x128xf32, #tpu.memory_space<vmem>>, vector<512x128xf32>
    tpu.vector_store %arg5[%c0_8, %c0_9], %11 {strides = array<i32>} : memref<512x128xf32, #tpu.memory_space<vmem>>, vector<512x128xf32>,
    return
  }
  func.func @transform_0(%arg0: i32) -> (i32, i32) {
    %c0_i32 = arith.constant 0 : i32
    %c0_i32_0 = arith.constant 0 : i32
    return %arg0, %c0_i32 : i32, i32
  }
  func.func @transform_1(%arg0: i32) -> (i32, i32) {
    %c0_i32 = arith.constant 0 : i32
    %c0_i32_0 = arith.constant 0 : i32
    %c0_i32_1 = arith.constant 0 : i32
    return %c0_i32, %c0_i32_0 : i32, i32
  }
  func.func @transform_2(%arg0: i32) -> (i32, i32) {
    %c0_i32 = arith.constant 0 : i32
    %c0_i32_0 = arith.constant 0 : i32
    %c0_i32_1 = arith.constant 0 : i32
    return %c0_i32, %c0_i32_0 : i32, i32
  }
  func.func @transform_3(%arg0: i32) -> (i32, i32) {
    %c0_i32 = arith.constant 0 : i32
    %c0_i32_0 = arith.constant 0 : i32
    %c0_i32_1 = arith.constant 0 : i32
    return %c0_i32, %c0_i32_0 : i32, i32
  }
  func.func @transform_4(%arg0: i32) -> (i32, i32) {
    %c0_i32 = arith.constant 0 : i32
    %c0_i32_0 = arith.constant 0 : i32
    return %arg0, %c0_i32 : i32, i32
  }
}

module attributes {stable_mosaic.version = 11 : i64} {
  func.func @_ssr_mm_add_kernel(%arg0: i32, %arg1: memref<512x128xbf16, #tpu.memory_space<vmem>>, %arg2: memref<1x128xf32, #tpu.memory_space<vmem>>, %arg3: memref<1x128xf32, #tpu.memory_space<vmem>>, %arg4: memref<128x128xbf16, #tpu.memory_space<vmem>>, %arg5: memref<512x128xf32, #tpu.memory_space<vmem>>, %arg6: memref<512x128xf32, #tpu.memory_space<vmem>>) attributes {dimension_semantics = [#tpu.dimension_semantics<parallel>], iteration_bounds = array<i64: 1>, scalar_prefetch = 0 : i64, scratch_operands = 0 : i64, tpu.core_type = #tpu.core_type<tc>, window_params = [{transform_indices = @transform_0, window_bounds = array<i64: 512, 128>}, {pipeline_mode = #tpu.pipeline_mode<synchronous>, transform_indices = @transform_1, window_bounds = array<i64: 1, 128>}, {pipeline_mode = #tpu.pipeline_mode<synchronous>, transform_indices = @transform_2, window_bounds = array<i64: 1, 128>}, {pipeline_mode = #tpu.pipeline_mode<synchronous>, transform_indices = @transform_3, window_bounds = array<i64: 128, 128>}, {transform_indices = @transform_4, window_bounds = array<i64: 512, 128>}, {transform_indices = @transform_5, window_bounds = array<i64: 512, 128>}]} {
    %c0 = arith.constant 0 : index
    %c0_0 = arith.constant 0 : index
    %0 = vector.load %arg1[%c0, %c0_0] : memref<512x128xbf16, #tpu.memory_space<vmem>>, vector<512x128xbf16>
    %1 = arith.extf %0 : vector<512x128xbf16> to vector<512x128xf32>
    %c0_1 = arith.constant 0 : index
    %c0_2 = arith.constant 0 : index
    %2 = vector.load %arg2[%c0_1, %c0_2] : memref<1x128xf32, #tpu.memory_space<vmem>>, vector<1x128xf32>
    %3 = vector.broadcast %2 : vector<1x128xf32> to vector<512x128xf32>
    %4 = arith.mulf %1, %3 : vector<512x128xf32>
    %c0_3 = arith.constant 0 : index
    %c0_4 = arith.constant 0 : index
    %5 = vector.load %arg3[%c0_3, %c0_4] : memref<1x128xf32, #tpu.memory_space<vmem>>, vector<1x128xf32>
    %6 = vector.broadcast %5 : vector<1x128xf32> to vector<512x128xf32>
    %7 = arith.addf %4, %6 : vector<512x128xf32>
    %cst = arith.constant 0.000000e+00 : f32
    %8 = vector.broadcast %cst : f32 to vector<512x128xf32>
    %9 = arith.maximumf %7, %8 : vector<512x128xf32>
    %10 = arith.truncf %9 : vector<512x128xf32> to vector<512x128xbf16>
    %c0_5 = arith.constant 0 : index
    %c0_6 = arith.constant 0 : index
    %11 = vector.load %arg4[%c0_5, %c0_6] : memref<128x128xbf16, #tpu.memory_space<vmem>>, vector<128x128xbf16>
    %cst_7 = arith.constant dense<0.000000e+00> : vector<512x128xf32>
    %12 = tpu.matmul %10, %11, %cst_7 {dimension_numbers = #tpu.dot_dimension_numbers<[1], [0], [0], [1], [0, 0, 1, 1], [], []>} : vector<512x128xbf16>, vector<128x128xbf16>, vector<512x128xf32> -> vector<512x128xf32>
    %c0_8 = arith.constant 0 : index
    %c0_9 = arith.constant 0 : index
    %13 = vector.load %arg5[%c0_8, %c0_9] : memref<512x128xf32, #tpu.memory_space<vmem>>, vector<512x128xf32>
    %14 = arith.addf %12, %13 : vector<512x128xf32>
    %c0_10 = arith.constant 0 : index
    %c0_11 = arith.constant 0 : index
    %15 = vector.load %arg6[%c0_10, %c0_11] : memref<512x128xf32, #tpu.memory_space<vmem>>, vector<512x128xf32>
    tpu.vector_store %arg6[%c0_10, %c0_11], %14 {strides = array<i32>} : memref<512x128xf32, #tpu.memory_space<vmem>>, vector<512x128xf32>,
    return
  }
  func.func @transform_0(%arg0: i32) -> (i32, i32) {
    %c0_i32 = arith.constant 0 : i32
    %c0_i32_0 = arith.constant 0 : i32
    return %arg0, %c0_i32 : i32, i32
  }
  func.func @transform_1(%arg0: i32) -> (i32, i32) {
    %c0_i32 = arith.constant 0 : i32
    %c0_i32_0 = arith.constant 0 : i32
    %c0_i32_1 = arith.constant 0 : i32
    return %c0_i32, %c0_i32_0 : i32, i32
  }
  func.func @transform_2(%arg0: i32) -> (i32, i32) {
    %c0_i32 = arith.constant 0 : i32
    %c0_i32_0 = arith.constant 0 : i32
    %c0_i32_1 = arith.constant 0 : i32
    return %c0_i32, %c0_i32_0 : i32, i32
  }
  func.func @transform_3(%arg0: i32) -> (i32, i32) {
    %c0_i32 = arith.constant 0 : i32
    %c0_i32_0 = arith.constant 0 : i32
    %c0_i32_1 = arith.constant 0 : i32
    return %c0_i32, %c0_i32_0 : i32, i32
  }
  func.func @transform_4(%arg0: i32) -> (i32, i32) {
    %c0_i32 = arith.constant 0 : i32
    %c0_i32_0 = arith.constant 0 : i32
    return %arg0, %c0_i32 : i32, i32
  }
  func.func @transform_5(%arg0: i32) -> (i32, i32) {
    %c0_i32 = arith.constant 0 : i32
    %c0_i32_0 = arith.constant 0 : i32
    return %arg0, %c0_i32 : i32, i32
  }
}

</mosaic_0001>

<llo_original>
// kernel: bottleneck_block.5
$region0: #{bottleneck_block.5}
  #allocation0 [shape = 'u32[]', space=smem, size = 0x4, offset = 0x4, fixed_abs, tag = 'smem constant byte address 0x4 - core index']
  #allocation1 [shape = 'u32[72,128]{1,0:T(1,128)}', space=vmem, size = 0x9000, scoped, tag = 'internal scratch']
  %s0 = inlined_call_operand.vmem [shape: f32[512,128], index: 0, kind: input, shape index: {}]
  %s1 = inlined_call_operand.vmem [shape: f32[1,1,128], index: 1, kind: output, shape index: {0}]
  %s2 = inlined_call_operand.vmem [shape: f32[1,1,128], index: 2, kind: output, shape index: {1}]
  %3 = xla_tuple %s1, %s2
  %s4 = sld [smem:[#allocation0]]
  $region22: #{bottleneck_block.5} parent=0
    _
  %s6 = ssub.s32 1, %s4
  %s7 = scalar_select 0, %s6, %s4
  // Predicated region
  $region2: #{bottleneck_block.5} parent=0 // pred_check
    _
  $region3: #{bottleneck_block.5} parent=0 // pred_check_branch
    %9 = sbr.rel (0) target = $region5
  $region4: #{bottleneck_block.5} parent=0 // pred_region
    _
  $region5: #{bottleneck_block.5} parent=0 // pred_fallthru
    _
  %v10 = vld [vmem:[%s0] sm:$0xff]
  %v11 = vld [vmem:[%s0 + $0x8] sm:$0xff]
  %v12 = vld [vmem:[%s0 + $0x10] sm:$0xff]
  %v13 = vld [vmem:[%s0 + $0x18] sm:$0xff]
  %v14 = vld [vmem:[%s0 + $0x20] sm:$0xff]
  %v15 = vld [vmem:[%s0 + $0x28] sm:$0xff]
  %v16 = vld [vmem:[%s0 + $0x30] sm:$0xff]
  %v17 = vld [vmem:[%s0 + $0x38] sm:$0xff]
  %v18 = vld [vmem:[%s0 + $0x40] sm:$0xff]
  %v19 = vld [vmem:[%s0 + $0x48] sm:$0xff]
  %v20 = vld [vmem:[%s0 + $0x50] sm:$0xff]
  %v21 = vld [vmem:[%s0 + $0x58] sm:$0xff]
  %v22 = vld [vmem:[%s0 + $0x60] sm:$0xff]
  %v23 = vld [vmem:[%s0 + $0x68] sm:$0xff]
  %v24 = vld [vmem:[%s0 + $0x70] sm:$0xff]
  %v25 = vld [vmem:[%s0 + $0x78] sm:$0xff]
  %v26 = vld [vmem:[%s0 + $0x80] sm:$0xff]
  %v27 = vld [vmem:[%s0 + $0x88] sm:$0xff]
  %v28 = vld [vmem:[%s0 + $0x90] sm:$0xff]
  %v29 = vld [vmem:[%s0 + $0x98] sm:$0xff]
  %v30 = vld [vmem:[%s0 + $0xa0] sm:$0xff]
  %v31 = vld [vmem:[%s0 + $0xa8] sm:$0xff]
  %v32 = vld [vmem:[%s0 + $0xb0] sm:$0xff]
  %v33 = vld [vmem:[%s0 + $0xb8] sm:$0xff]
  %v34 = vld [vmem:[%s0 + $0xc0] sm:$0xff]
  %v35 = vld [vmem:[%s0 + $0xc8] sm:$0xff]
  %v36 = vld [vmem:[%s0 + $0xd0] sm:$0xff]
  %v37 = vld [vmem:[%s0 + $0xd8] sm:$0xff]
  %v38 = vld [vmem:[%s0 + $0xe0] sm:$0xff]
  %v39 = vld [vmem:[%s0 + $0xe8] sm:$0xff]
  %v40 = vld [vmem:[%s0 + $0xf0] sm:$0xff]
  %v41 = vld [vmem:[%s0 + $0xf8] sm:$0xff]
  %v42 = vld [vmem:[%s0 + $0x100] sm:$0xff]
  %v43 = vld [vmem:[%s0 + $0x108] sm:$0xff]
  %v44 = vld [vmem:[%s0 + $0x110] sm:$0xff]
  %v45 = vld [vmem:[%s0 + $0x118] sm:$0xff]
  %v46 = vld [vmem:[%s0 + $0x120] sm:$0xff]
  %v47 = vld [vmem:[%s0 + $0x128] sm:$0xff]
  %v48 = vld [vmem:[%s0 + $0x130] sm:$0xff]
  %v49 = vld [vmem:[%s0 + $0x138] sm:$0xff]
  %v50 = vld [vmem:[%s0 + $0x140] sm:$0xff]
  %v51 = vld [vmem:[%s0 + $0x148] sm:$0xff]
  %v52 = vld [vmem:[%s0 + $0x150] sm:$0xff]
  %v53 = vld [vmem:[%s0 + $0x158] sm:$0xff]
  %v54 = vld [vmem:[%s0 + $0x160] sm:$0xff]
  %v55 = vld [vmem:[%s0 + $0x168] sm:$0xff]
  %v56 = vld [vmem:[%s0 + $0x170] sm:$0xff]
  %v57 = vld [vmem:[%s0 + $0x178] sm:$0xff]
  %v58 = vld [vmem:[%s0 + $0x180] sm:$0xff]
  %v59 = vld [vmem:[%s0 + $0x188] sm:$0xff]
  %v60 = vld [vmem:[%s0 + $0x190] sm:$0xff]
  %v61 = vld [vmem:[%s0 + $0x198] sm:$0xff]
  %v62 = vld [vmem:[%s0 + $0x1a0] sm:$0xff]
  %v63 = vld [vmem:[%s0 + $0x1a8] sm:$0xff]
  %v64 = vld [vmem:[%s0 + $0x1b0] sm:$0xff]
  %v65 = vld [vmem:[%s0 + $0x1b8] sm:$0xff]
  %v66 = vld [vmem:[%s0 + $0x1c0] sm:$0xff]
  %v67 = vld [vmem:[%s0 + $0x1c8] sm:$0xff]
  %v68 = vld [vmem:[%s0 + $0x1d0] sm:$0xff]
  %v69 = vld [vmem:[%s0 + $0x1d8] sm:$0xff]
  %v70 = vld [vmem:[%s0 + $0x1e0] sm:$0xff]
  %v71 = vld [vmem:[%s0 + $0x1e8] sm:$0xff]
  %v72 = vld [vmem:[%s0 + $0x1f0] sm:$0xff]
  %v73 = vld [vmem:[%s0 + $0x1f8] sm:$0xff]
  %v74 = vadd.f32 %v10, %v11
  %v75 = vadd.f32 %v74, %v12
  %v76 = vadd.f32 %v75, %v13
  %v77 = vadd.f32 %v76, %v14
  %v78 = vadd.f32 %v77, %v15
  %v79 = vadd.f32 %v78, %v16
  %v80 = vadd.f32 %v79, %v17
  %v81 = vadd.f32 %v80, %v18
  %v82 = vadd.f32 %v81, %v19
  %v83 = vadd.f32 %v82, %v20
  %v84 = vadd.f32 %v83, %v21
  %v85 = vadd.f32 %v84, %v22
  %v86 = vadd.f32 %v85, %v23
  %v87 = vadd.f32 %v86, %v24
  %v88 = vadd.f32 %v87, %v25
  %v89 = vadd.f32 %v88, %v26
  %v90 = vadd.f32 %v89, %v27
  %v91 = vadd.f32 %v90, %v28
  %v92 = vadd.f32 %v91, %v29
  %v93 = vadd.f32 %v92, %v30
  %v94 = vadd.f32 %v93, %v31
  %v95 = vadd.f32 %v94, %v32
  %v96 = vadd.f32 %v95, %v33
  %v97 = vadd.f32 %v96, %v34
  %v98 = vadd.f32 %v97, %v35
  %v99 = vadd.f32 %v98, %v36
  %v100 = vadd.f32 %v99, %v37
  %v101 = vadd.f32 %v100, %v38
  %v102 = vadd.f32 %v101, %v39
  %v103 = vadd.f32 %v102, %v40
  %v104 = vadd.f32 %v103, %v41
  %v105 = vadd.f32 %v104, %v42
  %v106 = vadd.f32 %v105, %v43
  %v107 = vadd.f32 %v106, %v44
  %v108 = vadd.f32 %v107, %v45
  %v109 = vadd.f32 %v108, %v46
  %v110 = vadd.f32 %v109, %v47
  %v111 = vadd.f32 %v110, %v48
  %v112 = vadd.f32 %v111, %v49
  %v113 = vadd.f32 %v112, %v50
  %v114 = vadd.f32 %v113, %v51
  %v115 = vadd.f32 %v114, %v52
  %v116 = vadd.f32 %v115, %v53
  %v117 = vadd.f32 %v116, %v54
  %v118 = vadd.f32 %v117, %v55
  %v119 = vadd.f32 %v118, %v56
  %v120 = vadd.f32 %v119, %v57
  %v121 = vadd.f32 %v120, %v58
  %v122 = vadd.f32 %v121, %v59
  %v123 = vadd.f32 %v122, %v60
  %v124 = vadd.f32 %v123, %v61
  %v125 = vadd.f32 %v124, %v62
  %v126 = vadd.f32 %v125, %v63
  %v127 = vadd.f32 %v126, %v64
  %v128 = vadd.f32 %v127, %v65
  %v129 = vadd.f32 %v128, %v66
  %v130 = vadd.f32 %v129, %v67
  %v131 = vadd.f32 %v130, %v68
  %v132 = vadd.f32 %v131, %v69
  %v133 = vadd.f32 %v132, %v70
  %v134 = vadd.f32 %v133, %v71
  %v135 = vadd.f32 %v134, %v72
  %v136 = vadd.f32 %v135, %v73
  %v137 = vrot.slane %v136, 4
  %v138 = vadd.f32 %v136, %v137
  %v139 = vrot.slane %v138, 2
  %v140 = vadd.f32 %v138, %v139
  %v141 = vrot.slane %v140, 1
  %v142 = vadd.f32 %v140, %v141
  %v143 = vmul.f32 %v142, 0.001953125
  %v144 = vsub.f32 %v10, %v143
  %v145 = vsub.f32 %v11, %v143
  %v146 = vsub.f32 %v12, %v143
  %v147 = vsub.f32 %v13, %v143
  %v148 = vsub.f32 %v14, %v143
  %v149 = vsub.f32 %v15, %v143
  %v150 = vsub.f32 %v16, %v143
  %v151 = vsub.f32 %v17, %v143
  %v152 = vsub.f32 %v18, %v143
  %v153 = vsub.f32 %v19, %v143
  %v154 = vsub.f32 %v20, %v143
  %v155 = vsub.f32 %v21, %v143
  %v156 = vsub.f32 %v22, %v143
  %v157 = vsub.f32 %v23, %v143
  %v158 = vsub.f32 %v24, %v143
  %v159 = vsub.f32 %v25, %v143
  %v160 = vsub.f32 %v26, %v143
  %v161 = vsub.f32 %v27, %v143
  %v162 = vsub.f32 %v28, %v143
  %v163 = vsub.f32 %v29, %v143
  %v164 = vsub.f32 %v30, %v143
  %v165 = vsub.f32 %v31, %v143
  %v166 = vsub.f32 %v32, %v143
  %v167 = vsub.f32 %v33, %v143
  %v168 = vsub.f32 %v34, %v143
  %v169 = vsub.f32 %v35, %v143
  %v170 = vsub.f32 %v36, %v143
  %v171 = vsub.f32 %v37, %v143
  %v172 = vsub.f32 %v38, %v143
  %v173 = vsub.f32 %v39, %v143
  %v174 = vsub.f32 %v40, %v143
  %v175 = vsub.f32 %v41, %v143
  %v176 = vsub.f32 %v42, %v143
  %v177 = vsub.f32 %v43, %v143
  %v178 = vsub.f32 %v44, %v143
  %v179 = vsub.f32 %v45, %v143
  %v180 = vsub.f32 %v46, %v143
  %v181 = vsub.f32 %v47, %v143
  %v182 = vsub.f32 %v48, %v143
  %v183 = vsub.f32 %v49, %v143
  %v184 = vsub.f32 %v50, %v143
  %v185 = vsub.f32 %v51, %v143
  %v186 = vsub.f32 %v52, %v143
  %v187 = vsub.f32 %v53, %v143
  %v188 = vsub.f32 %v54, %v143
  %v189 = vsub.f32 %v55, %v143
  %v190 = vsub.f32 %v56, %v143
  %v191 = vsub.f32 %v57, %v143
  %v192 = vsub.f32 %v58, %v143
  %v193 = vsub.f32 %v59, %v143
  %v194 = vsub.f32 %v60, %v143
  %v195 = vsub.f32 %v61, %v143
  %v196 = vsub.f32 %v62, %v143
  %v197 = vsub.f32 %v63, %v143
  %v198 = vsub.f32 %v64, %v143
  %v199 = vsub.f32 %v65, %v143
  %v200 = vsub.f32 %v66, %v143
  %v201 = vsub.f32 %v67, %v143
  %v202 = vsub.f32 %v68, %v143
  %v203 = vsub.f32 %v69, %v143
  %v204 = vsub.f32 %v70, %v143
  %v205 = vsub.f32 %v71, %v143
  %v206 = vsub.f32 %v72, %v143
  %v207 = vsub.f32 %v73, %v143
  %v208 = vmul.f32 %v144, %v144
  %v209 = vmul.f32 %v145, %v145
  %v210 = vmul.f32 %v146, %v146
  %v211 = vmul.f32 %v147, %v147
  %v212 = vmul.f32 %v148, %v148
  %v213 = vmul.f32 %v149, %v149
  %v214 = vmul.f32 %v150, %v150
  %v215 = vmul.f32 %v151, %v151
  %v216 = vmul.f32 %v152, %v152
  %v217 = vmul.f32 %v153, %v153
  %v218 = vmul.f32 %v154, %v154
  %v219 = vmul.f32 %v155, %v155
  %v220 = vmul.f32 %v156, %v156
  %v221 = vmul.f32 %v157, %v157
  %v222 = vmul.f32 %v158, %v158
  %v223 = vmul.f32 %v159, %v159
  %v224 = vmul.f32 %v160, %v160
  %v225 = vmul.f32 %v161, %v161
  %v226 = vmul.f32 %v162, %v162
  %v227 = vmul.f32 %v163, %v163
  %v228 = vmul.f32 %v164, %v164
  %v229 = vmul.f32 %v165, %v165
  %v230 = vmul.f32 %v166, %v166
  %v231 = vmul.f32 %v167, %v167
  %v232 = vmul.f32 %v168, %v168
  %v233 = vmul.f32 %v169, %v169
  %v234 = vmul.f32 %v170, %v170
  %v235 = vmul.f32 %v171, %v171
  %v236 = vmul.f32 %v172, %v172
  %v237 = vmul.f32 %v173, %v173
  %v238 = vmul.f32 %v174, %v174
  %v239 = vmul.f32 %v175, %v175
  %v240 = vmul.f32 %v176, %v176
  %v241 = vmul.f32 %v177, %v177
  %v242 = vmul.f32 %v178, %v178
  %v243 = vmul.f32 %v179, %v179
  %v244 = vmul.f32 %v180, %v180
  %v245 = vmul.f32 %v181, %v181
  %v246 = vmul.f32 %v182, %v182
  %v247 = vmul.f32 %v183, %v183
  %v248 = vmul.f32 %v184, %v184
  %v249 = vmul.f32 %v185, %v185
  %v250 = vmul.f32 %v186, %v186
  %v251 = vmul.f32 %v187, %v187
  %v252 = vmul.f32 %v188, %v188
  %v253 = vmul.f32 %v189, %v189
  %v254 = vmul.f32 %v190, %v190
  %v255 = vmul.f32 %v191, %v191
  %v256 = vmul.f32 %v192, %v192
  %v257 = vmul.f32 %v193, %v193
  %v258 = vmul.f32 %v194, %v194
  %v259 = vmul.f32 %v195, %v195
  %v260 = vmul.f32 %v196, %v196
  %v261 = vmul.f32 %v197, %v197
  %v262 = vmul.f32 %v198, %v198
  %v263 = vmul.f32 %v199, %v199
  %v264 = vmul.f32 %v200, %v200
  %v265 = vmul.f32 %v201, %v201
  %v266 = vmul.f32 %v202, %v202
  %v267 = vmul.f32 %v203, %v203
  %v268 = vmul.f32 %v204, %v204
  %v269 = vmul.f32 %v205, %v205
  %v270 = vmul.f32 %v206, %v206
  %v271 = vmul.f32 %v207, %v207
  %v272 = vadd.f32 %v208, %v209
  %v273 = vadd.f32 %v272, %v210
  %v274 = vadd.f32 %v273, %v211
  %v275 = vadd.f32 %v274, %v212
  %v276 = vadd.f32 %v275, %v213
  %v277 = vadd.f32 %v276, %v214
  %v278 = vadd.f32 %v277, %v215
  %v279 = vadd.f32 %v278, %v216
  %v280 = vadd.f32 %v279, %v217
  %v281 = vadd.f32 %v280, %v218
  %v282 = vadd.f32 %v281, %v219
  %v283 = vadd.f32 %v282, %v220
  %v284 = vadd.f32 %v283, %v221
  %v285 = vadd.f32 %v284, %v222
  %v286 = vadd.f32 %v285, %v223
  %v287 = vadd.f32 %v286, %v224
  %v288 = vadd.f32 %v287, %v225
  %v289 = vadd.f32 %v288, %v226
  %v290 = vadd.f32 %v289, %v227
  %v291 = vadd.f32 %v290, %v228
  %v292 = vadd.f32 %v291, %v229
  %v293 = vadd.f32 %v292, %v230
  %v294 = vadd.f32 %v293, %v231
  %v295 = vadd.f32 %v294, %v232
  %v296 = vadd.f32 %v295, %v233
  %v297 = vadd.f32 %v296, %v234
  %v298 = vadd.f32 %v297, %v235
  %v299 = vadd.f32 %v298, %v236
  %v300 = vadd.f32 %v299, %v237
  %v301 = vadd.f32 %v300, %v238
  %v302 = vadd.f32 %v301, %v239
  %v303 = vadd.f32 %v302, %v240
  %v304 = vadd.f32 %v303, %v241
  %v305 = vadd.f32 %v304, %v242
  %v306 = vadd.f32 %v305, %v243
  %v307 = vadd.f32 %v306, %v244
  %v308 = vadd.f32 %v307, %v245
  %v309 = vadd.f32 %v308, %v246
  %v310 = vadd.f32 %v309, %v247
  %v311 = vadd.f32 %v310, %v248
  %v312 = vadd.f32 %v311, %v249
  %v313 = vadd.f32 %v312, %v250
  %v314 = vadd.f32 %v313, %v251
  %v315 = vadd.f32 %v314, %v252
  %v316 = vadd.f32 %v315, %v253
  %v317 = vadd.f32 %v316, %v254
  %v318 = vadd.f32 %v317, %v255
  %v319 = vadd.f32 %v318, %v256
  %v320 = vadd.f32 %v319, %v257
  %v321 = vadd.f32 %v320, %v258
  %v322 = vadd.f32 %v321, %v259
  %v323 = vadd.f32 %v322, %v260
  %v324 = vadd.f32 %v323, %v261
  %v325 = vadd.f32 %v324, %v262
  %v326 = vadd.f32 %v325, %v263
  %v327 = vadd.f32 %v326, %v264
  %v328 = vadd.f32 %v327, %v265
  %v329 = vadd.f32 %v328, %v266
  %v330 = vadd.f32 %v329, %v267
  %v331 = vadd.f32 %v330, %v268
  %v332 = vadd.f32 %v331, %v269
  %v333 = vadd.f32 %v332, %v270
  %v334 = vadd.f32 %v333, %v271
  %v335 = vrot.slane %v334, 4
  %v336 = vadd.f32 %v334, %v335
  %v337 = vrot.slane %v336, 2
  %v338 = vadd.f32 %v336, %v337
  %v339 = vrot.slane %v338, 1
  %v340 = vadd.f32 %v338, %v339
  %341 = vst [vmem:[%s1] sm:$0x1] %v142
  %342 = vst [vmem:[%s2] sm:$0x1] %v340
  // Predicated region
  $region6: #{bottleneck_block.5} parent=0 // pred_check
    _
  $region7: #{bottleneck_block.5} parent=0 // pred_check_branch
    %344 = sbr.rel (0) target = $region9
  $region8: #{bottleneck_block.5} parent=0 // pred_region
    _
  $region9: #{bottleneck_block.5} parent=0 // pred_fallthru
    _
  // Predicated region
  $region10: #{bottleneck_block.5} parent=0 // pred_check
    _
  $region11: #{bottleneck_block.5} parent=0 // pred_check_branch
    %346 = sbr.rel (0) target = $region13
  $region12: #{bottleneck_block.5} parent=0 // pred_region
    _
  $region13: #{bottleneck_block.5} parent=0 // pred_fallthru
    _
  // Predicated region
  $region14: #{bottleneck_block.5} parent=0 // pred_check
    _
  $region15: #{bottleneck_block.5} parent=0 // pred_check_branch
    %348 = sbr.rel (0) target = $region17
  $region16: #{bottleneck_block.5} parent=0 // pred_region
    _
  $region17: #{bottleneck_block.5} parent=0 // pred_fallthru
    _
  // Predicated region
  $region18: #{bottleneck_block.5} parent=0 // pred_check
    _
  $region19: #{bottleneck_block.5} parent=0 // pred_check_branch
    %350 = sbr.rel (0) target = $region21
  $region20: #{bottleneck_block.5} parent=0 // pred_region
    _
  $region21: #{bottleneck_block.5} parent=0 // pred_fallthru
    _

// kernel: bottleneck_block.6
$region0: #{bottleneck_block.6}
  #allocation0 [shape = 'u32[]', space=smem, size = 0x4, offset = 0x4, fixed_abs, tag = 'smem constant byte address 0x4 - core index']
  #allocation1 [shape = 'u32[72,128]{1,0:T(1,128)}', space=vmem, size = 0x9000, scoped, tag = 'internal scratch']
  %s0 = inlined_call_operand.vmem [shape: f32[512,128], index: 0, kind: input, shape index: {}]
  %s1 = inlined_call_operand.vmem [shape: f32[1,128], index: 1, kind: input, shape index: {}]
  %s2 = inlined_call_operand.vmem [shape: f32[1,128], index: 2, kind: input, shape index: {}]
  %s3 = inlined_call_operand.vmem [shape: bf16[128,128], index: 3, kind: input, shape index: {}]
  %s4 = inlined_call_operand.vmem [shape: bf16[512,128], index: 4, kind: output, shape index: {0}]
  %s5 = inlined_call_operand.vmem [shape: f32[1,1,128], index: 5, kind: output, shape index: {1}]
  %s6 = inlined_call_operand.vmem [shape: f32[1,1,128], index: 6, kind: output, shape index: {2}]
  %7 = xla_tuple %s4, %s5, %s6
  %s8 = sld [smem:[#allocation0]]
  $region42: #{bottleneck_block.6} parent=0
    _
  %s10 = ssub.s32 1, %s8
  %s11 = scalar_select 0, %s10, %s8
  // Predicated region
  $region2: #{bottleneck_block.6} parent=0 // pred_check
    _
  $region3: #{bottleneck_block.6} parent=0 // pred_check_branch
    %13 = sbr.rel (0) target = $region5
  $region4: #{bottleneck_block.6} parent=0 // pred_region
    _
  $region5: #{bottleneck_block.6} parent=0 // pred_fallthru
    _
  // Predicated region
  $region6: #{bottleneck_block.6} parent=0 // pred_check
    _
  $region7: #{bottleneck_block.6} parent=0 // pred_check_branch
    %15 = sbr.rel (0) target = $region9
  $region8: #{bottleneck_block.6} parent=0 // pred_region
    _
  $region9: #{bottleneck_block.6} parent=0 // pred_fallthru
    _
  // Predicated region
  $region10: #{bottleneck_block.6} parent=0 // pred_check
    _
  $region11: #{bottleneck_block.6} parent=0 // pred_check_branch
    %17 = sbr.rel (0) target = $region13
  $region12: #{bottleneck_block.6} parent=0 // pred_region
    _
  $region13: #{bottleneck_block.6} parent=0 // pred_fallthru
    _
  // Predicated region
  $region14: #{bottleneck_block.6} parent=0 // pred_check
    _
  $region15: #{bottleneck_block.6} parent=0 // pred_check_branch
    %19 = sbr.rel (0) target = $region17
  $region16: #{bottleneck_block.6} parent=0 // pred_region
    _
  $region17: #{bottleneck_block.6} parent=0 // pred_fallthru
    _
  %v20 = vld [vmem:[%s0] sm:$0xff]
  %v21 = vld [vmem:[%s0 + $0x8] sm:$0xff]
  %v22 = vld [vmem:[%s0 + $0x10] sm:$0xff]
  %v23 = vld [vmem:[%s0 + $0x18] sm:$0xff]
  %v24 = vld [vmem:[%s0 + $0x20] sm:$0xff]
  %v25 = vld [vmem:[%s0 + $0x28] sm:$0xff]
  %v26 = vld [vmem:[%s0 + $0x30] sm:$0xff]
  %v27 = vld [vmem:[%s0 + $0x38] sm:$0xff]
  %v28 = vld [vmem:[%s0 + $0x40] sm:$0xff]
  %v29 = vld [vmem:[%s0 + $0x48] sm:$0xff]
  %v30 = vld [vmem:[%s0 + $0x50] sm:$0xff]
  %v31 = vld [vmem:[%s0 + $0x58] sm:$0xff]
  %v32 = vld [vmem:[%s0 + $0x60] sm:$0xff]
  %v33 = vld [vmem:[%s0 + $0x68] sm:$0xff]
  %v34 = vld [vmem:[%s0 + $0x70] sm:$0xff]
  %v35 = vld [vmem:[%s0 + $0x78] sm:$0xff]
  %v36 = vld [vmem:[%s0 + $0x80] sm:$0xff]
  %v37 = vld [vmem:[%s0 + $0x88] sm:$0xff]
  %v38 = vld [vmem:[%s0 + $0x90] sm:$0xff]
  %v39 = vld [vmem:[%s0 + $0x98] sm:$0xff]
  %v40 = vld [vmem:[%s0 + $0xa0] sm:$0xff]
  %v41 = vld [vmem:[%s0 + $0xa8] sm:$0xff]
  %v42 = vld [vmem:[%s0 + $0xb0] sm:$0xff]
  %v43 = vld [vmem:[%s0 + $0xb8] sm:$0xff]
  %v44 = vld [vmem:[%s0 + $0xc0] sm:$0xff]
  %v45 = vld [vmem:[%s0 + $0xc8] sm:$0xff]
  %v46 = vld [vmem:[%s0 + $0xd0] sm:$0xff]
  %v47 = vld [vmem:[%s0 + $0xd8] sm:$0xff]
  %v48 = vld [vmem:[%s0 + $0xe0] sm:$0xff]
  %v49 = vld [vmem:[%s0 + $0xe8] sm:$0xff]
  %v50 = vld [vmem:[%s0 + $0xf0] sm:$0xff]
  %v51 = vld [vmem:[%s0 + $0xf8] sm:$0xff]
  %v52 = vld [vmem:[%s0 + $0x100] sm:$0xff]
  %v53 = vld [vmem:[%s0 + $0x108] sm:$0xff]
  %v54 = vld [vmem:[%s0 + $0x110] sm:$0xff]
  %v55 = vld [vmem:[%s0 + $0x118] sm:$0xff]
  %v56 = vld [vmem:[%s0 + $0x120] sm:$0xff]
  %v57 = vld [vmem:[%s0 + $0x128] sm:$0xff]
  %v58 = vld [vmem:[%s0 + $0x130] sm:$0xff]
  %v59 = vld [vmem:[%s0 + $0x138] sm:$0xff]
  %v60 = vld [vmem:[%s0 + $0x140] sm:$0xff]
  %v61 = vld [vmem:[%s0 + $0x148] sm:$0xff]
  %v62 = vld [vmem:[%s0 + $0x150] sm:$0xff]
  %v63 = vld [vmem:[%s0 + $0x158] sm:$0xff]
  %v64 = vld [vmem:[%s0 + $0x160] sm:$0xff]
  %v65 = vld [vmem:[%s0 + $0x168] sm:$0xff]
  %v66 = vld [vmem:[%s0 + $0x170] sm:$0xff]
  %v67 = vld [vmem:[%s0 + $0x178] sm:$0xff]
  %v68 = vld [vmem:[%s0 + $0x180] sm:$0xff]
  %v69 = vld [vmem:[%s0 + $0x188] sm:$0xff]
  %v70 = vld [vmem:[%s0 + $0x190] sm:$0xff]
  %v71 = vld [vmem:[%s0 + $0x198] sm:$0xff]
  %v72 = vld [vmem:[%s0 + $0x1a0] sm:$0xff]
  %v73 = vld [vmem:[%s0 + $0x1a8] sm:$0xff]
  %v74 = vld [vmem:[%s0 + $0x1b0] sm:$0xff]
  %v75 = vld [vmem:[%s0 + $0x1b8] sm:$0xff]
  %v76 = vld [vmem:[%s0 + $0x1c0] sm:$0xff]
  %v77 = vld [vmem:[%s0 + $0x1c8] sm:$0xff]
  %v78 = vld [vmem:[%s0 + $0x1d0] sm:$0xff]
  %v79 = vld [vmem:[%s0 + $0x1d8] sm:$0xff]
  %v80 = vld [vmem:[%s0 + $0x1e0] sm:$0xff]
  %v81 = vld [vmem:[%s0 + $0x1e8] sm:$0xff]
  %v82 = vld [vmem:[%s0 + $0x1f0] sm:$0xff]
  %v83 = vld [vmem:[%s0 + $0x1f8] sm:$0xff]
  %v84 = vld [vmem:[%s1] sm:$0x1]
  %v86 = vperm.slane %v84, 0
  %v88 = vmul.f32 %v20, %v86
  %v89 = vmul.f32 %v21, %v86
  %v90 = vmul.f32 %v22, %v86
  %v91 = vmul.f32 %v23, %v86
  %v92 = vmul.f32 %v24, %v86
  %v93 = vmul.f32 %v25, %v86
  %v94 = vmul.f32 %v26, %v86
  %v95 = vmul.f32 %v27, %v86
  %v96 = vmul.f32 %v28, %v86
  %v97 = vmul.f32 %v29, %v86
  %v98 = vmul.f32 %v30, %v86
  %v99 = vmul.f32 %v31, %v86
  %v100 = vmul.f32 %v32, %v86
  %v101 = vmul.f32 %v33, %v86
  %v102 = vmul.f32 %v34, %v86
  %v103 = vmul.f32 %v35, %v86
  %v104 = vmul.f32 %v36, %v86
  %v105 = vmul.f32 %v37, %v86
  %v106 = vmul.f32 %v38, %v86
  %v107 = vmul.f32 %v39, %v86
  %v108 = vmul.f32 %v40, %v86
  %v109 = vmul.f32 %v41, %v86
  %v110 = vmul.f32 %v42, %v86
  %v111 = vmul.f32 %v43, %v86
  %v112 = vmul.f32 %v44, %v86
  %v113 = vmul.f32 %v45, %v86
  %v114 = vmul.f32 %v46, %v86
  %v115 = vmul.f32 %v47, %v86
  %v116 = vmul.f32 %v48, %v86
  %v117 = vmul.f32 %v49, %v86
  %v118 = vmul.f32 %v50, %v86
  %v119 = vmul.f32 %v51, %v86
  %v120 = vmul.f32 %v52, %v86
  %v121 = vmul.f32 %v53, %v86
  %v122 = vmul.f32 %v54, %v86
  %v123 = vmul.f32 %v55, %v86
  %v124 = vmul.f32 %v56, %v86
  %v125 = vmul.f32 %v57, %v86
  %v126 = vmul.f32 %v58, %v86
  %v127 = vmul.f32 %v59, %v86
  %v128 = vmul.f32 %v60, %v86
  %v129 = vmul.f32 %v61, %v86
  %v130 = vmul.f32 %v62, %v86
  %v131 = vmul.f32 %v63, %v86
  %v132 = vmul.f32 %v64, %v86
  %v133 = vmul.f32 %v65, %v86
  %v134 = vmul.f32 %v66, %v86
  %v135 = vmul.f32 %v67, %v86
  %v136 = vmul.f32 %v68, %v86
  %v137 = vmul.f32 %v69, %v86
  %v138 = vmul.f32 %v70, %v86
  %v139 = vmul.f32 %v71, %v86
  %v140 = vmul.f32 %v72, %v86
  %v141 = vmul.f32 %v73, %v86
  %v142 = vmul.f32 %v74, %v86
  %v143 = vmul.f32 %v75, %v86
  %v144 = vmul.f32 %v76, %v86
  %v145 = vmul.f32 %v77, %v86
  %v146 = vmul.f32 %v78, %v86
  %v147 = vmul.f32 %v79, %v86
  %v148 = vmul.f32 %v80, %v86
  %v149 = vmul.f32 %v81, %v86
  %v150 = vmul.f32 %v82, %v86
  %v151 = vmul.f32 %v83, %v86
  %v152 = vld [vmem:[%s2] sm:$0x1]
  %v154 = vperm.slane %v152, 0
  %v156 = vadd.f32 %v88, %v154
  %v157 = vadd.f32 %v89, %v154
  %v158 = vadd.f32 %v90, %v154
  %v159 = vadd.f32 %v91, %v154
  %v160 = vadd.f32 %v92, %v154
  %v161 = vadd.f32 %v93, %v154
  %v162 = vadd.f32 %v94, %v154
  %v163 = vadd.f32 %v95, %v154
  %v164 = vadd.f32 %v96, %v154
  %v165 = vadd.f32 %v97, %v154
  %v166 = vadd.f32 %v98, %v154
  %v167 = vadd.f32 %v99, %v154
  %v168 = vadd.f32 %v100, %v154
  %v169 = vadd.f32 %v101, %v154
  %v170 = vadd.f32 %v102, %v154
  %v171 = vadd.f32 %v103, %v154
  %v172 = vadd.f32 %v104, %v154
  %v173 = vadd.f32 %v105, %v154
  %v174 = vadd.f32 %v106, %v154
  %v175 = vadd.f32 %v107, %v154
  %v176 = vadd.f32 %v108, %v154
  %v177 = vadd.f32 %v109, %v154
  %v178 = vadd.f32 %v110, %v154
  %v179 = vadd.f32 %v111, %v154
  %v180 = vadd.f32 %v112, %v154
  %v181 = vadd.f32 %v113, %v154
  %v182 = vadd.f32 %v114, %v154
  %v183 = vadd.f32 %v115, %v154
  %v184 = vadd.f32 %v116, %v154
  %v185 = vadd.f32 %v117, %v154
  %v186 = vadd.f32 %v118, %v154
  %v187 = vadd.f32 %v119, %v154
  %v188 = vadd.f32 %v120, %v154
  %v189 = vadd.f32 %v121, %v154
  %v190 = vadd.f32 %v122, %v154
  %v191 = vadd.f32 %v123, %v154
  %v192 = vadd.f32 %v124, %v154
  %v193 = vadd.f32 %v125, %v154
  %v194 = vadd.f32 %v126, %v154
  %v195 = vadd.f32 %v127, %v154
  %v196 = vadd.f32 %v128, %v154
  %v197 = vadd.f32 %v129, %v154
  %v198 = vadd.f32 %v130, %v154
  %v199 = vadd.f32 %v131, %v154
  %v200 = vadd.f32 %v132, %v154
  %v201 = vadd.f32 %v133, %v154
  %v202 = vadd.f32 %v134, %v154
  %v203 = vadd.f32 %v135, %v154
  %v204 = vadd.f32 %v136, %v154
  %v205 = vadd.f32 %v137, %v154
  %v206 = vadd.f32 %v138, %v154
  %v207 = vadd.f32 %v139, %v154
  %v208 = vadd.f32 %v140, %v154
  %v209 = vadd.f32 %v141, %v154
  %v210 = vadd.f32 %v142, %v154
  %v211 = vadd.f32 %v143, %v154
  %v212 = vadd.f32 %v144, %v154
  %v213 = vadd.f32 %v145, %v154
  %v214 = vadd.f32 %v146, %v154
  %v215 = vadd.f32 %v147, %v154
  %v216 = vadd.f32 %v148, %v154
  %v217 = vadd.f32 %v149, %v154
  %v218 = vadd.f32 %v150, %v154
  %v219 = vadd.f32 %v151, %v154
  %v220 = vmax.f32 %v156, 0.0
  %v221 = vmax.f32 %v157, 0.0
  %v222 = vmax.f32 %v158, 0.0
  %v223 = vmax.f32 %v159, 0.0
  %v224 = vmax.f32 %v160, 0.0
  %v225 = vmax.f32 %v161, 0.0
  %v226 = vmax.f32 %v162, 0.0
  %v227 = vmax.f32 %v163, 0.0
  %v228 = vmax.f32 %v164, 0.0
  %v229 = vmax.f32 %v165, 0.0
  %v230 = vmax.f32 %v166, 0.0
  %v231 = vmax.f32 %v167, 0.0
  %v232 = vmax.f32 %v168, 0.0
  %v233 = vmax.f32 %v169, 0.0
  %v234 = vmax.f32 %v170, 0.0
  %v235 = vmax.f32 %v171, 0.0
  %v236 = vmax.f32 %v172, 0.0
  %v237 = vmax.f32 %v173, 0.0
  %v238 = vmax.f32 %v174, 0.0
  %v239 = vmax.f32 %v175, 0.0
  %v240 = vmax.f32 %v176, 0.0
  %v241 = vmax.f32 %v177, 0.0
  %v242 = vmax.f32 %v178, 0.0
  %v243 = vmax.f32 %v179, 0.0
  %v244 = vmax.f32 %v180, 0.0
  %v245 = vmax.f32 %v181, 0.0
  %v246 = vmax.f32 %v182, 0.0
  %v247 = vmax.f32 %v183, 0.0
  %v248 = vmax.f32 %v184, 0.0
  %v249 = vmax.f32 %v185, 0.0
  %v250 = vmax.f32 %v186, 0.0
  %v251 = vmax.f32 %v187, 0.0
  %v252 = vmax.f32 %v188, 0.0
  %v253 = vmax.f32 %v189, 0.0
  %v254 = vmax.f32 %v190, 0.0
  %v255 = vmax.f32 %v191, 0.0
  %v256 = vmax.f32 %v192, 0.0
  %v257 = vmax.f32 %v193, 0.0
  %v258 = vmax.f32 %v194, 0.0
  %v259 = vmax.f32 %v195, 0.0
  %v260 = vmax.f32 %v196, 0.0
  %v261 = vmax.f32 %v197, 0.0
  %v262 = vmax.f32 %v198, 0.0
  %v263 = vmax.f32 %v199, 0.0
  %v264 = vmax.f32 %v200, 0.0
  %v265 = vmax.f32 %v201, 0.0
  %v266 = vmax.f32 %v202, 0.0
  %v267 = vmax.f32 %v203, 0.0
  %v268 = vmax.f32 %v204, 0.0
  %v269 = vmax.f32 %v205, 0.0
  %v270 = vmax.f32 %v206, 0.0
  %v271 = vmax.f32 %v207, 0.0
  %v272 = vmax.f32 %v208, 0.0
  %v273 = vmax.f32 %v209, 0.0
  %v274 = vmax.f32 %v210, 0.0
  %v275 = vmax.f32 %v211, 0.0
  %v276 = vmax.f32 %v212, 0.0
  %v277 = vmax.f32 %v213, 0.0
  %v278 = vmax.f32 %v214, 0.0
  %v279 = vmax.f32 %v215, 0.0
  %v280 = vmax.f32 %v216, 0.0
  %v281 = vmax.f32 %v217, 0.0
  %v282 = vmax.f32 %v218, 0.0
  %v283 = vmax.f32 %v219, 0.0
  %v284 = vpack.c.bf16 %v221, %v220
  %v285 = vpack.c.bf16 %v223, %v222
  %v286 = vpack.c.bf16 %v225, %v224
  %v287 = vpack.c.bf16 %v227, %v226
  %v288 = vpack.c.bf16 %v229, %v228
  %v289 = vpack.c.bf16 %v231, %v230
  %v290 = vpack.c.bf16 %v233, %v232
  %v291 = vpack.c.bf16 %v235, %v234
  %v292 = vpack.c.bf16 %v237, %v236
  %v293 = vpack.c.bf16 %v239, %v238
  %v294 = vpack.c.bf16 %v241, %v240
  %v295 = vpack.c.bf16 %v243, %v242
  %v296 = vpack.c.bf16 %v245, %v244
  %v297 = vpack.c.bf16 %v247, %v246
  %v298 = vpack.c.bf16 %v249, %v248
  %v299 = vpack.c.bf16 %v251, %v250
  %v300 = vpack.c.bf16 %v253, %v252
  %v301 = vpack.c.bf16 %v255, %v254
  %v302 = vpack.c.bf16 %v257, %v256
  %v303 = vpack.c.bf16 %v259, %v258
  %v304 = vpack.c.bf16 %v261, %v260
  %v305 = vpack.c.bf16 %v263, %v262
  %v306 = vpack.c.bf16 %v265, %v264
  %v307 = vpack.c.bf16 %v267, %v266
  %v308 = vpack.c.bf16 %v269, %v268
  %v309 = vpack.c.bf16 %v271, %v270
  %v310 = vpack.c.bf16 %v273, %v272
  %v311 = vpack.c.bf16 %v275, %v274
  %v312 = vpack.c.bf16 %v277, %v276
  %v313 = vpack.c.bf16 %v279, %v278
  %v314 = vpack.c.bf16 %v281, %v280
  %v315 = vpack.c.bf16 %v283, %v282
  %v316 = vld [vmem:[%s3] sm:$0xf]
  %v317 = vld [vmem:[%s3 + $0x4] sm:$0xf]
  %v318 = vld [vmem:[%s3 + $0x8] sm:$0xf]
  %v319 = vld [vmem:[%s3 + $0xc] sm:$0xf]
  %v320 = vld [vmem:[%s3 + $0x10] sm:$0xf]
  %v321 = vld [vmem:[%s3 + $0x14] sm:$0xf]
  %v322 = vld [vmem:[%s3 + $0x18] sm:$0xf]
  %v323 = vld [vmem:[%s3 + $0x1c] sm:$0xf]
  %v324 = vld [vmem:[%s3 + $0x20] sm:$0xf]
  %v325 = vld [vmem:[%s3 + $0x24] sm:$0xf]
  %v326 = vld [vmem:[%s3 + $0x28] sm:$0xf]
  %v327 = vld [vmem:[%s3 + $0x2c] sm:$0xf]
  %v328 = vld [vmem:[%s3 + $0x30] sm:$0xf]
  %v329 = vld [vmem:[%s3 + $0x34] sm:$0xf]
  %v330 = vld [vmem:[%s3 + $0x38] sm:$0xf]
  %v331 = vld [vmem:[%s3 + $0x3c] sm:$0xf]
  %v348 = vunpack.c.l.b16 %v316
  %v349 = vunpack.c.l.b16 %v317
  %v350 = vunpack.c.l.b16 %v318
  %v351 = vunpack.c.l.b16 %v319
  %v352 = vunpack.c.l.b16 %v320
  %v353 = vunpack.c.l.b16 %v321
  %v354 = vunpack.c.l.b16 %v322
  %v355 = vunpack.c.l.b16 %v323
  %v356 = vunpack.c.l.b16 %v324
  %v357 = vunpack.c.l.b16 %v325
  %v358 = vunpack.c.l.b16 %v326
  %v359 = vunpack.c.l.b16 %v327
  %v360 = vunpack.c.l.b16 %v328
  %v361 = vunpack.c.l.b16 %v329
  %v362 = vunpack.c.l.b16 %v330
  %v363 = vunpack.c.l.b16 %v331
  %v364 = vpack.c.b16 %v349, %v348
  %v365 = vpack.c.b16 %v351, %v350
  %v366 = vpack.c.b16 %v353, %v352
  %v367 = vpack.c.b16 %v355, %v354
  %v368 = vpack.c.b16 %v357, %v356
  %v369 = vpack.c.b16 %v359, %v358
  %v370 = vpack.c.b16 %v361, %v360
  %v371 = vpack.c.b16 %v363, %v362
  %380 = vmatpush.bf16.msra.mxu0 %v371
  %381 = vmatpush.bf16.msra.mxu0 %v370
  %382 = vmatpush.bf16.msra.mxu0 %v369
  %383 = vmatpush.bf16.msra.mxu0 %v368
  %384 = vmatpush.bf16.msra.mxu0 %v367
  %385 = vmatpush.bf16.msra.mxu0 %v366
  %386 = vmatpush.bf16.msra.mxu0 %v365
  %387 = vmatpush.bf16.msra.mxu0 %v364
  %388 = vmatmul.bf16.gmra.mxu0 %v284
  %v389 = vpop.f32.mrf.mxu0
  %v390 = vadd.f32 0.0, %v389
  %v391 = vpop.f32.mrf.mxu0
  %v392 = vadd.f32 0.0, %v391
  %393 = vmatmul.bf16.gmra.mxu0 %v285
  %v394 = vpop.f32.mrf.mxu0
  %v395 = vadd.f32 0.0, %v394
  %v396 = vpop.f32.mrf.mxu0
  %v397 = vadd.f32 0.0, %v396
  %398 = vmatmul.bf16.gmra.mxu0 %v286
  %v399 = vpop.f32.mrf.mxu0
  %v400 = vadd.f32 0.0, %v399
  %v401 = vpop.f32.mrf.mxu0
  %v402 = vadd.f32 0.0, %v401
  %403 = vmatmul.bf16.gmra.mxu0 %v287
  %v404 = vpop.f32.mrf.mxu0
  %v405 = vadd.f32 0.0, %v404
  %v406 = vpop.f32.mrf.mxu0
  %v407 = vadd.f32 0.0, %v406
  %408 = vmatmul.bf16.gmra.mxu0 %v288
  %v409 = vpop.f32.mrf.mxu0
  %v410 = vadd.f32 0.0, %v409
  %v411 = vpop.f32.mrf.mxu0
  %v412 = vadd.f32 0.0, %v411
  %413 = vmatmul.bf16.gmra.mxu0 %v289
  %v414 = vpop.f32.mrf.mxu0
  %v415 = vadd.f32 0.0, %v414
  %v416 = vpop.f32.mrf.mxu0
  %v417 = vadd.f32 0.0, %v416
  %418 = vmatmul.bf16.gmra.mxu0 %v290
  %v419 = vpop.f32.mrf.mxu0
  %v420 = vadd.f32 0.0, %v419
  %v421 = vpop.f32.mrf.mxu0
  %v422 = vadd.f32 0.0, %v421
  %423 = vmatmul.bf16.gmra.mxu0 %v291
  %v424 = vpop.f32.mrf.mxu0
  %v425 = vadd.f32 0.0, %v424
  %v426 = vpop.f32.mrf.mxu0
  %v427 = vadd.f32 0.0, %v426
  %428 = vmatmul.bf16.gmra.mxu0 %v292
  %v429 = vpop.f32.mrf.mxu0
  %v430 = vadd.f32 0.0, %v429
  %v431 = vpop.f32.mrf.mxu0
  %v432 = vadd.f32 0.0, %v431
  %433 = vmatmul.bf16.gmra.mxu0 %v293
  %v434 = vpop.f32.mrf.mxu0
  %v435 = vadd.f32 0.0, %v434
  %v436 = vpop.f32.mrf.mxu0
  %v437 = vadd.f32 0.0, %v436
  %438 = vmatmul.bf16.gmra.mxu0 %v294
  %v439 = vpop.f32.mrf.mxu0
  %v440 = vadd.f32 0.0, %v439
  %v441 = vpop.f32.mrf.mxu0
  %v442 = vadd.f32 0.0, %v441
  %443 = vmatmul.bf16.gmra.mxu0 %v295
  %v444 = vpop.f32.mrf.mxu0
  %v445 = vadd.f32 0.0, %v444
  %v446 = vpop.f32.mrf.mxu0
  %v447 = vadd.f32 0.0, %v446
  %448 = vmatmul.bf16.gmra.mxu0 %v296
  %v449 = vpop.f32.mrf.mxu0
  %v450 = vadd.f32 0.0, %v449
  %v451 = vpop.f32.mrf.mxu0
  %v452 = vadd.f32 0.0, %v451
  %453 = vmatmul.bf16.gmra.mxu0 %v297
  %v454 = vpop.f32.mrf.mxu0
  %v455 = vadd.f32 0.0, %v454
  %v456 = vpop.f32.mrf.mxu0
  %v457 = vadd.f32 0.0, %v456
  %458 = vmatmul.bf16.gmra.mxu0 %v298
  %v459 = vpop.f32.mrf.mxu0
  %v460 = vadd.f32 0.0, %v459
  %v461 = vpop.f32.mrf.mxu0
  %v462 = vadd.f32 0.0, %v461
  %463 = vmatmul.bf16.gmra.mxu0 %v299
  %v464 = vpop.f32.mrf.mxu0
  %v465 = vadd.f32 0.0, %v464
  %v466 = vpop.f32.mrf.mxu0
  %v467 = vadd.f32 0.0, %v466
  %468 = vmatmul.bf16.gmra.mxu0 %v300
  %v469 = vpop.f32.mrf.mxu0
  %v470 = vadd.f32 0.0, %v469
  %v471 = vpop.f32.mrf.mxu0
  %v472 = vadd.f32 0.0, %v471
  %473 = vmatmul.bf16.gmra.mxu0 %v301
  %v474 = vpop.f32.mrf.mxu0
  %v475 = vadd.f32 0.0, %v474
  %v476 = vpop.f32.mrf.mxu0
  %v477 = vadd.f32 0.0, %v476
  %478 = vmatmul.bf16.gmra.mxu0 %v302
  %v479 = vpop.f32.mrf.mxu0
  %v480 = vadd.f32 0.0, %v479
  %v481 = vpop.f32.mrf.mxu0
  %v482 = vadd.f32 0.0, %v481
  %483 = vmatmul.bf16.gmra.mxu0 %v303
  %v484 = vpop.f32.mrf.mxu0
  %v485 = vadd.f32 0.0, %v484
  %v486 = vpop.f32.mrf.mxu0
  %v487 = vadd.f32 0.0, %v486
  %488 = vmatmul.bf16.gmra.mxu0 %v304
  %v489 = vpop.f32.mrf.mxu0
  %v490 = vadd.f32 0.0, %v489
  %v491 = vpop.f32.mrf.mxu0
  %v492 = vadd.f32 0.0, %v491
  %493 = vmatmul.bf16.gmra.mxu0 %v305
  %v494 = vpop.f32.mrf.mxu0
  %v495 = vadd.f32 0.0, %v494
  %v496 = vpop.f32.mrf.mxu0
  %v497 = vadd.f32 0.0, %v496
  %498 = vmatmul.bf16.gmra.mxu0 %v306
  %v499 = vpop.f32.mrf.mxu0
  %v500 = vadd.f32 0.0, %v499
  %v501 = vpop.f32.mrf.mxu0
  %v502 = vadd.f32 0.0, %v501
  %503 = vmatmul.bf16.gmra.mxu0 %v307
  %v504 = vpop.f32.mrf.mxu0
  %v505 = vadd.f32 0.0, %v504
  %v506 = vpop.f32.mrf.mxu0
  %v507 = vadd.f32 0.0, %v506
  %508 = vmatmul.bf16.gmra.mxu0 %v308
  %v509 = vpop.f32.mrf.mxu0
  %v510 = vadd.f32 0.0, %v509
  %v511 = vpop.f32.mrf.mxu0
  %v512 = vadd.f32 0.0, %v511
  %513 = vmatmul.bf16.gmra.mxu0 %v309
  %v514 = vpop.f32.mrf.mxu0
  %v515 = vadd.f32 0.0, %v514
  %v516 = vpop.f32.mrf.mxu0
  %v517 = vadd.f32 0.0, %v516
  %518 = vmatmul.bf16.gmra.mxu0 %v310
  %v519 = vpop.f32.mrf.mxu0
  %v520 = vadd.f32 0.0, %v519
  %v521 = vpop.f32.mrf.mxu0
  %v522 = vadd.f32 0.0, %v521
  %523 = vmatmul.bf16.gmra.mxu0 %v311
  %v524 = vpop.f32.mrf.mxu0
  %v525 = vadd.f32 0.0, %v524
  %v526 = vpop.f32.mrf.mxu0
  %v527 = vadd.f32 0.0, %v526
  %528 = vmatmul.bf16.gmra.mxu0 %v312
  %v529 = vpop.f32.mrf.mxu0
  %v530 = vadd.f32 0.0, %v529
  %v531 = vpop.f32.mrf.mxu0
  %v532 = vadd.f32 0.0, %v531
  %533 = vmatmul.bf16.gmra.mxu0 %v313
  %v534 = vpop.f32.mrf.mxu0
  %v535 = vadd.f32 0.0, %v534
  %v536 = vpop.f32.mrf.mxu0
  %v537 = vadd.f32 0.0, %v536
  %538 = vmatmul.bf16.gmra.mxu0 %v314
  %v539 = vpop.f32.mrf.mxu0
  %v540 = vadd.f32 0.0, %v539
  %v541 = vpop.f32.mrf.mxu0
  %v542 = vadd.f32 0.0, %v541
  %543 = vmatmul.bf16.gmra.mxu0 %v315
  %v544 = vpop.f32.mrf.mxu0
  %v545 = vadd.f32 0.0, %v544
  %v546 = vpop.f32.mrf.mxu0
  %v547 = vadd.f32 0.0, %v546
  %548 = vdwg.mxu0
  %v549 = vadd.f32 %v390, %v392
  %v550 = vadd.f32 %v549, %v395
  %v551 = vadd.f32 %v550, %v397
  %v552 = vadd.f32 %v551, %v400
  %v553 = vadd.f32 %v552, %v402
  %v554 = vadd.f32 %v553, %v405
  %v555 = vadd.f32 %v554, %v407
  %v556 = vadd.f32 %v555, %v410
  %v557 = vadd.f32 %v556, %v412
  %v558 = vadd.f32 %v557, %v415
  %v559 = vadd.f32 %v558, %v417
  %v560 = vadd.f32 %v559, %v420
  %v561 = vadd.f32 %v560, %v422
  %v562 = vadd.f32 %v561, %v425
  %v563 = vadd.f32 %v562, %v427
  %v564 = vadd.f32 %v563, %v430
  %v565 = vadd.f32 %v564, %v432
  %v566 = vadd.f32 %v565, %v435
  %v567 = vadd.f32 %v566, %v437
  %v568 = vadd.f32 %v567, %v440
  %v569 = vadd.f32 %v568, %v442
  %v570 = vadd.f32 %v569, %v445
  %v571 = vadd.f32 %v570, %v447
  %v572 = vadd.f32 %v571, %v450
  %v573 = vadd.f32 %v572, %v452
  %v574 = vadd.f32 %v573, %v455
  %v575 = vadd.f32 %v574, %v457
  %v576 = vadd.f32 %v575, %v460
  %v577 = vadd.f32 %v576, %v462
  %v578 = vadd.f32 %v577, %v465
  %v579 = vadd.f32 %v578, %v467
  %v580 = vadd.f32 %v579, %v470
  %v581 = vadd.f32 %v580, %v472
  %v582 = vadd.f32 %v581, %v475
  %v583 = vadd.f32 %v582, %v477
  %v584 = vadd.f32 %v583, %v480
  %v585 = vadd.f32 %v584, %v482
  %v586 = vadd.f32 %v585, %v485
  %v587 = vadd.f32 %v586, %v487
  %v588 = vadd.f32 %v587, %v490
  %v589 = vadd.f32 %v588, %v492
  %v590 = vadd.f32 %v589, %v495
  %v591 = vadd.f32 %v590, %v497
  %v592 = vadd.f32 %v591, %v500
  %v593 = vadd.f32 %v592, %v502
  %v594 = vadd.f32 %v593, %v505
  %v595 = vadd.f32 %v594, %v507
  %v596 = vadd.f32 %v595, %v510
  %v597 = vadd.f32 %v596, %v512
  %v598 = vadd.f32 %v597, %v515
  %v599 = vadd.f32 %v598, %v517
  %v600 = vadd.f32 %v599, %v520
  %v601 = vadd.f32 %v600, %v522
  %v602 = vadd.f32 %v601, %v525
  %v603 = vadd.f32 %v602, %v527
  %v604 = vadd.f32 %v603, %v530
  %v605 = vadd.f32 %v604, %v532
  %v606 = vadd.f32 %v605, %v535
  %v607 = vadd.f32 %v606, %v537
  %v608 = vadd.f32 %v607, %v540
  %v609 = vadd.f32 %v608, %v542
  %v610 = vadd.f32 %v609, %v545
  %v611 = vadd.f32 %v610, %v547
  %v612 = vrot.slane %v611, 4
  %v613 = vadd.f32 %v611, %v612
  %v614 = vrot.slane %v613, 2
  %v615 = vadd.f32 %v613, %v614
  %v616 = vrot.slane %v615, 1
  %v617 = vadd.f32 %v615, %v616
  %v618 = vmul.f32 %v617, 0.001953125
  %v619 = vsub.f32 %v390, %v618
  %v620 = vsub.f32 %v392, %v618
  %v621 = vsub.f32 %v395, %v618
  %v622 = vsub.f32 %v397, %v618
  %v623 = vsub.f32 %v400, %v618
  %v624 = vsub.f32 %v402, %v618
  %v625 = vsub.f32 %v405, %v618
  %v626 = vsub.f32 %v407, %v618
  %v627 = vsub.f32 %v410, %v618
  %v628 = vsub.f32 %v412, %v618
  %v629 = vsub.f32 %v415, %v618
  %v630 = vsub.f32 %v417, %v618
  %v631 = vsub.f32 %v420, %v618
  %v632 = vsub.f32 %v422, %v618
  %v633 = vsub.f32 %v425, %v618
  %v634 = vsub.f32 %v427, %v618
  %v635 = vsub.f32 %v430, %v618
  %v636 = vsub.f32 %v432, %v618
  %v637 = vsub.f32 %v435, %v618
  %v638 = vsub.f32 %v437, %v618
  %v639 = vsub.f32 %v440, %v618
  %v640 = vsub.f32 %v442, %v618
  %v641 = vsub.f32 %v445, %v618
  %v642 = vsub.f32 %v447, %v618
  %v643 = vsub.f32 %v450, %v618
  %v644 = vsub.f32 %v452, %v618
  %v645 = vsub.f32 %v455, %v618
  %v646 = vsub.f32 %v457, %v618
  %v647 = vsub.f32 %v460, %v618
  %v648 = vsub.f32 %v462, %v618
  %v649 = vsub.f32 %v465, %v618
  %v650 = vsub.f32 %v467, %v618
  %v651 = vsub.f32 %v470, %v618
  %v652 = vsub.f32 %v472, %v618
  %v653 = vsub.f32 %v475, %v618
  %v654 = vsub.f32 %v477, %v618
  %v655 = vsub.f32 %v480, %v618
  %v656 = vsub.f32 %v482, %v618
  %v657 = vsub.f32 %v485, %v618
  %v658 = vsub.f32 %v487, %v618
  %v659 = vsub.f32 %v490, %v618
  %v660 = vsub.f32 %v492, %v618
  %v661 = vsub.f32 %v495, %v618
  %v662 = vsub.f32 %v497, %v618
  %v663 = vsub.f32 %v500, %v618
  %v664 = vsub.f32 %v502, %v618
  %v665 = vsub.f32 %v505, %v618
  %v666 = vsub.f32 %v507, %v618
  %v667 = vsub.f32 %v510, %v618
  %v668 = vsub.f32 %v512, %v618
  %v669 = vsub.f32 %v515, %v618
  %v670 = vsub.f32 %v517, %v618
  %v671 = vsub.f32 %v520, %v618
  %v672 = vsub.f32 %v522, %v618
  %v673 = vsub.f32 %v525, %v618
  %v674 = vsub.f32 %v527, %v618
  %v675 = vsub.f32 %v530, %v618
  %v676 = vsub.f32 %v532, %v618
  %v677 = vsub.f32 %v535, %v618
  %v678 = vsub.f32 %v537, %v618
  %v679 = vsub.f32 %v540, %v618
  %v680 = vsub.f32 %v542, %v618
  %v681 = vsub.f32 %v545, %v618
  %v682 = vsub.f32 %v547, %v618
  %v683 = vmul.f32 %v619, %v619
  %v684 = vmul.f32 %v620, %v620
  %v685 = vmul.f32 %v621, %v621
  %v686 = vmul.f32 %v622, %v622
  %v687 = vmul.f32 %v623, %v623
  %v688 = vmul.f32 %v624, %v624
  %v689 = vmul.f32 %v625, %v625
  %v690 = vmul.f32 %v626, %v626
  %v691 = vmul.f32 %v627, %v627
  %v692 = vmul.f32 %v628, %v628
  %v693 = vmul.f32 %v629, %v629
  %v694 = vmul.f32 %v630, %v630
  %v695 = vmul.f32 %v631, %v631
  %v696 = vmul.f32 %v632, %v632
  %v697 = vmul.f32 %v633, %v633
  %v698 = vmul.f32 %v634, %v634
  %v699 = vmul.f32 %v635, %v635
  %v700 = vmul.f32 %v636, %v636
  %v701 = vmul.f32 %v637, %v637
  %v702 = vmul.f32 %v638, %v638
  %v703 = vmul.f32 %v639, %v639
  %v704 = vmul.f32 %v640, %v640
  %v705 = vmul.f32 %v641, %v641
  %v706 = vmul.f32 %v642, %v642
  %v707 = vmul.f32 %v643, %v643
  %v708 = vmul.f32 %v644, %v644
  %v709 = vmul.f32 %v645, %v645
  %v710 = vmul.f32 %v646, %v646
  %v711 = vmul.f32 %v647, %v647
  %v712 = vmul.f32 %v648, %v648
  %v713 = vmul.f32 %v649, %v649
  %v714 = vmul.f32 %v650, %v650
  %v715 = vmul.f32 %v651, %v651
  %v716 = vmul.f32 %v652, %v652
  %v717 = vmul.f32 %v653, %v653
  %v718 = vmul.f32 %v654, %v654
  %v719 = vmul.f32 %v655, %v655
  %v720 = vmul.f32 %v656, %v656
  %v721 = vmul.f32 %v657, %v657
  %v722 = vmul.f32 %v658, %v658
  %v723 = vmul.f32 %v659, %v659
  %v724 = vmul.f32 %v660, %v660
  %v725 = vmul.f32 %v661, %v661
  %v726 = vmul.f32 %v662, %v662
  %v727 = vmul.f32 %v663, %v663
  %v728 = vmul.f32 %v664, %v664
  %v729 = vmul.f32 %v665, %v665
  %v730 = vmul.f32 %v666, %v666
  %v731 = vmul.f32 %v667, %v667
  %v732 = vmul.f32 %v668, %v668
  %v733 = vmul.f32 %v669, %v669
  %v734 = vmul.f32 %v670, %v670
  %v735 = vmul.f32 %v671, %v671
  %v736 = vmul.f32 %v672, %v672
  %v737 = vmul.f32 %v673, %v673
  %v738 = vmul.f32 %v674, %v674
  %v739 = vmul.f32 %v675, %v675
  %v740 = vmul.f32 %v676, %v676
  %v741 = vmul.f32 %v677, %v677
  %v742 = vmul.f32 %v678, %v678
  %v743 = vmul.f32 %v679, %v679
  %v744 = vmul.f32 %v680, %v680
  %v745 = vmul.f32 %v681, %v681
  %v746 = vmul.f32 %v682, %v682
  %v747 = vadd.f32 %v683, %v684
  %v748 = vadd.f32 %v747, %v685
  %v749 = vadd.f32 %v748, %v686
  %v750 = vadd.f32 %v749, %v687
  %v751 = vadd.f32 %v750, %v688
  %v752 = vadd.f32 %v751, %v689
  %v753 = vadd.f32 %v752, %v690
  %v754 = vadd.f32 %v753, %v691
  %v755 = vadd.f32 %v754, %v692
  %v756 = vadd.f32 %v755, %v693
  %v757 = vadd.f32 %v756, %v694
  %v758 = vadd.f32 %v757, %v695
  %v759 = vadd.f32 %v758, %v696
  %v760 = vadd.f32 %v759, %v697
  %v761 = vadd.f32 %v760, %v698
  %v762 = vadd.f32 %v761, %v699
  %v763 = vadd.f32 %v762, %v700
  %v764 = vadd.f32 %v763, %v701
  %v765 = vadd.f32 %v764, %v702
  %v766 = vadd.f32 %v765, %v703
  %v767 = vadd.f32 %v766, %v704
  %v768 = vadd.f32 %v767, %v705
  %v769 = vadd.f32 %v768, %v706
  %v770 = vadd.f32 %v769, %v707
  %v771 = vadd.f32 %v770, %v708
  %v772 = vadd.f32 %v771, %v709
  %v773 = vadd.f32 %v772, %v710
  %v774 = vadd.f32 %v773, %v711
  %v775 = vadd.f32 %v774, %v712
  %v776 = vadd.f32 %v775, %v713
  %v777 = vadd.f32 %v776, %v714
  %v778 = vadd.f32 %v777, %v715
  %v779 = vadd.f32 %v778, %v716
  %v780 = vadd.f32 %v779, %v717
  %v781 = vadd.f32 %v780, %v718
  %v782 = vadd.f32 %v781, %v719
  %v783 = vadd.f32 %v782, %v720
  %v784 = vadd.f32 %v783, %v721
  %v785 = vadd.f32 %v784, %v722
  %v786 = vadd.f32 %v785, %v723
  %v787 = vadd.f32 %v786, %v724
  %v788 = vadd.f32 %v787, %v725
  %v789 = vadd.f32 %v788, %v726
  %v790 = vadd.f32 %v789, %v727
  %v791 = vadd.f32 %v790, %v728
  %v792 = vadd.f32 %v791, %v729
  %v793 = vadd.f32 %v792, %v730
  %v794 = vadd.f32 %v793, %v731
  %v795 = vadd.f32 %v794, %v732
  %v796 = vadd.f32 %v795, %v733
  %v797 = vadd.f32 %v796, %v734
  %v798 = vadd.f32 %v797, %v735
  %v799 = vadd.f32 %v798, %v736
  %v800 = vadd.f32 %v799, %v737
  %v801 = vadd.f32 %v800, %v738
  %v802 = vadd.f32 %v801, %v739
  %v803 = vadd.f32 %v802, %v740
  %v804 = vadd.f32 %v803, %v741
  %v805 = vadd.f32 %v804, %v742
  %v806 = vadd.f32 %v805, %v743
  %v807 = vadd.f32 %v806, %v744
  %v808 = vadd.f32 %v807, %v745
  %v809 = vadd.f32 %v808, %v746
  %v810 = vrot.slane %v809, 4
  %v811 = vadd.f32 %v809, %v810
  %v812 = vrot.slane %v811, 2
  %v813 = vadd.f32 %v811, %v812
  %v814 = vrot.slane %v813, 1
  %v815 = vadd.f32 %v813, %v814
  %816 = vst [vmem:[%s5] sm:$0x1] %v617
  %817 = vst [vmem:[%s6] sm:$0x1] %v815
  %v818 = vpack.c.bf16 %v390, %v390
  %v819 = vpack.c.bf16 %v392, %v392
  %v820 = vpack.c.bf16 %v395, %v395
  %v821 = vpack.c.bf16 %v397, %v397
  %v822 = vpack.c.bf16 %v400, %v400
  %v823 = vpack.c.bf16 %v402, %v402
  %v824 = vpack.c.bf16 %v405, %v405
  %v825 = vpack.c.bf16 %v407, %v407
  %v826 = vpack.c.bf16 %v410, %v410
  %v827 = vpack.c.bf16 %v412, %v412
  %v828 = vpack.c.bf16 %v415, %v415
  %v829 = vpack.c.bf16 %v417, %v417
  %v830 = vpack.c.bf16 %v420, %v420
  %v831 = vpack.c.bf16 %v422, %v422
  %v832 = vpack.c.bf16 %v425, %v425
  %v833 = vpack.c.bf16 %v427, %v427
  %v834 = vpack.c.bf16 %v430, %v430
  %v835 = vpack.c.bf16 %v432, %v432
  %v836 = vpack.c.bf16 %v435, %v435
  %v837 = vpack.c.bf16 %v437, %v437
  %v838 = vpack.c.bf16 %v440, %v440
  %v839 = vpack.c.bf16 %v442, %v442
  %v840 = vpack.c.bf16 %v445, %v445
  %v841 = vpack.c.bf16 %v447, %v447
  %v842 = vpack.c.bf16 %v450, %v450
  %v843 = vpack.c.bf16 %v452, %v452
  %v844 = vpack.c.bf16 %v455, %v455
  %v845 = vpack.c.bf16 %v457, %v457
  %v846 = vpack.c.bf16 %v460, %v460
  %v847 = vpack.c.bf16 %v462, %v462
  %v848 = vpack.c.bf16 %v465, %v465
  %v849 = vpack.c.bf16 %v467, %v467
  %v850 = vpack.c.bf16 %v470, %v470
  %v851 = vpack.c.bf16 %v472, %v472
  %v852 = vpack.c.bf16 %v475, %v475
  %v853 = vpack.c.bf16 %v477, %v477
  %v854 = vpack.c.bf16 %v480, %v480
  %v855 = vpack.c.bf16 %v482, %v482
  %v856 = vpack.c.bf16 %v485, %v485
  %v857 = vpack.c.bf16 %v487, %v487
  %v858 = vpack.c.bf16 %v490, %v490
  %v859 = vpack.c.bf16 %v492, %v492
  %v860 = vpack.c.bf16 %v495, %v495
  %v861 = vpack.c.bf16 %v497, %v497
  %v862 = vpack.c.bf16 %v500, %v500
  %v863 = vpack.c.bf16 %v502, %v502
  %v864 = vpack.c.bf16 %v505, %v505
  %v865 = vpack.c.bf16 %v507, %v507
  %v866 = vpack.c.bf16 %v510, %v510
  %v867 = vpack.c.bf16 %v512, %v512
  %v868 = vpack.c.bf16 %v515, %v515
  %v869 = vpack.c.bf16 %v517, %v517
  %v870 = vpack.c.bf16 %v520, %v520
  %v871 = vpack.c.bf16 %v522, %v522
  %v872 = vpack.c.bf16 %v525, %v525
  %v873 = vpack.c.bf16 %v527, %v527
  %v874 = vpack.c.bf16 %v530, %v530
  %v875 = vpack.c.bf16 %v532, %v532
  %v876 = vpack.c.bf16 %v535, %v535
  %v877 = vpack.c.bf16 %v537, %v537
  %v878 = vpack.c.bf16 %v540, %v540
  %v879 = vpack.c.bf16 %v542, %v542
  %v880 = vpack.c.bf16 %v545, %v545
  %v881 = vpack.c.bf16 %v547, %v547
  %882 = vst [vmem:[%s4] sm:$0xf] %v818
  %883 = vst [vmem:[%s4 + $0x4] sm:$0xf] %v819
  %884 = vst [vmem:[%s4 + $0x8] sm:$0xf] %v820
  %885 = vst [vmem:[%s4 + $0xc] sm:$0xf] %v821
  %886 = vst [vmem:[%s4 + $0x10] sm:$0xf] %v822
  %887 = vst [vmem:[%s4 + $0x14] sm:$0xf] %v823
  %888 = vst [vmem:[%s4 + $0x18] sm:$0xf] %v824
  %889 = vst [vmem:[%s4 + $0x1c] sm:$0xf] %v825
  %890 = vst [vmem:[%s4 + $0x20] sm:$0xf] %v826
  %891 = vst [vmem:[%s4 + $0x24] sm:$0xf] %v827
  %892 = vst [vmem:[%s4 + $0x28] sm:$0xf] %v828
  %893 = vst [vmem:[%s4 + $0x2c] sm:$0xf] %v829
  %894 = vst [vmem:[%s4 + $0x30] sm:$0xf] %v830
  %895 = vst [vmem:[%s4 + $0x34] sm:$0xf] %v831
  %896 = vst [vmem:[%s4 + $0x38] sm:$0xf] %v832
  %897 = vst [vmem:[%s4 + $0x3c] sm:$0xf] %v833
  %898 = vst [vmem:[%s4 + $0x40] sm:$0xf] %v834
  %899 = vst [vmem:[%s4 + $0x44] sm:$0xf] %v835
  %900 = vst [vmem:[%s4 + $0x48] sm:$0xf] %v836
  %901 = vst [vmem:[%s4 + $0x4c] sm:$0xf] %v837
  %902 = vst [vmem:[%s4 + $0x50] sm:$0xf] %v838
  %903 = vst [vmem:[%s4 + $0x54] sm:$0xf] %v839
  %904 = vst [vmem:[%s4 + $0x58] sm:$0xf] %v840
  %905 = vst [vmem:[%s4 + $0x5c] sm:$0xf] %v841
  %906 = vst [vmem:[%s4 + $0x60] sm:$0xf] %v842
  %907 = vst [vmem:[%s4 + $0x64] sm:$0xf] %v843
  %908 = vst [vmem:[%s4 + $0x68] sm:$0xf] %v844
  %909 = vst [vmem:[%s4 + $0x6c] sm:$0xf] %v845
  %910 = vst [vmem:[%s4 + $0x70] sm:$0xf] %v846
  %911 = vst [vmem:[%s4 + $0x74] sm:$0xf] %v847
  %912 = vst [vmem:[%s4 + $0x78] sm:$0xf] %v848
  %913 = vst [vmem:[%s4 + $0x7c] sm:$0xf] %v849
  %914 = vst [vmem:[%s4 + $0x80] sm:$0xf] %v850
  %915 = vst [vmem:[%s4 + $0x84] sm:$0xf] %v851
  %916 = vst [vmem:[%s4 + $0x88] sm:$0xf] %v852
  %917 = vst [vmem:[%s4 + $0x8c] sm:$0xf] %v853
  %918 = vst [vmem:[%s4 + $0x90] sm:$0xf] %v854
  %919 = vst [vmem:[%s4 + $0x94] sm:$0xf] %v855
  %920 = vst [vmem:[%s4 + $0x98] sm:$0xf] %v856
  %921 = vst [vmem:[%s4 + $0x9c] sm:$0xf] %v857
  %922 = vst [vmem:[%s4 + $0xa0] sm:$0xf] %v858
  %923 = vst [vmem:[%s4 + $0xa4] sm:$0xf] %v859
  %924 = vst [vmem:[%s4 + $0xa8] sm:$0xf] %v860
  %925 = vst [vmem:[%s4 + $0xac] sm:$0xf] %v861
  %926 = vst [vmem:[%s4 + $0xb0] sm:$0xf] %v862
  %927 = vst [vmem:[%s4 + $0xb4] sm:$0xf] %v863
  %928 = vst [vmem:[%s4 + $0xb8] sm:$0xf] %v864
  %929 = vst [vmem:[%s4 + $0xbc] sm:$0xf] %v865
  %930 = vst [vmem:[%s4 + $0xc0] sm:$0xf] %v866
  %931 = vst [vmem:[%s4 + $0xc4] sm:$0xf] %v867
  %932 = vst [vmem:[%s4 + $0xc8] sm:$0xf] %v868
  %933 = vst [vmem:[%s4 + $0xcc] sm:$0xf] %v869
  %934 = vst [vmem:[%s4 + $0xd0] sm:$0xf] %v870
  %935 = vst [vmem:[%s4 + $0xd4] sm:$0xf] %v871
  %936 = vst [vmem:[%s4 + $0xd8] sm:$0xf] %v872
  %937 = vst [vmem:[%s4 + $0xdc] sm:$0xf] %v873
  %938 = vst [vmem:[%s4 + $0xe0] sm:$0xf] %v874
  %939 = vst [vmem:[%s4 + $0xe4] sm:$0xf] %v875
  %940 = vst [vmem:[%s4 + $0xe8] sm:$0xf] %v876
  %941 = vst [vmem:[%s4 + $0xec] sm:$0xf] %v877
  %942 = vst [vmem:[%s4 + $0xf0] sm:$0xf] %v878
  %943 = vst [vmem:[%s4 + $0xf4] sm:$0xf] %v879
  %944 = vst [vmem:[%s4 + $0xf8] sm:$0xf] %v880
  %945 = vst [vmem:[%s4 + $0xfc] sm:$0xf] %v881
  // Predicated region
  $region18: #{bottleneck_block.6} parent=0 // pred_check
    _
  $region19: #{bottleneck_block.6} parent=0 // pred_check_branch
    %947 = sbr.rel (0) target = $region21
  $region20: #{bottleneck_block.6} parent=0 // pred_region
    _
  $region21: #{bottleneck_block.6} parent=0 // pred_fallthru
    _
  // Predicated region
  $region22: #{bottleneck_block.6} parent=0 // pred_check
    _
  $region23: #{bottleneck_block.6} parent=0 // pred_check_branch
    %949 = sbr.rel (0) target = $region25
  $region24: #{bottleneck_block.6} parent=0 // pred_region
    _
  $region25: #{bottleneck_block.6} parent=0 // pred_fallthru
    _
  // Predicated region
  $region26: #{bottleneck_block.6} parent=0 // pred_check
    _
  $region27: #{bottleneck_block.6} parent=0 // pred_check_branch
    %951 = sbr.rel (0) target = $region29
  $region28: #{bottleneck_block.6} parent=0 // pred_region
    _
  $region29: #{bottleneck_block.6} parent=0 // pred_fallthru
    _
  // Predicated region
  $region30: #{bottleneck_block.6} parent=0 // pred_check
    _
  $region31: #{bottleneck_block.6} parent=0 // pred_check_branch
    %953 = sbr.rel (0) target = $region33
  $region32: #{bottleneck_block.6} parent=0 // pred_region
    _
  $region33: #{bottleneck_block.6} parent=0 // pred_fallthru
    _
  // Predicated region
  $region34: #{bottleneck_block.6} parent=0 // pred_check
    _
  $region35: #{bottleneck_block.6} parent=0 // pred_check_branch
    %955 = sbr.rel (0) target = $region37
  $region36: #{bottleneck_block.6} parent=0 // pred_region
    _
  $region37: #{bottleneck_block.6} parent=0 // pred_fallthru
    _
  // Predicated region
  $region38: #{bottleneck_block.6} parent=0 // pred_check
    _
  $region39: #{bottleneck_block.6} parent=0 // pred_check_branch
    %957 = sbr.rel (0) target = $region41
  $region40: #{bottleneck_block.6} parent=0 // pred_region
    _
  $region41: #{bottleneck_block.6} parent=0 // pred_fallthru
    _

// kernel: bottleneck_block.8
$region0: #{bottleneck_block.8}
  #allocation0 [shape = 'u32[]', space=smem, size = 0x4, offset = 0x4, fixed_abs, tag = 'smem constant byte address 0x4 - core index']
  #allocation1 [shape = 'u32[72,128]{1,0:T(1,128)}', space=vmem, size = 0x9000, scoped, tag = 'internal scratch']
  %s0 = inlined_call_operand.vmem [shape: f32[512,128], index: 0, kind: input, shape index: {}]
  %s1 = inlined_call_operand.vmem [shape: f32[1,128], index: 1, kind: input, shape index: {}]
  %s2 = inlined_call_operand.vmem [shape: f32[1,128], index: 2, kind: input, shape index: {}]
  %s3 = inlined_call_operand.vmem [shape: bf16[128,128], index: 3, kind: input, shape index: {}]
  %s4 = inlined_call_operand.vmem [shape: f32[512,128], index: 4, kind: output, shape index: {}]
  %s5 = sld [smem:[#allocation0]]
  $region26: #{bottleneck_block.8} parent=0
    _
  %s7 = ssub.s32 1, %s5
  %s8 = scalar_select 0, %s7, %s5
  // Predicated region
  $region2: #{bottleneck_block.8} parent=0 // pred_check
    _
  $region3: #{bottleneck_block.8} parent=0 // pred_check_branch
    %10 = sbr.rel (0) target = $region5
  $region4: #{bottleneck_block.8} parent=0 // pred_region
    _
  $region5: #{bottleneck_block.8} parent=0 // pred_fallthru
    _
  // Predicated region
  $region6: #{bottleneck_block.8} parent=0 // pred_check
    _
  $region7: #{bottleneck_block.8} parent=0 // pred_check_branch
    %12 = sbr.rel (0) target = $region9
  $region8: #{bottleneck_block.8} parent=0 // pred_region
    _
  $region9: #{bottleneck_block.8} parent=0 // pred_fallthru
    _
  // Predicated region
  $region10: #{bottleneck_block.8} parent=0 // pred_check
    _
  $region11: #{bottleneck_block.8} parent=0 // pred_check_branch
    %14 = sbr.rel (0) target = $region13
  $region12: #{bottleneck_block.8} parent=0 // pred_region
    _
  $region13: #{bottleneck_block.8} parent=0 // pred_fallthru
    _
  // Predicated region
  $region14: #{bottleneck_block.8} parent=0 // pred_check
    _
  $region15: #{bottleneck_block.8} parent=0 // pred_check_branch
    %16 = sbr.rel (0) target = $region17
  $region16: #{bottleneck_block.8} parent=0 // pred_region
    _
  $region17: #{bottleneck_block.8} parent=0 // pred_fallthru
    _
  %v17 = vld [vmem:[%s0] sm:$0xff]
  %v18 = vld [vmem:[%s0 + $0x8] sm:$0xff]
  %v19 = vld [vmem:[%s0 + $0x10] sm:$0xff]
  %v20 = vld [vmem:[%s0 + $0x18] sm:$0xff]
  %v21 = vld [vmem:[%s0 + $0x20] sm:$0xff]
  %v22 = vld [vmem:[%s0 + $0x28] sm:$0xff]
  %v23 = vld [vmem:[%s0 + $0x30] sm:$0xff]
  %v24 = vld [vmem:[%s0 + $0x38] sm:$0xff]
  %v25 = vld [vmem:[%s0 + $0x40] sm:$0xff]
  %v26 = vld [vmem:[%s0 + $0x48] sm:$0xff]
  %v27 = vld [vmem:[%s0 + $0x50] sm:$0xff]
  %v28 = vld [vmem:[%s0 + $0x58] sm:$0xff]
  %v29 = vld [vmem:[%s0 + $0x60] sm:$0xff]
  %v30 = vld [vmem:[%s0 + $0x68] sm:$0xff]
  %v31 = vld [vmem:[%s0 + $0x70] sm:$0xff]
  %v32 = vld [vmem:[%s0 + $0x78] sm:$0xff]
  %v33 = vld [vmem:[%s0 + $0x80] sm:$0xff]
  %v34 = vld [vmem:[%s0 + $0x88] sm:$0xff]
  %v35 = vld [vmem:[%s0 + $0x90] sm:$0xff]
  %v36 = vld [vmem:[%s0 + $0x98] sm:$0xff]
  %v37 = vld [vmem:[%s0 + $0xa0] sm:$0xff]
  %v38 = vld [vmem:[%s0 + $0xa8] sm:$0xff]
  %v39 = vld [vmem:[%s0 + $0xb0] sm:$0xff]
  %v40 = vld [vmem:[%s0 + $0xb8] sm:$0xff]
  %v41 = vld [vmem:[%s0 + $0xc0] sm:$0xff]
  %v42 = vld [vmem:[%s0 + $0xc8] sm:$0xff]
  %v43 = vld [vmem:[%s0 + $0xd0] sm:$0xff]
  %v44 = vld [vmem:[%s0 + $0xd8] sm:$0xff]
  %v45 = vld [vmem:[%s0 + $0xe0] sm:$0xff]
  %v46 = vld [vmem:[%s0 + $0xe8] sm:$0xff]
  %v47 = vld [vmem:[%s0 + $0xf0] sm:$0xff]
  %v48 = vld [vmem:[%s0 + $0xf8] sm:$0xff]
  %v49 = vld [vmem:[%s0 + $0x100] sm:$0xff]
  %v50 = vld [vmem:[%s0 + $0x108] sm:$0xff]
  %v51 = vld [vmem:[%s0 + $0x110] sm:$0xff]
  %v52 = vld [vmem:[%s0 + $0x118] sm:$0xff]
  %v53 = vld [vmem:[%s0 + $0x120] sm:$0xff]
  %v54 = vld [vmem:[%s0 + $0x128] sm:$0xff]
  %v55 = vld [vmem:[%s0 + $0x130] sm:$0xff]
  %v56 = vld [vmem:[%s0 + $0x138] sm:$0xff]
  %v57 = vld [vmem:[%s0 + $0x140] sm:$0xff]
  %v58 = vld [vmem:[%s0 + $0x148] sm:$0xff]
  %v59 = vld [vmem:[%s0 + $0x150] sm:$0xff]
  %v60 = vld [vmem:[%s0 + $0x158] sm:$0xff]
  %v61 = vld [vmem:[%s0 + $0x160] sm:$0xff]
  %v62 = vld [vmem:[%s0 + $0x168] sm:$0xff]
  %v63 = vld [vmem:[%s0 + $0x170] sm:$0xff]
  %v64 = vld [vmem:[%s0 + $0x178] sm:$0xff]
  %v65 = vld [vmem:[%s0 + $0x180] sm:$0xff]
  %v66 = vld [vmem:[%s0 + $0x188] sm:$0xff]
  %v67 = vld [vmem:[%s0 + $0x190] sm:$0xff]
  %v68 = vld [vmem:[%s0 + $0x198] sm:$0xff]
  %v69 = vld [vmem:[%s0 + $0x1a0] sm:$0xff]
  %v70 = vld [vmem:[%s0 + $0x1a8] sm:$0xff]
  %v71 = vld [vmem:[%s0 + $0x1b0] sm:$0xff]
  %v72 = vld [vmem:[%s0 + $0x1b8] sm:$0xff]
  %v73 = vld [vmem:[%s0 + $0x1c0] sm:$0xff]
  %v74 = vld [vmem:[%s0 + $0x1c8] sm:$0xff]
  %v75 = vld [vmem:[%s0 + $0x1d0] sm:$0xff]
  %v76 = vld [vmem:[%s0 + $0x1d8] sm:$0xff]
  %v77 = vld [vmem:[%s0 + $0x1e0] sm:$0xff]
  %v78 = vld [vmem:[%s0 + $0x1e8] sm:$0xff]
  %v79 = vld [vmem:[%s0 + $0x1f0] sm:$0xff]
  %v80 = vld [vmem:[%s0 + $0x1f8] sm:$0xff]
  %v81 = vld [vmem:[%s1] sm:$0x1]
  %v83 = vperm.slane %v81, 0
  %v85 = vmul.f32 %v17, %v83
  %v86 = vmul.f32 %v18, %v83
  %v87 = vmul.f32 %v19, %v83
  %v88 = vmul.f32 %v20, %v83
  %v89 = vmul.f32 %v21, %v83
  %v90 = vmul.f32 %v22, %v83
  %v91 = vmul.f32 %v23, %v83
  %v92 = vmul.f32 %v24, %v83
  %v93 = vmul.f32 %v25, %v83
  %v94 = vmul.f32 %v26, %v83
  %v95 = vmul.f32 %v27, %v83
  %v96 = vmul.f32 %v28, %v83
  %v97 = vmul.f32 %v29, %v83
  %v98 = vmul.f32 %v30, %v83
  %v99 = vmul.f32 %v31, %v83
  %v100 = vmul.f32 %v32, %v83
  %v101 = vmul.f32 %v33, %v83
  %v102 = vmul.f32 %v34, %v83
  %v103 = vmul.f32 %v35, %v83
  %v104 = vmul.f32 %v36, %v83
  %v105 = vmul.f32 %v37, %v83
  %v106 = vmul.f32 %v38, %v83
  %v107 = vmul.f32 %v39, %v83
  %v108 = vmul.f32 %v40, %v83
  %v109 = vmul.f32 %v41, %v83
  %v110 = vmul.f32 %v42, %v83
  %v111 = vmul.f32 %v43, %v83
  %v112 = vmul.f32 %v44, %v83
  %v113 = vmul.f32 %v45, %v83
  %v114 = vmul.f32 %v46, %v83
  %v115 = vmul.f32 %v47, %v83
  %v116 = vmul.f32 %v48, %v83
  %v117 = vmul.f32 %v49, %v83
  %v118 = vmul.f32 %v50, %v83
  %v119 = vmul.f32 %v51, %v83
  %v120 = vmul.f32 %v52, %v83
  %v121 = vmul.f32 %v53, %v83
  %v122 = vmul.f32 %v54, %v83
  %v123 = vmul.f32 %v55, %v83
  %v124 = vmul.f32 %v56, %v83
  %v125 = vmul.f32 %v57, %v83
  %v126 = vmul.f32 %v58, %v83
  %v127 = vmul.f32 %v59, %v83
  %v128 = vmul.f32 %v60, %v83
  %v129 = vmul.f32 %v61, %v83
  %v130 = vmul.f32 %v62, %v83
  %v131 = vmul.f32 %v63, %v83
  %v132 = vmul.f32 %v64, %v83
  %v133 = vmul.f32 %v65, %v83
  %v134 = vmul.f32 %v66, %v83
  %v135 = vmul.f32 %v67, %v83
  %v136 = vmul.f32 %v68, %v83
  %v137 = vmul.f32 %v69, %v83
  %v138 = vmul.f32 %v70, %v83
  %v139 = vmul.f32 %v71, %v83
  %v140 = vmul.f32 %v72, %v83
  %v141 = vmul.f32 %v73, %v83
  %v142 = vmul.f32 %v74, %v83
  %v143 = vmul.f32 %v75, %v83
  %v144 = vmul.f32 %v76, %v83
  %v145 = vmul.f32 %v77, %v83
  %v146 = vmul.f32 %v78, %v83
  %v147 = vmul.f32 %v79, %v83
  %v148 = vmul.f32 %v80, %v83
  %v149 = vld [vmem:[%s2] sm:$0x1]
  %v151 = vperm.slane %v149, 0
  %v153 = vadd.f32 %v85, %v151
  %v154 = vadd.f32 %v86, %v151
  %v155 = vadd.f32 %v87, %v151
  %v156 = vadd.f32 %v88, %v151
  %v157 = vadd.f32 %v89, %v151
  %v158 = vadd.f32 %v90, %v151
  %v159 = vadd.f32 %v91, %v151
  %v160 = vadd.f32 %v92, %v151
  %v161 = vadd.f32 %v93, %v151
  %v162 = vadd.f32 %v94, %v151
  %v163 = vadd.f32 %v95, %v151
  %v164 = vadd.f32 %v96, %v151
  %v165 = vadd.f32 %v97, %v151
  %v166 = vadd.f32 %v98, %v151
  %v167 = vadd.f32 %v99, %v151
  %v168 = vadd.f32 %v100, %v151
  %v169 = vadd.f32 %v101, %v151
  %v170 = vadd.f32 %v102, %v151
  %v171 = vadd.f32 %v103, %v151
  %v172 = vadd.f32 %v104, %v151
  %v173 = vadd.f32 %v105, %v151
  %v174 = vadd.f32 %v106, %v151
  %v175 = vadd.f32 %v107, %v151
  %v176 = vadd.f32 %v108, %v151
  %v177 = vadd.f32 %v109, %v151
  %v178 = vadd.f32 %v110, %v151
  %v179 = vadd.f32 %v111, %v151
  %v180 = vadd.f32 %v112, %v151
  %v181 = vadd.f32 %v113, %v151
  %v182 = vadd.f32 %v114, %v151
  %v183 = vadd.f32 %v115, %v151
  %v184 = vadd.f32 %v116, %v151
  %v185 = vadd.f32 %v117, %v151
  %v186 = vadd.f32 %v118, %v151
  %v187 = vadd.f32 %v119, %v151
  %v188 = vadd.f32 %v120, %v151
  %v189 = vadd.f32 %v121, %v151
  %v190 = vadd.f32 %v122, %v151
  %v191 = vadd.f32 %v123, %v151
  %v192 = vadd.f32 %v124, %v151
  %v193 = vadd.f32 %v125, %v151
  %v194 = vadd.f32 %v126, %v151
  %v195 = vadd.f32 %v127, %v151
  %v196 = vadd.f32 %v128, %v151
  %v197 = vadd.f32 %v129, %v151
  %v198 = vadd.f32 %v130, %v151
  %v199 = vadd.f32 %v131, %v151
  %v200 = vadd.f32 %v132, %v151
  %v201 = vadd.f32 %v133, %v151
  %v202 = vadd.f32 %v134, %v151
  %v203 = vadd.f32 %v135, %v151
  %v204 = vadd.f32 %v136, %v151
  %v205 = vadd.f32 %v137, %v151
  %v206 = vadd.f32 %v138, %v151
  %v207 = vadd.f32 %v139, %v151
  %v208 = vadd.f32 %v140, %v151
  %v209 = vadd.f32 %v141, %v151
  %v210 = vadd.f32 %v142, %v151
  %v211 = vadd.f32 %v143, %v151
  %v212 = vadd.f32 %v144, %v151
  %v213 = vadd.f32 %v145, %v151
  %v214 = vadd.f32 %v146, %v151
  %v215 = vadd.f32 %v147, %v151
  %v216 = vadd.f32 %v148, %v151
  %v217 = vmax.f32 %v153, 0.0
  %v218 = vmax.f32 %v154, 0.0
  %v219 = vmax.f32 %v155, 0.0
  %v220 = vmax.f32 %v156, 0.0
  %v221 = vmax.f32 %v157, 0.0
  %v222 = vmax.f32 %v158, 0.0
  %v223 = vmax.f32 %v159, 0.0
  %v224 = vmax.f32 %v160, 0.0
  %v225 = vmax.f32 %v161, 0.0
  %v226 = vmax.f32 %v162, 0.0
  %v227 = vmax.f32 %v163, 0.0
  %v228 = vmax.f32 %v164, 0.0
  %v229 = vmax.f32 %v165, 0.0
  %v230 = vmax.f32 %v166, 0.0
  %v231 = vmax.f32 %v167, 0.0
  %v232 = vmax.f32 %v168, 0.0
  %v233 = vmax.f32 %v169, 0.0
  %v234 = vmax.f32 %v170, 0.0
  %v235 = vmax.f32 %v171, 0.0
  %v236 = vmax.f32 %v172, 0.0
  %v237 = vmax.f32 %v173, 0.0
  %v238 = vmax.f32 %v174, 0.0
  %v239 = vmax.f32 %v175, 0.0
  %v240 = vmax.f32 %v176, 0.0
  %v241 = vmax.f32 %v177, 0.0
  %v242 = vmax.f32 %v178, 0.0
  %v243 = vmax.f32 %v179, 0.0
  %v244 = vmax.f32 %v180, 0.0
  %v245 = vmax.f32 %v181, 0.0
  %v246 = vmax.f32 %v182, 0.0
  %v247 = vmax.f32 %v183, 0.0
  %v248 = vmax.f32 %v184, 0.0
  %v249 = vmax.f32 %v185, 0.0
  %v250 = vmax.f32 %v186, 0.0
  %v251 = vmax.f32 %v187, 0.0
  %v252 = vmax.f32 %v188, 0.0
  %v253 = vmax.f32 %v189, 0.0
  %v254 = vmax.f32 %v190, 0.0
  %v255 = vmax.f32 %v191, 0.0
  %v256 = vmax.f32 %v192, 0.0
  %v257 = vmax.f32 %v193, 0.0
  %v258 = vmax.f32 %v194, 0.0
  %v259 = vmax.f32 %v195, 0.0
  %v260 = vmax.f32 %v196, 0.0
  %v261 = vmax.f32 %v197, 0.0
  %v262 = vmax.f32 %v198, 0.0
  %v263 = vmax.f32 %v199, 0.0
  %v264 = vmax.f32 %v200, 0.0
  %v265 = vmax.f32 %v201, 0.0
  %v266 = vmax.f32 %v202, 0.0
  %v267 = vmax.f32 %v203, 0.0
  %v268 = vmax.f32 %v204, 0.0
  %v269 = vmax.f32 %v205, 0.0
  %v270 = vmax.f32 %v206, 0.0
  %v271 = vmax.f32 %v207, 0.0
  %v272 = vmax.f32 %v208, 0.0
  %v273 = vmax.f32 %v209, 0.0
  %v274 = vmax.f32 %v210, 0.0
  %v275 = vmax.f32 %v211, 0.0
  %v276 = vmax.f32 %v212, 0.0
  %v277 = vmax.f32 %v213, 0.0
  %v278 = vmax.f32 %v214, 0.0
  %v279 = vmax.f32 %v215, 0.0
  %v280 = vmax.f32 %v216, 0.0
  %v281 = vpack.c.bf16 %v218, %v217
  %v282 = vpack.c.bf16 %v220, %v219
  %v283 = vpack.c.bf16 %v222, %v221
  %v284 = vpack.c.bf16 %v224, %v223
  %v285 = vpack.c.bf16 %v226, %v225
  %v286 = vpack.c.bf16 %v228, %v227
  %v287 = vpack.c.bf16 %v230, %v229
  %v288 = vpack.c.bf16 %v232, %v231
  %v289 = vpack.c.bf16 %v234, %v233
  %v290 = vpack.c.bf16 %v236, %v235
  %v291 = vpack.c.bf16 %v238, %v237
  %v292 = vpack.c.bf16 %v240, %v239
  %v293 = vpack.c.bf16 %v242, %v241
  %v294 = vpack.c.bf16 %v244, %v243
  %v295 = vpack.c.bf16 %v246, %v245
  %v296 = vpack.c.bf16 %v248, %v247
  %v297 = vpack.c.bf16 %v250, %v249
  %v298 = vpack.c.bf16 %v252, %v251
  %v299 = vpack.c.bf16 %v254, %v253
  %v300 = vpack.c.bf16 %v256, %v255
  %v301 = vpack.c.bf16 %v258, %v257
  %v302 = vpack.c.bf16 %v260, %v259
  %v303 = vpack.c.bf16 %v262, %v261
  %v304 = vpack.c.bf16 %v264, %v263
  %v305 = vpack.c.bf16 %v266, %v265
  %v306 = vpack.c.bf16 %v268, %v267
  %v307 = vpack.c.bf16 %v270, %v269
  %v308 = vpack.c.bf16 %v272, %v271
  %v309 = vpack.c.bf16 %v274, %v273
  %v310 = vpack.c.bf16 %v276, %v275
  %v311 = vpack.c.bf16 %v278, %v277
  %v312 = vpack.c.bf16 %v280, %v279
  %v313 = vld [vmem:[%s3] sm:$0xf]
  %v314 = vld [vmem:[%s3 + $0x4] sm:$0xf]
  %v315 = vld [vmem:[%s3 + $0x8] sm:$0xf]
  %v316 = vld [vmem:[%s3 + $0xc] sm:$0xf]
  %v317 = vld [vmem:[%s3 + $0x10] sm:$0xf]
  %v318 = vld [vmem:[%s3 + $0x14] sm:$0xf]
  %v319 = vld [vmem:[%s3 + $0x18] sm:$0xf]
  %v320 = vld [vmem:[%s3 + $0x1c] sm:$0xf]
  %v321 = vld [vmem:[%s3 + $0x20] sm:$0xf]
  %v322 = vld [vmem:[%s3 + $0x24] sm:$0xf]
  %v323 = vld [vmem:[%s3 + $0x28] sm:$0xf]
  %v324 = vld [vmem:[%s3 + $0x2c] sm:$0xf]
  %v325 = vld [vmem:[%s3 + $0x30] sm:$0xf]
  %v326 = vld [vmem:[%s3 + $0x34] sm:$0xf]
  %v327 = vld [vmem:[%s3 + $0x38] sm:$0xf]
  %v328 = vld [vmem:[%s3 + $0x3c] sm:$0xf]
  %v345 = vunpack.c.l.b16 %v313
  %v346 = vunpack.c.l.b16 %v314
  %v347 = vunpack.c.l.b16 %v315
  %v348 = vunpack.c.l.b16 %v316
  %v349 = vunpack.c.l.b16 %v317
  %v350 = vunpack.c.l.b16 %v318
  %v351 = vunpack.c.l.b16 %v319
  %v352 = vunpack.c.l.b16 %v320
  %v353 = vunpack.c.l.b16 %v321
  %v354 = vunpack.c.l.b16 %v322
  %v355 = vunpack.c.l.b16 %v323
  %v356 = vunpack.c.l.b16 %v324
  %v357 = vunpack.c.l.b16 %v325
  %v358 = vunpack.c.l.b16 %v326
  %v359 = vunpack.c.l.b16 %v327
  %v360 = vunpack.c.l.b16 %v328
  %v361 = vpack.c.b16 %v346, %v345
  %v362 = vpack.c.b16 %v348, %v347
  %v363 = vpack.c.b16 %v350, %v349
  %v364 = vpack.c.b16 %v352, %v351
  %v365 = vpack.c.b16 %v354, %v353
  %v366 = vpack.c.b16 %v356, %v355
  %v367 = vpack.c.b16 %v358, %v357
  %v368 = vpack.c.b16 %v360, %v359
  %377 = vmatpush.bf16.msra.mxu0 %v368
  %378 = vmatpush.bf16.msra.mxu0 %v367
  %379 = vmatpush.bf16.msra.mxu0 %v366
  %380 = vmatpush.bf16.msra.mxu0 %v365
  %381 = vmatpush.bf16.msra.mxu0 %v364
  %382 = vmatpush.bf16.msra.mxu0 %v363
  %383 = vmatpush.bf16.msra.mxu0 %v362
  %384 = vmatpush.bf16.msra.mxu0 %v361
  %385 = vmatmul.bf16.gmra.mxu0 %v281
  %v386 = vpop.f32.mrf.mxu0
  %v387 = vadd.f32 0.0, %v386
  %v388 = vpop.f32.mrf.mxu0
  %v389 = vadd.f32 0.0, %v388
  %390 = vmatmul.bf16.gmra.mxu0 %v282
  %v391 = vpop.f32.mrf.mxu0
  %v392 = vadd.f32 0.0, %v391
  %v393 = vpop.f32.mrf.mxu0
  %v394 = vadd.f32 0.0, %v393
  %395 = vmatmul.bf16.gmra.mxu0 %v283
  %v396 = vpop.f32.mrf.mxu0
  %v397 = vadd.f32 0.0, %v396
  %v398 = vpop.f32.mrf.mxu0
  %v399 = vadd.f32 0.0, %v398
  %400 = vmatmul.bf16.gmra.mxu0 %v284
  %v401 = vpop.f32.mrf.mxu0
  %v402 = vadd.f32 0.0, %v401
  %v403 = vpop.f32.mrf.mxu0
  %v404 = vadd.f32 0.0, %v403
  %405 = vmatmul.bf16.gmra.mxu0 %v285
  %v406 = vpop.f32.mrf.mxu0
  %v407 = vadd.f32 0.0, %v406
  %v408 = vpop.f32.mrf.mxu0
  %v409 = vadd.f32 0.0, %v408
  %410 = vmatmul.bf16.gmra.mxu0 %v286
  %v411 = vpop.f32.mrf.mxu0
  %v412 = vadd.f32 0.0, %v411
  %v413 = vpop.f32.mrf.mxu0
  %v414 = vadd.f32 0.0, %v413
  %415 = vmatmul.bf16.gmra.mxu0 %v287
  %v416 = vpop.f32.mrf.mxu0
  %v417 = vadd.f32 0.0, %v416
  %v418 = vpop.f32.mrf.mxu0
  %v419 = vadd.f32 0.0, %v418
  %420 = vmatmul.bf16.gmra.mxu0 %v288
  %v421 = vpop.f32.mrf.mxu0
  %v422 = vadd.f32 0.0, %v421
  %v423 = vpop.f32.mrf.mxu0
  %v424 = vadd.f32 0.0, %v423
  %425 = vmatmul.bf16.gmra.mxu0 %v289
  %v426 = vpop.f32.mrf.mxu0
  %v427 = vadd.f32 0.0, %v426
  %v428 = vpop.f32.mrf.mxu0
  %v429 = vadd.f32 0.0, %v428
  %430 = vmatmul.bf16.gmra.mxu0 %v290
  %v431 = vpop.f32.mrf.mxu0
  %v432 = vadd.f32 0.0, %v431
  %v433 = vpop.f32.mrf.mxu0
  %v434 = vadd.f32 0.0, %v433
  %435 = vmatmul.bf16.gmra.mxu0 %v291
  %v436 = vpop.f32.mrf.mxu0
  %v437 = vadd.f32 0.0, %v436
  %v438 = vpop.f32.mrf.mxu0
  %v439 = vadd.f32 0.0, %v438
  %440 = vmatmul.bf16.gmra.mxu0 %v292
  %v441 = vpop.f32.mrf.mxu0
  %v442 = vadd.f32 0.0, %v441
  %v443 = vpop.f32.mrf.mxu0
  %v444 = vadd.f32 0.0, %v443
  %445 = vmatmul.bf16.gmra.mxu0 %v293
  %v446 = vpop.f32.mrf.mxu0
  %v447 = vadd.f32 0.0, %v446
  %v448 = vpop.f32.mrf.mxu0
  %v449 = vadd.f32 0.0, %v448
  %450 = vmatmul.bf16.gmra.mxu0 %v294
  %v451 = vpop.f32.mrf.mxu0
  %v452 = vadd.f32 0.0, %v451
  %v453 = vpop.f32.mrf.mxu0
  %v454 = vadd.f32 0.0, %v453
  %455 = vmatmul.bf16.gmra.mxu0 %v295
  %v456 = vpop.f32.mrf.mxu0
  %v457 = vadd.f32 0.0, %v456
  %v458 = vpop.f32.mrf.mxu0
  %v459 = vadd.f32 0.0, %v458
  %460 = vmatmul.bf16.gmra.mxu0 %v296
  %v461 = vpop.f32.mrf.mxu0
  %v462 = vadd.f32 0.0, %v461
  %v463 = vpop.f32.mrf.mxu0
  %v464 = vadd.f32 0.0, %v463
  %465 = vmatmul.bf16.gmra.mxu0 %v297
  %v466 = vpop.f32.mrf.mxu0
  %v467 = vadd.f32 0.0, %v466
  %v468 = vpop.f32.mrf.mxu0
  %v469 = vadd.f32 0.0, %v468
  %470 = vmatmul.bf16.gmra.mxu0 %v298
  %v471 = vpop.f32.mrf.mxu0
  %v472 = vadd.f32 0.0, %v471
  %v473 = vpop.f32.mrf.mxu0
  %v474 = vadd.f32 0.0, %v473
  %475 = vmatmul.bf16.gmra.mxu0 %v299
  %v476 = vpop.f32.mrf.mxu0
  %v477 = vadd.f32 0.0, %v476
  %v478 = vpop.f32.mrf.mxu0
  %v479 = vadd.f32 0.0, %v478
  %480 = vmatmul.bf16.gmra.mxu0 %v300
  %v481 = vpop.f32.mrf.mxu0
  %v482 = vadd.f32 0.0, %v481
  %v483 = vpop.f32.mrf.mxu0
  %v484 = vadd.f32 0.0, %v483
  %485 = vmatmul.bf16.gmra.mxu0 %v301
  %v486 = vpop.f32.mrf.mxu0
  %v487 = vadd.f32 0.0, %v486
  %v488 = vpop.f32.mrf.mxu0
  %v489 = vadd.f32 0.0, %v488
  %490 = vmatmul.bf16.gmra.mxu0 %v302
  %v491 = vpop.f32.mrf.mxu0
  %v492 = vadd.f32 0.0, %v491
  %v493 = vpop.f32.mrf.mxu0
  %v494 = vadd.f32 0.0, %v493
  %495 = vmatmul.bf16.gmra.mxu0 %v303
  %v496 = vpop.f32.mrf.mxu0
  %v497 = vadd.f32 0.0, %v496
  %v498 = vpop.f32.mrf.mxu0
  %v499 = vadd.f32 0.0, %v498
  %500 = vmatmul.bf16.gmra.mxu0 %v304
  %v501 = vpop.f32.mrf.mxu0
  %v502 = vadd.f32 0.0, %v501
  %v503 = vpop.f32.mrf.mxu0
  %v504 = vadd.f32 0.0, %v503
  %505 = vmatmul.bf16.gmra.mxu0 %v305
  %v506 = vpop.f32.mrf.mxu0
  %v507 = vadd.f32 0.0, %v506
  %v508 = vpop.f32.mrf.mxu0
  %v509 = vadd.f32 0.0, %v508
  %510 = vmatmul.bf16.gmra.mxu0 %v306
  %v511 = vpop.f32.mrf.mxu0
  %v512 = vadd.f32 0.0, %v511
  %v513 = vpop.f32.mrf.mxu0
  %v514 = vadd.f32 0.0, %v513
  %515 = vmatmul.bf16.gmra.mxu0 %v307
  %v516 = vpop.f32.mrf.mxu0
  %v517 = vadd.f32 0.0, %v516
  %v518 = vpop.f32.mrf.mxu0
  %v519 = vadd.f32 0.0, %v518
  %520 = vmatmul.bf16.gmra.mxu0 %v308
  %v521 = vpop.f32.mrf.mxu0
  %v522 = vadd.f32 0.0, %v521
  %v523 = vpop.f32.mrf.mxu0
  %v524 = vadd.f32 0.0, %v523
  %525 = vmatmul.bf16.gmra.mxu0 %v309
  %v526 = vpop.f32.mrf.mxu0
  %v527 = vadd.f32 0.0, %v526
  %v528 = vpop.f32.mrf.mxu0
  %v529 = vadd.f32 0.0, %v528
  %530 = vmatmul.bf16.gmra.mxu0 %v310
  %v531 = vpop.f32.mrf.mxu0
  %v532 = vadd.f32 0.0, %v531
  %v533 = vpop.f32.mrf.mxu0
  %v534 = vadd.f32 0.0, %v533
  %535 = vmatmul.bf16.gmra.mxu0 %v311
  %v536 = vpop.f32.mrf.mxu0
  %v537 = vadd.f32 0.0, %v536
  %v538 = vpop.f32.mrf.mxu0
  %v539 = vadd.f32 0.0, %v538
  %540 = vmatmul.bf16.gmra.mxu0 %v312
  %v541 = vpop.f32.mrf.mxu0
  %v542 = vadd.f32 0.0, %v541
  %v543 = vpop.f32.mrf.mxu0
  %v544 = vadd.f32 0.0, %v543
  %545 = vdwg.mxu0
  %546 = vst [vmem:[%s4] sm:$0xff] %v387
  %547 = vst [vmem:[%s4 + $0x8] sm:$0xff] %v389
  %548 = vst [vmem:[%s4 + $0x10] sm:$0xff] %v392
  %549 = vst [vmem:[%s4 + $0x18] sm:$0xff] %v394
  %550 = vst [vmem:[%s4 + $0x20] sm:$0xff] %v397
  %551 = vst [vmem:[%s4 + $0x28] sm:$0xff] %v399
  %552 = vst [vmem:[%s4 + $0x30] sm:$0xff] %v402
  %553 = vst [vmem:[%s4 + $0x38] sm:$0xff] %v404
  %554 = vst [vmem:[%s4 + $0x40] sm:$0xff] %v407
  %555 = vst [vmem:[%s4 + $0x48] sm:$0xff] %v409
  %556 = vst [vmem:[%s4 + $0x50] sm:$0xff] %v412
  %557 = vst [vmem:[%s4 + $0x58] sm:$0xff] %v414
  %558 = vst [vmem:[%s4 + $0x60] sm:$0xff] %v417
  %559 = vst [vmem:[%s4 + $0x68] sm:$0xff] %v419
  %560 = vst [vmem:[%s4 + $0x70] sm:$0xff] %v422
  %561 = vst [vmem:[%s4 + $0x78] sm:$0xff] %v424
  %562 = vst [vmem:[%s4 + $0x80] sm:$0xff] %v427
  %563 = vst [vmem:[%s4 + $0x88] sm:$0xff] %v429
  %564 = vst [vmem:[%s4 + $0x90] sm:$0xff] %v432
  %565 = vst [vmem:[%s4 + $0x98] sm:$0xff] %v434
  %566 = vst [vmem:[%s4 + $0xa0] sm:$0xff] %v437
  %567 = vst [vmem:[%s4 + $0xa8] sm:$0xff] %v439
  %568 = vst [vmem:[%s4 + $0xb0] sm:$0xff] %v442
  %569 = vst [vmem:[%s4 + $0xb8] sm:$0xff] %v444
  %570 = vst [vmem:[%s4 + $0xc0] sm:$0xff] %v447
  %571 = vst [vmem:[%s4 + $0xc8] sm:$0xff] %v449
  %572 = vst [vmem:[%s4 + $0xd0] sm:$0xff] %v452
  %573 = vst [vmem:[%s4 + $0xd8] sm:$0xff] %v454
  %574 = vst [vmem:[%s4 + $0xe0] sm:$0xff] %v457
  %575 = vst [vmem:[%s4 + $0xe8] sm:$0xff] %v459
  %576 = vst [vmem:[%s4 + $0xf0] sm:$0xff] %v462
  %577 = vst [vmem:[%s4 + $0xf8] sm:$0xff] %v464
  %578 = vst [vmem:[%s4 + $0x100] sm:$0xff] %v467
  %579 = vst [vmem:[%s4 + $0x108] sm:$0xff] %v469
  %580 = vst [vmem:[%s4 + $0x110] sm:$0xff] %v472
  %581 = vst [vmem:[%s4 + $0x118] sm:$0xff] %v474
  %582 = vst [vmem:[%s4 + $0x120] sm:$0xff] %v477
  %583 = vst [vmem:[%s4 + $0x128] sm:$0xff] %v479
  %584 = vst [vmem:[%s4 + $0x130] sm:$0xff] %v482
  %585 = vst [vmem:[%s4 + $0x138] sm:$0xff] %v484
  %586 = vst [vmem:[%s4 + $0x140] sm:$0xff] %v487
  %587 = vst [vmem:[%s4 + $0x148] sm:$0xff] %v489
  %588 = vst [vmem:[%s4 + $0x150] sm:$0xff] %v492
  %589 = vst [vmem:[%s4 + $0x158] sm:$0xff] %v494
  %590 = vst [vmem:[%s4 + $0x160] sm:$0xff] %v497
  %591 = vst [vmem:[%s4 + $0x168] sm:$0xff] %v499
  %592 = vst [vmem:[%s4 + $0x170] sm:$0xff] %v502
  %593 = vst [vmem:[%s4 + $0x178] sm:$0xff] %v504
  %594 = vst [vmem:[%s4 + $0x180] sm:$0xff] %v507
  %595 = vst [vmem:[%s4 + $0x188] sm:$0xff] %v509
  %596 = vst [vmem:[%s4 + $0x190] sm:$0xff] %v512
  %597 = vst [vmem:[%s4 + $0x198] sm:$0xff] %v514
  %598 = vst [vmem:[%s4 + $0x1a0] sm:$0xff] %v517
  %599 = vst [vmem:[%s4 + $0x1a8] sm:$0xff] %v519
  %600 = vst [vmem:[%s4 + $0x1b0] sm:$0xff] %v522
  %601 = vst [vmem:[%s4 + $0x1b8] sm:$0xff] %v524
  %602 = vst [vmem:[%s4 + $0x1c0] sm:$0xff] %v527
  %603 = vst [vmem:[%s4 + $0x1c8] sm:$0xff] %v529
  %604 = vst [vmem:[%s4 + $0x1d0] sm:$0xff] %v532
  %605 = vst [vmem:[%s4 + $0x1d8] sm:$0xff] %v534
  %606 = vst [vmem:[%s4 + $0x1e0] sm:$0xff] %v537
  %607 = vst [vmem:[%s4 + $0x1e8] sm:$0xff] %v539
  %608 = vst [vmem:[%s4 + $0x1f0] sm:$0xff] %v542
  %609 = vst [vmem:[%s4 + $0x1f8] sm:$0xff] %v544
  // Predicated region
  $region18: #{bottleneck_block.8} parent=0 // pred_check
    _
  $region19: #{bottleneck_block.8} parent=0 // pred_check_branch
    %611 = sbr.rel (0) target = $region21
  $region20: #{bottleneck_block.8} parent=0 // pred_region
    _
  $region21: #{bottleneck_block.8} parent=0 // pred_fallthru
    _
  // Predicated region
  $region22: #{bottleneck_block.8} parent=0 // pred_check
    _
  $region23: #{bottleneck_block.8} parent=0 // pred_check_branch
    %613 = sbr.rel (0) target = $region25
  $region24: #{bottleneck_block.8} parent=0 // pred_region
    _
  $region25: #{bottleneck_block.8} parent=0 // pred_fallthru
    _

// kernel: bottleneck_block.9
$region0: #{bottleneck_block.9}
  #allocation0 [shape = 'u32[]', space=smem, size = 0x4, offset = 0x4, fixed_abs, tag = 'smem constant byte address 0x4 - core index']
  #allocation1 [shape = 'u32[72,128]{1,0:T(1,128)}', space=vmem, size = 0x9000, scoped, tag = 'internal scratch']
  %s0 = inlined_call_operand.vmem [shape: bf16[512,128], index: 0, kind: input, shape index: {}]
  %s1 = inlined_call_operand.vmem [shape: f32[1,128], index: 1, kind: input, shape index: {}]
  %s2 = inlined_call_operand.vmem [shape: f32[1,128], index: 2, kind: input, shape index: {}]
  %s3 = inlined_call_operand.vmem [shape: bf16[128,128], index: 3, kind: input, shape index: {}]
  %s4 = inlined_call_operand.vmem [shape: f32[512,128], index: 4, kind: input, shape index: {}]
  %s5 = inlined_call_operand.vmem [shape: f32[512,128], index: 5, kind: output, shape index: {}]
  %s6 = sld [smem:[#allocation0]]
  $region30: #{bottleneck_block.9} parent=0
    _
  %s8 = ssub.s32 1, %s6
  %s9 = scalar_select 0, %s8, %s6
  // Predicated region
  $region2: #{bottleneck_block.9} parent=0 // pred_check
    _
  $region3: #{bottleneck_block.9} parent=0 // pred_check_branch
    %11 = sbr.rel (0) target = $region5
  $region4: #{bottleneck_block.9} parent=0 // pred_region
    _
  $region5: #{bottleneck_block.9} parent=0 // pred_fallthru
    _
  // Predicated region
  $region6: #{bottleneck_block.9} parent=0 // pred_check
    _
  $region7: #{bottleneck_block.9} parent=0 // pred_check_branch
    %13 = sbr.rel (0) target = $region9
  $region8: #{bottleneck_block.9} parent=0 // pred_region
    _
  $region9: #{bottleneck_block.9} parent=0 // pred_fallthru
    _
  // Predicated region
  $region10: #{bottleneck_block.9} parent=0 // pred_check
    _
  $region11: #{bottleneck_block.9} parent=0 // pred_check_branch
    %15 = sbr.rel (0) target = $region13
  $region12: #{bottleneck_block.9} parent=0 // pred_region
    _
  $region13: #{bottleneck_block.9} parent=0 // pred_fallthru
    _
  // Predicated region
  $region14: #{bottleneck_block.9} parent=0 // pred_check
    _
  $region15: #{bottleneck_block.9} parent=0 // pred_check_branch
    %17 = sbr.rel (0) target = $region17
  $region16: #{bottleneck_block.9} parent=0 // pred_region
    _
  $region17: #{bottleneck_block.9} parent=0 // pred_fallthru
    _
  // Predicated region
  $region18: #{bottleneck_block.9} parent=0 // pred_check
    _
  $region19: #{bottleneck_block.9} parent=0 // pred_check_branch
    %19 = sbr.rel (0) target = $region21
  $region20: #{bottleneck_block.9} parent=0 // pred_region
    _
  $region21: #{bottleneck_block.9} parent=0 // pred_fallthru
    _
  %v20 = vld [vmem:[%s0] sm:$0xf]
  %v21 = vld [vmem:[%s0 + $0x4] sm:$0xf]
  %v22 = vld [vmem:[%s0 + $0x8] sm:$0xf]
  %v23 = vld [vmem:[%s0 + $0xc] sm:$0xf]
  %v24 = vld [vmem:[%s0 + $0x10] sm:$0xf]
  %v25 = vld [vmem:[%s0 + $0x14] sm:$0xf]
  %v26 = vld [vmem:[%s0 + $0x18] sm:$0xf]
  %v27 = vld [vmem:[%s0 + $0x1c] sm:$0xf]
  %v28 = vld [vmem:[%s0 + $0x20] sm:$0xf]
  %v29 = vld [vmem:[%s0 + $0x24] sm:$0xf]
  %v30 = vld [vmem:[%s0 + $0x28] sm:$0xf]
  %v31 = vld [vmem:[%s0 + $0x2c] sm:$0xf]
  %v32 = vld [vmem:[%s0 + $0x30] sm:$0xf]
  %v33 = vld [vmem:[%s0 + $0x34] sm:$0xf]
  %v34 = vld [vmem:[%s0 + $0x38] sm:$0xf]
  %v35 = vld [vmem:[%s0 + $0x3c] sm:$0xf]
  %v36 = vld [vmem:[%s0 + $0x40] sm:$0xf]
  %v37 = vld [vmem:[%s0 + $0x44] sm:$0xf]
  %v38 = vld [vmem:[%s0 + $0x48] sm:$0xf]
  %v39 = vld [vmem:[%s0 + $0x4c] sm:$0xf]
  %v40 = vld [vmem:[%s0 + $0x50] sm:$0xf]
  %v41 = vld [vmem:[%s0 + $0x54] sm:$0xf]
  %v42 = vld [vmem:[%s0 + $0x58] sm:$0xf]
  %v43 = vld [vmem:[%s0 + $0x5c] sm:$0xf]
  %v44 = vld [vmem:[%s0 + $0x60] sm:$0xf]
  %v45 = vld [vmem:[%s0 + $0x64] sm:$0xf]
  %v46 = vld [vmem:[%s0 + $0x68] sm:$0xf]
  %v47 = vld [vmem:[%s0 + $0x6c] sm:$0xf]
  %v48 = vld [vmem:[%s0 + $0x70] sm:$0xf]
  %v49 = vld [vmem:[%s0 + $0x74] sm:$0xf]
  %v50 = vld [vmem:[%s0 + $0x78] sm:$0xf]
  %v51 = vld [vmem:[%s0 + $0x7c] sm:$0xf]
  %v52 = vld [vmem:[%s0 + $0x80] sm:$0xf]
  %v53 = vld [vmem:[%s0 + $0x84] sm:$0xf]
  %v54 = vld [vmem:[%s0 + $0x88] sm:$0xf]
  %v55 = vld [vmem:[%s0 + $0x8c] sm:$0xf]
  %v56 = vld [vmem:[%s0 + $0x90] sm:$0xf]
  %v57 = vld [vmem:[%s0 + $0x94] sm:$0xf]
  %v58 = vld [vmem:[%s0 + $0x98] sm:$0xf]
  %v59 = vld [vmem:[%s0 + $0x9c] sm:$0xf]
  %v60 = vld [vmem:[%s0 + $0xa0] sm:$0xf]
  %v61 = vld [vmem:[%s0 + $0xa4] sm:$0xf]
  %v62 = vld [vmem:[%s0 + $0xa8] sm:$0xf]
  %v63 = vld [vmem:[%s0 + $0xac] sm:$0xf]
  %v64 = vld [vmem:[%s0 + $0xb0] sm:$0xf]
  %v65 = vld [vmem:[%s0 + $0xb4] sm:$0xf]
  %v66 = vld [vmem:[%s0 + $0xb8] sm:$0xf]
  %v67 = vld [vmem:[%s0 + $0xbc] sm:$0xf]
  %v68 = vld [vmem:[%s0 + $0xc0] sm:$0xf]
  %v69 = vld [vmem:[%s0 + $0xc4] sm:$0xf]
  %v70 = vld [vmem:[%s0 + $0xc8] sm:$0xf]
  %v71 = vld [vmem:[%s0 + $0xcc] sm:$0xf]
  %v72 = vld [vmem:[%s0 + $0xd0] sm:$0xf]
  %v73 = vld [vmem:[%s0 + $0xd4] sm:$0xf]
  %v74 = vld [vmem:[%s0 + $0xd8] sm:$0xf]
  %v75 = vld [vmem:[%s0 + $0xdc] sm:$0xf]
  %v76 = vld [vmem:[%s0 + $0xe0] sm:$0xf]
  %v77 = vld [vmem:[%s0 + $0xe4] sm:$0xf]
  %v78 = vld [vmem:[%s0 + $0xe8] sm:$0xf]
  %v79 = vld [vmem:[%s0 + $0xec] sm:$0xf]
  %v80 = vld [vmem:[%s0 + $0xf0] sm:$0xf]
  %v81 = vld [vmem:[%s0 + $0xf4] sm:$0xf]
  %v82 = vld [vmem:[%s0 + $0xf8] sm:$0xf]
  %v83 = vld [vmem:[%s0 + $0xfc] sm:$0xf]
  %v84 = vunpack.c.l.bf16 %v20
  %v85 = vunpack.c.l.bf16 %v21
  %v86 = vunpack.c.l.bf16 %v22
  %v87 = vunpack.c.l.bf16 %v23
  %v88 = vunpack.c.l.bf16 %v24
  %v89 = vunpack.c.l.bf16 %v25
  %v90 = vunpack.c.l.bf16 %v26
  %v91 = vunpack.c.l.bf16 %v27
  %v92 = vunpack.c.l.bf16 %v28
  %v93 = vunpack.c.l.bf16 %v29
  %v94 = vunpack.c.l.bf16 %v30
  %v95 = vunpack.c.l.bf16 %v31
  %v96 = vunpack.c.l.bf16 %v32
  %v97 = vunpack.c.l.bf16 %v33
  %v98 = vunpack.c.l.bf16 %v34
  %v99 = vunpack.c.l.bf16 %v35
  %v100 = vunpack.c.l.bf16 %v36
  %v101 = vunpack.c.l.bf16 %v37
  %v102 = vunpack.c.l.bf16 %v38
  %v103 = vunpack.c.l.bf16 %v39
  %v104 = vunpack.c.l.bf16 %v40
  %v105 = vunpack.c.l.bf16 %v41
  %v106 = vunpack.c.l.bf16 %v42
  %v107 = vunpack.c.l.bf16 %v43
  %v108 = vunpack.c.l.bf16 %v44
  %v109 = vunpack.c.l.bf16 %v45
  %v110 = vunpack.c.l.bf16 %v46
  %v111 = vunpack.c.l.bf16 %v47
  %v112 = vunpack.c.l.bf16 %v48
  %v113 = vunpack.c.l.bf16 %v49
  %v114 = vunpack.c.l.bf16 %v50
  %v115 = vunpack.c.l.bf16 %v51
  %v116 = vunpack.c.l.bf16 %v52
  %v117 = vunpack.c.l.bf16 %v53
  %v118 = vunpack.c.l.bf16 %v54
  %v119 = vunpack.c.l.bf16 %v55
  %v120 = vunpack.c.l.bf16 %v56
  %v121 = vunpack.c.l.bf16 %v57
  %v122 = vunpack.c.l.bf16 %v58
  %v123 = vunpack.c.l.bf16 %v59
  %v124 = vunpack.c.l.bf16 %v60
  %v125 = vunpack.c.l.bf16 %v61
  %v126 = vunpack.c.l.bf16 %v62
  %v127 = vunpack.c.l.bf16 %v63
  %v128 = vunpack.c.l.bf16 %v64
  %v129 = vunpack.c.l.bf16 %v65
  %v130 = vunpack.c.l.bf16 %v66
  %v131 = vunpack.c.l.bf16 %v67
  %v132 = vunpack.c.l.bf16 %v68
  %v133 = vunpack.c.l.bf16 %v69
  %v134 = vunpack.c.l.bf16 %v70
  %v135 = vunpack.c.l.bf16 %v71
  %v136 = vunpack.c.l.bf16 %v72
  %v137 = vunpack.c.l.bf16 %v73
  %v138 = vunpack.c.l.bf16 %v74
  %v139 = vunpack.c.l.bf16 %v75
  %v140 = vunpack.c.l.bf16 %v76
  %v141 = vunpack.c.l.bf16 %v77
  %v142 = vunpack.c.l.bf16 %v78
  %v143 = vunpack.c.l.bf16 %v79
  %v144 = vunpack.c.l.bf16 %v80
  %v145 = vunpack.c.l.bf16 %v81
  %v146 = vunpack.c.l.bf16 %v82
  %v147 = vunpack.c.l.bf16 %v83
  %v148 = vld [vmem:[%s1] sm:$0x1]
  %v150 = vperm.slane %v148, 0
  %v152 = vmul.f32 %v84, %v150
  %v153 = vmul.f32 %v85, %v150
  %v154 = vmul.f32 %v86, %v150
  %v155 = vmul.f32 %v87, %v150
  %v156 = vmul.f32 %v88, %v150
  %v157 = vmul.f32 %v89, %v150
  %v158 = vmul.f32 %v90, %v150
  %v159 = vmul.f32 %v91, %v150
  %v160 = vmul.f32 %v92, %v150
  %v161 = vmul.f32 %v93, %v150
  %v162 = vmul.f32 %v94, %v150
  %v163 = vmul.f32 %v95, %v150
  %v164 = vmul.f32 %v96, %v150
  %v165 = vmul.f32 %v97, %v150
  %v166 = vmul.f32 %v98, %v150
  %v167 = vmul.f32 %v99, %v150
  %v168 = vmul.f32 %v100, %v150
  %v169 = vmul.f32 %v101, %v150
  %v170 = vmul.f32 %v102, %v150
  %v171 = vmul.f32 %v103, %v150
  %v172 = vmul.f32 %v104, %v150
  %v173 = vmul.f32 %v105, %v150
  %v174 = vmul.f32 %v106, %v150
  %v175 = vmul.f32 %v107, %v150
  %v176 = vmul.f32 %v108, %v150
  %v177 = vmul.f32 %v109, %v150
  %v178 = vmul.f32 %v110, %v150
  %v179 = vmul.f32 %v111, %v150
  %v180 = vmul.f32 %v112, %v150
  %v181 = vmul.f32 %v113, %v150
  %v182 = vmul.f32 %v114, %v150
  %v183 = vmul.f32 %v115, %v150
  %v184 = vmul.f32 %v116, %v150
  %v185 = vmul.f32 %v117, %v150
  %v186 = vmul.f32 %v118, %v150
  %v187 = vmul.f32 %v119, %v150
  %v188 = vmul.f32 %v120, %v150
  %v189 = vmul.f32 %v121, %v150
  %v190 = vmul.f32 %v122, %v150
  %v191 = vmul.f32 %v123, %v150
  %v192 = vmul.f32 %v124, %v150
  %v193 = vmul.f32 %v125, %v150
  %v194 = vmul.f32 %v126, %v150
  %v195 = vmul.f32 %v127, %v150
  %v196 = vmul.f32 %v128, %v150
  %v197 = vmul.f32 %v129, %v150
  %v198 = vmul.f32 %v130, %v150
  %v199 = vmul.f32 %v131, %v150
  %v200 = vmul.f32 %v132, %v150
  %v201 = vmul.f32 %v133, %v150
  %v202 = vmul.f32 %v134, %v150
  %v203 = vmul.f32 %v135, %v150
  %v204 = vmul.f32 %v136, %v150
  %v205 = vmul.f32 %v137, %v150
  %v206 = vmul.f32 %v138, %v150
  %v207 = vmul.f32 %v139, %v150
  %v208 = vmul.f32 %v140, %v150
  %v209 = vmul.f32 %v141, %v150
  %v210 = vmul.f32 %v142, %v150
  %v211 = vmul.f32 %v143, %v150
  %v212 = vmul.f32 %v144, %v150
  %v213 = vmul.f32 %v145, %v150
  %v214 = vmul.f32 %v146, %v150
  %v215 = vmul.f32 %v147, %v150
  %v216 = vld [vmem:[%s2] sm:$0x1]
  %v218 = vperm.slane %v216, 0
  %v220 = vadd.f32 %v152, %v218
  %v221 = vadd.f32 %v153, %v218
  %v222 = vadd.f32 %v154, %v218
  %v223 = vadd.f32 %v155, %v218
  %v224 = vadd.f32 %v156, %v218
  %v225 = vadd.f32 %v157, %v218
  %v226 = vadd.f32 %v158, %v218
  %v227 = vadd.f32 %v159, %v218
  %v228 = vadd.f32 %v160, %v218
  %v229 = vadd.f32 %v161, %v218
  %v230 = vadd.f32 %v162, %v218
  %v231 = vadd.f32 %v163, %v218
  %v232 = vadd.f32 %v164, %v218
  %v233 = vadd.f32 %v165, %v218
  %v234 = vadd.f32 %v166, %v218
  %v235 = vadd.f32 %v167, %v218
  %v236 = vadd.f32 %v168, %v218
  %v237 = vadd.f32 %v169, %v218
  %v238 = vadd.f32 %v170, %v218
  %v239 = vadd.f32 %v171, %v218
  %v240 = vadd.f32 %v172, %v218
  %v241 = vadd.f32 %v173, %v218
  %v242 = vadd.f32 %v174, %v218
  %v243 = vadd.f32 %v175, %v218
  %v244 = vadd.f32 %v176, %v218
  %v245 = vadd.f32 %v177, %v218
  %v246 = vadd.f32 %v178, %v218
  %v247 = vadd.f32 %v179, %v218
  %v248 = vadd.f32 %v180, %v218
  %v249 = vadd.f32 %v181, %v218
  %v250 = vadd.f32 %v182, %v218
  %v251 = vadd.f32 %v183, %v218
  %v252 = vadd.f32 %v184, %v218
  %v253 = vadd.f32 %v185, %v218
  %v254 = vadd.f32 %v186, %v218
  %v255 = vadd.f32 %v187, %v218
  %v256 = vadd.f32 %v188, %v218
  %v257 = vadd.f32 %v189, %v218
  %v258 = vadd.f32 %v190, %v218
  %v259 = vadd.f32 %v191, %v218
  %v260 = vadd.f32 %v192, %v218
  %v261 = vadd.f32 %v193, %v218
  %v262 = vadd.f32 %v194, %v218
  %v263 = vadd.f32 %v195, %v218
  %v264 = vadd.f32 %v196, %v218
  %v265 = vadd.f32 %v197, %v218
  %v266 = vadd.f32 %v198, %v218
  %v267 = vadd.f32 %v199, %v218
  %v268 = vadd.f32 %v200, %v218
  %v269 = vadd.f32 %v201, %v218
  %v270 = vadd.f32 %v202, %v218
  %v271 = vadd.f32 %v203, %v218
  %v272 = vadd.f32 %v204, %v218
  %v273 = vadd.f32 %v205, %v218
  %v274 = vadd.f32 %v206, %v218
  %v275 = vadd.f32 %v207, %v218
  %v276 = vadd.f32 %v208, %v218
  %v277 = vadd.f32 %v209, %v218
  %v278 = vadd.f32 %v210, %v218
  %v279 = vadd.f32 %v211, %v218
  %v280 = vadd.f32 %v212, %v218
  %v281 = vadd.f32 %v213, %v218
  %v282 = vadd.f32 %v214, %v218
  %v283 = vadd.f32 %v215, %v218
  %v284 = vmax.f32 %v220, 0.0
  %v285 = vmax.f32 %v221, 0.0
  %v286 = vmax.f32 %v222, 0.0
  %v287 = vmax.f32 %v223, 0.0
  %v288 = vmax.f32 %v224, 0.0
  %v289 = vmax.f32 %v225, 0.0
  %v290 = vmax.f32 %v226, 0.0
  %v291 = vmax.f32 %v227, 0.0
  %v292 = vmax.f32 %v228, 0.0
  %v293 = vmax.f32 %v229, 0.0
  %v294 = vmax.f32 %v230, 0.0
  %v295 = vmax.f32 %v231, 0.0
  %v296 = vmax.f32 %v232, 0.0
  %v297 = vmax.f32 %v233, 0.0
  %v298 = vmax.f32 %v234, 0.0
  %v299 = vmax.f32 %v235, 0.0
  %v300 = vmax.f32 %v236, 0.0
  %v301 = vmax.f32 %v237, 0.0
  %v302 = vmax.f32 %v238, 0.0
  %v303 = vmax.f32 %v239, 0.0
  %v304 = vmax.f32 %v240, 0.0
  %v305 = vmax.f32 %v241, 0.0
  %v306 = vmax.f32 %v242, 0.0
  %v307 = vmax.f32 %v243, 0.0
  %v308 = vmax.f32 %v244, 0.0
  %v309 = vmax.f32 %v245, 0.0
  %v310 = vmax.f32 %v246, 0.0
  %v311 = vmax.f32 %v247, 0.0
  %v312 = vmax.f32 %v248, 0.0
  %v313 = vmax.f32 %v249, 0.0
  %v314 = vmax.f32 %v250, 0.0
  %v315 = vmax.f32 %v251, 0.0
  %v316 = vmax.f32 %v252, 0.0
  %v317 = vmax.f32 %v253, 0.0
  %v318 = vmax.f32 %v254, 0.0
  %v319 = vmax.f32 %v255, 0.0
  %v320 = vmax.f32 %v256, 0.0
  %v321 = vmax.f32 %v257, 0.0
  %v322 = vmax.f32 %v258, 0.0
  %v323 = vmax.f32 %v259, 0.0
  %v324 = vmax.f32 %v260, 0.0
  %v325 = vmax.f32 %v261, 0.0
  %v326 = vmax.f32 %v262, 0.0
  %v327 = vmax.f32 %v263, 0.0
  %v328 = vmax.f32 %v264, 0.0
  %v329 = vmax.f32 %v265, 0.0
  %v330 = vmax.f32 %v266, 0.0
  %v331 = vmax.f32 %v267, 0.0
  %v332 = vmax.f32 %v268, 0.0
  %v333 = vmax.f32 %v269, 0.0
  %v334 = vmax.f32 %v270, 0.0
  %v335 = vmax.f32 %v271, 0.0
  %v336 = vmax.f32 %v272, 0.0
  %v337 = vmax.f32 %v273, 0.0
  %v338 = vmax.f32 %v274, 0.0
  %v339 = vmax.f32 %v275, 0.0
  %v340 = vmax.f32 %v276, 0.0
  %v341 = vmax.f32 %v277, 0.0
  %v342 = vmax.f32 %v278, 0.0
  %v343 = vmax.f32 %v279, 0.0
  %v344 = vmax.f32 %v280, 0.0
  %v345 = vmax.f32 %v281, 0.0
  %v346 = vmax.f32 %v282, 0.0
  %v347 = vmax.f32 %v283, 0.0
  %v348 = vpack.c.bf16 %v285, %v284
  %v349 = vpack.c.bf16 %v287, %v286
  %v350 = vpack.c.bf16 %v289, %v288
  %v351 = vpack.c.bf16 %v291, %v290
  %v352 = vpack.c.bf16 %v293, %v292
  %v353 = vpack.c.bf16 %v295, %v294
  %v354 = vpack.c.bf16 %v297, %v296
  %v355 = vpack.c.bf16 %v299, %v298
  %v356 = vpack.c.bf16 %v301, %v300
  %v357 = vpack.c.bf16 %v303, %v302
  %v358 = vpack.c.bf16 %v305, %v304
  %v359 = vpack.c.bf16 %v307, %v306
  %v360 = vpack.c.bf16 %v309, %v308
  %v361 = vpack.c.bf16 %v311, %v310
  %v362 = vpack.c.bf16 %v313, %v312
  %v363 = vpack.c.bf16 %v315, %v314
  %v364 = vpack.c.bf16 %v317, %v316
  %v365 = vpack.c.bf16 %v319, %v318
  %v366 = vpack.c.bf16 %v321, %v320
  %v367 = vpack.c.bf16 %v323, %v322
  %v368 = vpack.c.bf16 %v325, %v324
  %v369 = vpack.c.bf16 %v327, %v326
  %v370 = vpack.c.bf16 %v329, %v328
  %v371 = vpack.c.bf16 %v331, %v330
  %v372 = vpack.c.bf16 %v333, %v332
  %v373 = vpack.c.bf16 %v335, %v334
  %v374 = vpack.c.bf16 %v337, %v336
  %v375 = vpack.c.bf16 %v339, %v338
  %v376 = vpack.c.bf16 %v341, %v340
  %v377 = vpack.c.bf16 %v343, %v342
  %v378 = vpack.c.bf16 %v345, %v344
  %v379 = vpack.c.bf16 %v347, %v346
  %v380 = vld [vmem:[%s3] sm:$0xf]
  %v381 = vld [vmem:[%s3 + $0x4] sm:$0xf]
  %v382 = vld [vmem:[%s3 + $0x8] sm:$0xf]
  %v383 = vld [vmem:[%s3 + $0xc] sm:$0xf]
  %v384 = vld [vmem:[%s3 + $0x10] sm:$0xf]
  %v385 = vld [vmem:[%s3 + $0x14] sm:$0xf]
  %v386 = vld [vmem:[%s3 + $0x18] sm:$0xf]
  %v387 = vld [vmem:[%s3 + $0x1c] sm:$0xf]
  %v388 = vld [vmem:[%s3 + $0x20] sm:$0xf]
  %v389 = vld [vmem:[%s3 + $0x24] sm:$0xf]
  %v390 = vld [vmem:[%s3 + $0x28] sm:$0xf]
  %v391 = vld [vmem:[%s3 + $0x2c] sm:$0xf]
  %v392 = vld [vmem:[%s3 + $0x30] sm:$0xf]
  %v393 = vld [vmem:[%s3 + $0x34] sm:$0xf]
  %v394 = vld [vmem:[%s3 + $0x38] sm:$0xf]
  %v395 = vld [vmem:[%s3 + $0x3c] sm:$0xf]
  %v396 = vld [vmem:[%s4] sm:$0xff]
  %v397 = vld [vmem:[%s4 + $0x8] sm:$0xff]
  %v398 = vld [vmem:[%s4 + $0x10] sm:$0xff]
  %v399 = vld [vmem:[%s4 + $0x18] sm:$0xff]
  %v400 = vld [vmem:[%s4 + $0x20] sm:$0xff]
  %v401 = vld [vmem:[%s4 + $0x28] sm:$0xff]
  %v402 = vld [vmem:[%s4 + $0x30] sm:$0xff]
  %v403 = vld [vmem:[%s4 + $0x38] sm:$0xff]
  %v404 = vld [vmem:[%s4 + $0x40] sm:$0xff]
  %v405 = vld [vmem:[%s4 + $0x48] sm:$0xff]
  %v406 = vld [vmem:[%s4 + $0x50] sm:$0xff]
  %v407 = vld [vmem:[%s4 + $0x58] sm:$0xff]
  %v408 = vld [vmem:[%s4 + $0x60] sm:$0xff]
  %v409 = vld [vmem:[%s4 + $0x68] sm:$0xff]
  %v410 = vld [vmem:[%s4 + $0x70] sm:$0xff]
  %v411 = vld [vmem:[%s4 + $0x78] sm:$0xff]
  %v412 = vld [vmem:[%s4 + $0x80] sm:$0xff]
  %v413 = vld [vmem:[%s4 + $0x88] sm:$0xff]
  %v414 = vld [vmem:[%s4 + $0x90] sm:$0xff]
  %v415 = vld [vmem:[%s4 + $0x98] sm:$0xff]
  %v416 = vld [vmem:[%s4 + $0xa0] sm:$0xff]
  %v417 = vld [vmem:[%s4 + $0xa8] sm:$0xff]
  %v418 = vld [vmem:[%s4 + $0xb0] sm:$0xff]
  %v419 = vld [vmem:[%s4 + $0xb8] sm:$0xff]
  %v420 = vld [vmem:[%s4 + $0xc0] sm:$0xff]
  %v421 = vld [vmem:[%s4 + $0xc8] sm:$0xff]
  %v422 = vld [vmem:[%s4 + $0xd0] sm:$0xff]
  %v423 = vld [vmem:[%s4 + $0xd8] sm:$0xff]
  %v424 = vld [vmem:[%s4 + $0xe0] sm:$0xff]
  %v425 = vld [vmem:[%s4 + $0xe8] sm:$0xff]
  %v426 = vld [vmem:[%s4 + $0xf0] sm:$0xff]
  %v427 = vld [vmem:[%s4 + $0xf8] sm:$0xff]
  %v428 = vld [vmem:[%s4 + $0x100] sm:$0xff]
  %v429 = vld [vmem:[%s4 + $0x108] sm:$0xff]
  %v430 = vld [vmem:[%s4 + $0x110] sm:$0xff]
  %v431 = vld [vmem:[%s4 + $0x118] sm:$0xff]
  %v432 = vld [vmem:[%s4 + $0x120] sm:$0xff]
  %v433 = vld [vmem:[%s4 + $0x128] sm:$0xff]
  %v434 = vld [vmem:[%s4 + $0x130] sm:$0xff]
  %v435 = vld [vmem:[%s4 + $0x138] sm:$0xff]
  %v436 = vld [vmem:[%s4 + $0x140] sm:$0xff]
  %v437 = vld [vmem:[%s4 + $0x148] sm:$0xff]
  %v438 = vld [vmem:[%s4 + $0x150] sm:$0xff]
  %v439 = vld [vmem:[%s4 + $0x158] sm:$0xff]
  %v440 = vld [vmem:[%s4 + $0x160] sm:$0xff]
  %v441 = vld [vmem:[%s4 + $0x168] sm:$0xff]
  %v442 = vld [vmem:[%s4 + $0x170] sm:$0xff]
  %v443 = vld [vmem:[%s4 + $0x178] sm:$0xff]
  %v444 = vld [vmem:[%s4 + $0x180] sm:$0xff]
  %v445 = vld [vmem:[%s4 + $0x188] sm:$0xff]
  %v446 = vld [vmem:[%s4 + $0x190] sm:$0xff]
  %v447 = vld [vmem:[%s4 + $0x198] sm:$0xff]
  %v448 = vld [vmem:[%s4 + $0x1a0] sm:$0xff]
  %v449 = vld [vmem:[%s4 + $0x1a8] sm:$0xff]
  %v450 = vld [vmem:[%s4 + $0x1b0] sm:$0xff]
  %v451 = vld [vmem:[%s4 + $0x1b8] sm:$0xff]
  %v452 = vld [vmem:[%s4 + $0x1c0] sm:$0xff]
  %v453 = vld [vmem:[%s4 + $0x1c8] sm:$0xff]
  %v454 = vld [vmem:[%s4 + $0x1d0] sm:$0xff]
  %v455 = vld [vmem:[%s4 + $0x1d8] sm:$0xff]
  %v456 = vld [vmem:[%s4 + $0x1e0] sm:$0xff]
  %v457 = vld [vmem:[%s4 + $0x1e8] sm:$0xff]
  %v458 = vld [vmem:[%s4 + $0x1f0] sm:$0xff]
  %v459 = vld [vmem:[%s4 + $0x1f8] sm:$0xff]
  %v476 = vunpack.c.l.b16 %v380
  %v477 = vunpack.c.l.b16 %v381
  %v478 = vunpack.c.l.b16 %v382
  %v479 = vunpack.c.l.b16 %v383
  %v480 = vunpack.c.l.b16 %v384
  %v481 = vunpack.c.l.b16 %v385
  %v482 = vunpack.c.l.b16 %v386
  %v483 = vunpack.c.l.b16 %v387
  %v484 = vunpack.c.l.b16 %v388
  %v485 = vunpack.c.l.b16 %v389
  %v486 = vunpack.c.l.b16 %v390
  %v487 = vunpack.c.l.b16 %v391
  %v488 = vunpack.c.l.b16 %v392
  %v489 = vunpack.c.l.b16 %v393
  %v490 = vunpack.c.l.b16 %v394
  %v491 = vunpack.c.l.b16 %v395
  %v492 = vpack.c.b16 %v477, %v476
  %v493 = vpack.c.b16 %v479, %v478
  %v494 = vpack.c.b16 %v481, %v480
  %v495 = vpack.c.b16 %v483, %v482
  %v496 = vpack.c.b16 %v485, %v484
  %v497 = vpack.c.b16 %v487, %v486
  %v498 = vpack.c.b16 %v489, %v488
  %v499 = vpack.c.b16 %v491, %v490
  %508 = vmatpush.bf16.msra.mxu0 %v499
  %509 = vmatpush.bf16.msra.mxu0 %v498
  %510 = vmatpush.bf16.msra.mxu0 %v497
  %511 = vmatpush.bf16.msra.mxu0 %v496
  %512 = vmatpush.bf16.msra.mxu0 %v495
  %513 = vmatpush.bf16.msra.mxu0 %v494
  %514 = vmatpush.bf16.msra.mxu0 %v493
  %515 = vmatpush.bf16.msra.mxu0 %v492
  %516 = vmatmul.bf16.gmra.mxu0 %v348
  %v517 = vpop.f32.mrf.mxu0
  %v518 = vadd.f32 %v396, %v517
  %v519 = vpop.f32.mrf.mxu0
  %v520 = vadd.f32 %v397, %v519
  %521 = vmatmul.bf16.gmra.mxu0 %v349
  %v522 = vpop.f32.mrf.mxu0
  %v523 = vadd.f32 %v398, %v522
  %v524 = vpop.f32.mrf.mxu0
  %v525 = vadd.f32 %v399, %v524
  %526 = vmatmul.bf16.gmra.mxu0 %v350
  %v527 = vpop.f32.mrf.mxu0
  %v528 = vadd.f32 %v400, %v527
  %v529 = vpop.f32.mrf.mxu0
  %v530 = vadd.f32 %v401, %v529
  %531 = vmatmul.bf16.gmra.mxu0 %v351
  %v532 = vpop.f32.mrf.mxu0
  %v533 = vadd.f32 %v402, %v532
  %v534 = vpop.f32.mrf.mxu0
  %v535 = vadd.f32 %v403, %v534
  %536 = vmatmul.bf16.gmra.mxu0 %v352
  %v537 = vpop.f32.mrf.mxu0
  %v538 = vadd.f32 %v404, %v537
  %v539 = vpop.f32.mrf.mxu0
  %v540 = vadd.f32 %v405, %v539
  %541 = vmatmul.bf16.gmra.mxu0 %v353
  %v542 = vpop.f32.mrf.mxu0
  %v543 = vadd.f32 %v406, %v542
  %v544 = vpop.f32.mrf.mxu0
  %v545 = vadd.f32 %v407, %v544
  %546 = vmatmul.bf16.gmra.mxu0 %v354
  %v547 = vpop.f32.mrf.mxu0
  %v548 = vadd.f32 %v408, %v547
  %v549 = vpop.f32.mrf.mxu0
  %v550 = vadd.f32 %v409, %v549
  %551 = vmatmul.bf16.gmra.mxu0 %v355
  %v552 = vpop.f32.mrf.mxu0
  %v553 = vadd.f32 %v410, %v552
  %v554 = vpop.f32.mrf.mxu0
  %v555 = vadd.f32 %v411, %v554
  %556 = vmatmul.bf16.gmra.mxu0 %v356
  %v557 = vpop.f32.mrf.mxu0
  %v558 = vadd.f32 %v412, %v557
  %v559 = vpop.f32.mrf.mxu0
  %v560 = vadd.f32 %v413, %v559
  %561 = vmatmul.bf16.gmra.mxu0 %v357
  %v562 = vpop.f32.mrf.mxu0
  %v563 = vadd.f32 %v414, %v562
  %v564 = vpop.f32.mrf.mxu0
  %v565 = vadd.f32 %v415, %v564
  %566 = vmatmul.bf16.gmra.mxu0 %v358
  %v567 = vpop.f32.mrf.mxu0
  %v568 = vadd.f32 %v416, %v567
  %v569 = vpop.f32.mrf.mxu0
  %v570 = vadd.f32 %v417, %v569
  %571 = vmatmul.bf16.gmra.mxu0 %v359
  %v572 = vpop.f32.mrf.mxu0
  %v573 = vadd.f32 %v418, %v572
  %v574 = vpop.f32.mrf.mxu0
  %v575 = vadd.f32 %v419, %v574
  %576 = vmatmul.bf16.gmra.mxu0 %v360
  %v577 = vpop.f32.mrf.mxu0
  %v578 = vadd.f32 %v420, %v577
  %v579 = vpop.f32.mrf.mxu0
  %v580 = vadd.f32 %v421, %v579
  %581 = vmatmul.bf16.gmra.mxu0 %v361
  %v582 = vpop.f32.mrf.mxu0
  %v583 = vadd.f32 %v422, %v582
  %v584 = vpop.f32.mrf.mxu0
  %v585 = vadd.f32 %v423, %v584
  %586 = vmatmul.bf16.gmra.mxu0 %v362
  %v587 = vpop.f32.mrf.mxu0
  %v588 = vadd.f32 %v424, %v587
  %v589 = vpop.f32.mrf.mxu0
  %v590 = vadd.f32 %v425, %v589
  %591 = vmatmul.bf16.gmra.mxu0 %v363
  %v592 = vpop.f32.mrf.mxu0
  %v593 = vadd.f32 %v426, %v592
  %v594 = vpop.f32.mrf.mxu0
  %v595 = vadd.f32 %v427, %v594
  %596 = vmatmul.bf16.gmra.mxu0 %v364
  %v597 = vpop.f32.mrf.mxu0
  %v598 = vadd.f32 %v428, %v597
  %v599 = vpop.f32.mrf.mxu0
  %v600 = vadd.f32 %v429, %v599
  %601 = vmatmul.bf16.gmra.mxu0 %v365
  %v602 = vpop.f32.mrf.mxu0
  %v603 = vadd.f32 %v430, %v602
  %v604 = vpop.f32.mrf.mxu0
  %v605 = vadd.f32 %v431, %v604
  %606 = vmatmul.bf16.gmra.mxu0 %v366
  %v607 = vpop.f32.mrf.mxu0
  %v608 = vadd.f32 %v432, %v607
  %v609 = vpop.f32.mrf.mxu0
  %v610 = vadd.f32 %v433, %v609
  %611 = vmatmul.bf16.gmra.mxu0 %v367
  %v612 = vpop.f32.mrf.mxu0
  %v613 = vadd.f32 %v434, %v612
  %v614 = vpop.f32.mrf.mxu0
  %v615 = vadd.f32 %v435, %v614
  %616 = vmatmul.bf16.gmra.mxu0 %v368
  %v617 = vpop.f32.mrf.mxu0
  %v618 = vadd.f32 %v436, %v617
  %v619 = vpop.f32.mrf.mxu0
  %v620 = vadd.f32 %v437, %v619
  %621 = vmatmul.bf16.gmra.mxu0 %v369
  %v622 = vpop.f32.mrf.mxu0
  %v623 = vadd.f32 %v438, %v622
  %v624 = vpop.f32.mrf.mxu0
  %v625 = vadd.f32 %v439, %v624
  %626 = vmatmul.bf16.gmra.mxu0 %v370
  %v627 = vpop.f32.mrf.mxu0
  %v628 = vadd.f32 %v440, %v627
  %v629 = vpop.f32.mrf.mxu0
  %v630 = vadd.f32 %v441, %v629
  %631 = vmatmul.bf16.gmra.mxu0 %v371
  %v632 = vpop.f32.mrf.mxu0
  %v633 = vadd.f32 %v442, %v632
  %v634 = vpop.f32.mrf.mxu0
  %v635 = vadd.f32 %v443, %v634
  %636 = vmatmul.bf16.gmra.mxu0 %v372
  %v637 = vpop.f32.mrf.mxu0
  %v638 = vadd.f32 %v444, %v637
  %v639 = vpop.f32.mrf.mxu0
  %v640 = vadd.f32 %v445, %v639
  %641 = vmatmul.bf16.gmra.mxu0 %v373
  %v642 = vpop.f32.mrf.mxu0
  %v643 = vadd.f32 %v446, %v642
  %v644 = vpop.f32.mrf.mxu0
  %v645 = vadd.f32 %v447, %v644
  %646 = vmatmul.bf16.gmra.mxu0 %v374
  %v647 = vpop.f32.mrf.mxu0
  %v648 = vadd.f32 %v448, %v647
  %v649 = vpop.f32.mrf.mxu0
  %v650 = vadd.f32 %v449, %v649
  %651 = vmatmul.bf16.gmra.mxu0 %v375
  %v652 = vpop.f32.mrf.mxu0
  %v653 = vadd.f32 %v450, %v652
  %v654 = vpop.f32.mrf.mxu0
  %v655 = vadd.f32 %v451, %v654
  %656 = vmatmul.bf16.gmra.mxu0 %v376
  %v657 = vpop.f32.mrf.mxu0
  %v658 = vadd.f32 %v452, %v657
  %v659 = vpop.f32.mrf.mxu0
  %v660 = vadd.f32 %v453, %v659
  %661 = vmatmul.bf16.gmra.mxu0 %v377
  %v662 = vpop.f32.mrf.mxu0
  %v663 = vadd.f32 %v454, %v662
  %v664 = vpop.f32.mrf.mxu0
  %v665 = vadd.f32 %v455, %v664
  %666 = vmatmul.bf16.gmra.mxu0 %v378
  %v667 = vpop.f32.mrf.mxu0
  %v668 = vadd.f32 %v456, %v667
  %v669 = vpop.f32.mrf.mxu0
  %v670 = vadd.f32 %v457, %v669
  %671 = vmatmul.bf16.gmra.mxu0 %v379
  %v672 = vpop.f32.mrf.mxu0
  %v673 = vadd.f32 %v458, %v672
  %v674 = vpop.f32.mrf.mxu0
  %v675 = vadd.f32 %v459, %v674
  %676 = vdwg.mxu0
  %677 = vst [vmem:[%s5] sm:$0xff] %v518
  %678 = vst [vmem:[%s5 + $0x8] sm:$0xff] %v520
  %679 = vst [vmem:[%s5 + $0x10] sm:$0xff] %v523
  %680 = vst [vmem:[%s5 + $0x18] sm:$0xff] %v525
  %681 = vst [vmem:[%s5 + $0x20] sm:$0xff] %v528
  %682 = vst [vmem:[%s5 + $0x28] sm:$0xff] %v530
  %683 = vst [vmem:[%s5 + $0x30] sm:$0xff] %v533
  %684 = vst [vmem:[%s5 + $0x38] sm:$0xff] %v535
  %685 = vst [vmem:[%s5 + $0x40] sm:$0xff] %v538
  %686 = vst [vmem:[%s5 + $0x48] sm:$0xff] %v540
  %687 = vst [vmem:[%s5 + $0x50] sm:$0xff] %v543
  %688 = vst [vmem:[%s5 + $0x58] sm:$0xff] %v545
  %689 = vst [vmem:[%s5 + $0x60] sm:$0xff] %v548
  %690 = vst [vmem:[%s5 + $0x68] sm:$0xff] %v550
  %691 = vst [vmem:[%s5 + $0x70] sm:$0xff] %v553
  %692 = vst [vmem:[%s5 + $0x78] sm:$0xff] %v555
  %693 = vst [vmem:[%s5 + $0x80] sm:$0xff] %v558
  %694 = vst [vmem:[%s5 + $0x88] sm:$0xff] %v560
  %695 = vst [vmem:[%s5 + $0x90] sm:$0xff] %v563
  %696 = vst [vmem:[%s5 + $0x98] sm:$0xff] %v565
  %697 = vst [vmem:[%s5 + $0xa0] sm:$0xff] %v568
  %698 = vst [vmem:[%s5 + $0xa8] sm:$0xff] %v570
  %699 = vst [vmem:[%s5 + $0xb0] sm:$0xff] %v573
  %700 = vst [vmem:[%s5 + $0xb8] sm:$0xff] %v575
  %701 = vst [vmem:[%s5 + $0xc0] sm:$0xff] %v578
  %702 = vst [vmem:[%s5 + $0xc8] sm:$0xff] %v580
  %703 = vst [vmem:[%s5 + $0xd0] sm:$0xff] %v583
  %704 = vst [vmem:[%s5 + $0xd8] sm:$0xff] %v585
  %705 = vst [vmem:[%s5 + $0xe0] sm:$0xff] %v588
  %706 = vst [vmem:[%s5 + $0xe8] sm:$0xff] %v590
  %707 = vst [vmem:[%s5 + $0xf0] sm:$0xff] %v593
  %708 = vst [vmem:[%s5 + $0xf8] sm:$0xff] %v595
  %709 = vst [vmem:[%s5 + $0x100] sm:$0xff] %v598
  %710 = vst [vmem:[%s5 + $0x108] sm:$0xff] %v600
  %711 = vst [vmem:[%s5 + $0x110] sm:$0xff] %v603
  %712 = vst [vmem:[%s5 + $0x118] sm:$0xff] %v605
  %713 = vst [vmem:[%s5 + $0x120] sm:$0xff] %v608
  %714 = vst [vmem:[%s5 + $0x128] sm:$0xff] %v610
  %715 = vst [vmem:[%s5 + $0x130] sm:$0xff] %v613
  %716 = vst [vmem:[%s5 + $0x138] sm:$0xff] %v615
  %717 = vst [vmem:[%s5 + $0x140] sm:$0xff] %v618
  %718 = vst [vmem:[%s5 + $0x148] sm:$0xff] %v620
  %719 = vst [vmem:[%s5 + $0x150] sm:$0xff] %v623
  %720 = vst [vmem:[%s5 + $0x158] sm:$0xff] %v625
  %721 = vst [vmem:[%s5 + $0x160] sm:$0xff] %v628
  %722 = vst [vmem:[%s5 + $0x168] sm:$0xff] %v630
  %723 = vst [vmem:[%s5 + $0x170] sm:$0xff] %v633
  %724 = vst [vmem:[%s5 + $0x178] sm:$0xff] %v635
  %725 = vst [vmem:[%s5 + $0x180] sm:$0xff] %v638
  %726 = vst [vmem:[%s5 + $0x188] sm:$0xff] %v640
  %727 = vst [vmem:[%s5 + $0x190] sm:$0xff] %v643
  %728 = vst [vmem:[%s5 + $0x198] sm:$0xff] %v645
  %729 = vst [vmem:[%s5 + $0x1a0] sm:$0xff] %v648
  %730 = vst [vmem:[%s5 + $0x1a8] sm:$0xff] %v650
  %731 = vst [vmem:[%s5 + $0x1b0] sm:$0xff] %v653
  %732 = vst [vmem:[%s5 + $0x1b8] sm:$0xff] %v655
  %733 = vst [vmem:[%s5 + $0x1c0] sm:$0xff] %v658
  %734 = vst [vmem:[%s5 + $0x1c8] sm:$0xff] %v660
  %735 = vst [vmem:[%s5 + $0x1d0] sm:$0xff] %v663
  %736 = vst [vmem:[%s5 + $0x1d8] sm:$0xff] %v665
  %737 = vst [vmem:[%s5 + $0x1e0] sm:$0xff] %v668
  %738 = vst [vmem:[%s5 + $0x1e8] sm:$0xff] %v670
  %739 = vst [vmem:[%s5 + $0x1f0] sm:$0xff] %v673
  %740 = vst [vmem:[%s5 + $0x1f8] sm:$0xff] %v675
  // Predicated region
  $region22: #{bottleneck_block.9} parent=0 // pred_check
    _
  $region23: #{bottleneck_block.9} parent=0 // pred_check_branch
    %742 = sbr.rel (0) target = $region25
  $region24: #{bottleneck_block.9} parent=0 // pred_region
    _
  $region25: #{bottleneck_block.9} parent=0 // pred_fallthru
    _
  // Predicated region
  $region26: #{bottleneck_block.9} parent=0 // pred_check
    _
  $region27: #{bottleneck_block.9} parent=0 // pred_check_branch
    %744 = sbr.rel (0) target = $region29
  $region28: #{bottleneck_block.9} parent=0 // pred_region
    _
  $region29: #{bottleneck_block.9} parent=0 // pred_fallthru
    _

// kernel: bottleneck_block.7
$region0: #{bottleneck_block.7}
  #allocation0 [shape = 'u32[]', space=smem, size = 0x4, offset = 0x4, fixed_abs, tag = 'smem constant byte address 0x4 - core index']
  #allocation1 [shape = 'u32[72,128]{1,0:T(1,128)}', space=vmem, size = 0x9000, scoped, tag = 'internal scratch']
  #allocation2 [shape = 'f32[18,18,128]{2,1,0:T(8,128)}', space=vmem, size = 0x36000, scoped, tag = 'scratch operand']
  %s0 = inlined_call_operand.vmem [shape: bf16[2,16,16,128], index: 0, kind: input, shape index: {}]
  %s1 = inlined_call_operand.vmem [shape: f32[1,128], index: 1, kind: input, shape index: {}]
  %s2 = inlined_call_operand.vmem [shape: f32[1,128], index: 2, kind: input, shape index: {}]
  %s3 = inlined_call_operand.vmem [shape: bf16[3,384,128], index: 3, kind: input, shape index: {}]
  %s4 = inlined_call_operand.vmem [shape: bf16[2,16,16,128], index: 4, kind: output, shape index: {0}]
  %s5 = inlined_call_operand.vmem [shape: f32[2,1,128], index: 5, kind: output, shape index: {1}]
  %s6 = inlined_call_operand.vmem [shape: f32[2,1,128], index: 6, kind: output, shape index: {2}]
  %7 = xla_tuple %s4, %s5, %s6
  %s8 = sld [smem:[#allocation0]]
  $region65: #{bottleneck_block.7} parent=0
    _
  %s10 = ssub.s32 1, %s8
  %s11 = scalar_select 0, %s10, %s8
  loop: start=0, step=1, limit=4
  $region2: #{bottleneck_block.7} parent=0 // loop_pre_header
    _
  $region3: #{bottleneck_block.7} parent=0 // loop_header
    %s13 = sphi 0, %s17
    %p14 = scmp.ge.s32.totalorder %s13, 4
    %s23 = sphi 0, %s25
    %s26 = sphi 0, %s23
    %s27 = sphi 0, %s26
    %s43 = sphi 0, %s27
    %s47 = sphi 0, %s47
    %s49 = sphi 0, %s47
    %s50 = sphi 0, %s49
    %s64 = sphi 0, %s50
    %s68 = sphi 0, %s68
    %s70 = sphi 0, %s68
    %s71 = sphi 0, %s70
    %s85 = sphi 0, %s71
    %s89 = sphi 0, %s89
    %s91 = sphi 0, %s89
    %s92 = sphi 0, %s91
    %s106 = sphi 0, %s92
    %s112 = sphi 0, %s114
    %s115 = sphi 0, %s112
    %s116 = sphi 0, %s115
    %s132 = sphi 0, %s116
    %s138 = sphi 0, %s140
    %s141 = sphi 0, %s138
    %s142 = sphi 0, %s141
    %s158 = sphi 0, %s142
    %s164 = sphi 0, %s166
    %s167 = sphi 0, %s164
    %s168 = sphi 0, %s167
    %s184 = sphi 0, %s168
  $region4: #{bottleneck_block.7} parent=0 // loop_header_branch
    %16 = sbr.rel (%p14) target = $region8
  $region5: #{bottleneck_block.7} parent=0 // loop_body
    %s18 = ssub.s32 %s13, 1
    %s19 = ssub.s32 %s13, 2
    %s20 = sadd.s32 %s13, 1
    %s21 = ssub.s32 %s13, %s20
    %p22 = scmp.eq.s32.totalorder %s21, 0
    %s24 = sadd.s32 %s23, 1
    %s25 = scalar_select %p22, %s23, %s24
    %p28 = pneg %p22
    %p29 = scmp.eq.s32.totalorder %s13, 1
    %p30 = por %p28, %p29
    %p31 = scmp.ne.s32.totalorder %s23, %s26
    %p32 = scmp.eq.s32.totalorder %s13, 0
    %p33 = por %p31, %p32
    %p34 = scmp.ne.s32.totalorder %s23, %s26
    %p35 = scmp.eq.s32.totalorder %s18, 1
    %p36 = por %p34, %p35
    %p37 = scmp.ne.s32.totalorder %s26, %s27
    %p38 = scmp.eq.s32.totalorder %s18, 0
    %p39 = por %p37, %p38
    %p40 = scmp.ne.s32.totalorder %s26, %s27
    %p41 = scmp.eq.s32.totalorder %s19, 1
    %p42 = por %p40, %p41
    %p44 = scmp.ne.s32.totalorder %s27, %s43
    %p45 = scmp.eq.s32.totalorder %s19, 0
    %p46 = por %p44, %p45
    %s48 = sadd.s32 %s47, 1
    %p51 = scmp.eq.s32.totalorder %s13, 1
    %p52 = scmp.ne.s32.totalorder %s47, %s49
    %p53 = scmp.eq.s32.totalorder %s13, 0
    %p54 = por %p52, %p53
    %p55 = scmp.ne.s32.totalorder %s47, %s49
    %p56 = scmp.eq.s32.totalorder %s18, 1
    %p57 = por %p55, %p56
    %p58 = scmp.ne.s32.totalorder %s49, %s50
    %p59 = scmp.eq.s32.totalorder %s18, 0
    %p60 = por %p58, %p59
    %p61 = scmp.ne.s32.totalorder %s49, %s50
    %p62 = scmp.eq.s32.totalorder %s19, 1
    %p63 = por %p61, %p62
    %p65 = scmp.ne.s32.totalorder %s50, %s64
    %p66 = scmp.eq.s32.totalorder %s19, 0
    %p67 = por %p65, %p66
    %s69 = sadd.s32 %s68, 1
    %p72 = scmp.eq.s32.totalorder %s13, 1
    %p73 = scmp.ne.s32.totalorder %s68, %s70
    %p74 = scmp.eq.s32.totalorder %s13, 0
    %p75 = por %p73, %p74
    %p76 = scmp.ne.s32.totalorder %s68, %s70
    %p77 = scmp.eq.s32.totalorder %s18, 1
    %p78 = por %p76, %p77
    %p79 = scmp.ne.s32.totalorder %s70, %s71
    %p80 = scmp.eq.s32.totalorder %s18, 0
    %p81 = por %p79, %p80
    %p82 = scmp.ne.s32.totalorder %s70, %s71
    %p83 = scmp.eq.s32.totalorder %s19, 1
    %p84 = por %p82, %p83
    %p86 = scmp.ne.s32.totalorder %s71, %s85
    %p87 = scmp.eq.s32.totalorder %s19, 0
    %p88 = por %p86, %p87
    %s90 = sadd.s32 %s89, 1
    %p93 = scmp.eq.s32.totalorder %s13, 1
    %p94 = scmp.ne.s32.totalorder %s89, %s91
    %p95 = scmp.eq.s32.totalorder %s13, 0
    %p96 = por %p94, %p95
    %p97 = scmp.ne.s32.totalorder %s89, %s91
    %p98 = scmp.eq.s32.totalorder %s18, 1
    %p99 = por %p97, %p98
    %p100 = scmp.ne.s32.totalorder %s91, %s92
    %p101 = scmp.eq.s32.totalorder %s18, 0
    %p102 = por %p100, %p101
    %p103 = scmp.ne.s32.totalorder %s91, %s92
    %p104 = scmp.eq.s32.totalorder %s19, 1
    %p105 = por %p103, %p104
    %p107 = scmp.ne.s32.totalorder %s92, %s106
    %p108 = scmp.eq.s32.totalorder %s19, 0
    %p109 = por %p107, %p108
    %s110 = ssub.s32 %s13, %s20
    %p111 = scmp.eq.s32.totalorder %s110, 0
    %s113 = sadd.s32 %s112, 1
    %s114 = scalar_select %p111, %s112, %s113
    %p117 = pneg %p111
    %p118 = scmp.eq.s32.totalorder %s13, 1
    %p119 = por %p117, %p118
    %p120 = scmp.ne.s32.totalorder %s112, %s115
    %p121 = scmp.eq.s32.totalorder %s13, 0
    %p122 = por %p120, %p121
    %p123 = scmp.ne.s32.totalorder %s112, %s115
    %p124 = scmp.eq.s32.totalorder %s18, 1
    %p125 = por %p123, %p124
    %p126 = scmp.ne.s32.totalorder %s115, %s116
    %p127 = scmp.eq.s32.totalorder %s18, 0
    %p128 = por %p126, %p127
    %p129 = scmp.ne.s32.totalorder %s115, %s116
    %p130 = scmp.eq.s32.totalorder %s19, 1
    %p131 = por %p129, %p130
    %p133 = scmp.ne.s32.totalorder %s116, %s132
    %p134 = scmp.eq.s32.totalorder %s19, 0
    %p135 = por %p133, %p134
    %s136 = ssub.s32 %s13, %s20
    %p137 = scmp.eq.s32.totalorder %s136, 0
    %s139 = sadd.s32 %s138, 1
    %s140 = scalar_select %p137, %s138, %s139
    %p143 = pneg %p137
    %p144 = scmp.eq.s32.totalorder %s13, 1
    %p145 = por %p143, %p144
    %p146 = scmp.ne.s32.totalorder %s138, %s141
    %p147 = scmp.eq.s32.totalorder %s13, 0
    %p148 = por %p146, %p147
    %p149 = scmp.ne.s32.totalorder %s138, %s141
    %p150 = scmp.eq.s32.totalorder %s18, 1
    %p151 = por %p149, %p150
    %p152 = scmp.ne.s32.totalorder %s141, %s142
    %p153 = scmp.eq.s32.totalorder %s18, 0
    %p154 = por %p152, %p153
    %p155 = scmp.ne.s32.totalorder %s141, %s142
    %p156 = scmp.eq.s32.totalorder %s19, 1
    %p157 = por %p155, %p156
    %p159 = scmp.ne.s32.totalorder %s142, %s158
    %p160 = scmp.eq.s32.totalorder %s19, 0
    %p161 = por %p159, %p160
    %s162 = ssub.s32 %s13, %s20
    %p163 = scmp.eq.s32.totalorder %s162, 0
    %s165 = sadd.s32 %s164, 1
    %s166 = scalar_select %p163, %s164, %s165
    %p169 = pneg %p163
    %p170 = scmp.eq.s32.totalorder %s13, 1
    %p171 = por %p169, %p170
    %p172 = scmp.ne.s32.totalorder %s164, %s167
    %p173 = scmp.eq.s32.totalorder %s13, 0
    %p174 = por %p172, %p173
    %p175 = scmp.ne.s32.totalorder %s164, %s167
    %p176 = scmp.eq.s32.totalorder %s18, 1
    %p177 = por %p175, %p176
    %p178 = scmp.ne.s32.totalorder %s167, %s168
    %p179 = scmp.eq.s32.totalorder %s18, 0
    %p180 = por %p178, %p179
    %p181 = scmp.ne.s32.totalorder %s167, %s168
    %p182 = scmp.eq.s32.totalorder %s19, 1
    %p183 = por %p181, %p182
    %p185 = scmp.ne.s32.totalorder %s168, %s184
    %p186 = scmp.eq.s32.totalorder %s19, 0
    %p187 = por %p185, %p186
    %p188 = scmp.le.s32.totalorder 1, %s13
    %p189 = scmp.lt.s32.totalorder %s13, 3
    %p190 = pnand %p188, %p189
    %p191 = pneg %p190
    // Predicated region
    $region9: #{bottleneck_block.7} parent=5 // pred_check
      _
    $region10: #{bottleneck_block.7} parent=5 // pred_check_branch
      %193 = sbr.rel (%p190) target = $region12
    $region11: #{bottleneck_block.7} parent=5 // pred_region
      %s194 = ssub.s32 %s13, 1
      // Predicated region
      $region13: #{bottleneck_block.7} parent=11 // pred_check
        %p195 = pneg %p60
      $region14: #{bottleneck_block.7} parent=11 // pred_check_branch
        %197 = sbr.rel (%p195) target = $region16
      $region15: #{bottleneck_block.7} parent=11 // pred_region
        _
      $region16: #{bottleneck_block.7} parent=11 // pred_fallthru
        _
      // Predicated region
      $region17: #{bottleneck_block.7} parent=11 // pred_check
        %p198 = pneg %p81
      $region18: #{bottleneck_block.7} parent=11 // pred_check_branch
        %200 = sbr.rel (%p198) target = $region20
      $region19: #{bottleneck_block.7} parent=11 // pred_region
        _
      $region20: #{bottleneck_block.7} parent=11 // pred_fallthru
        _
      // Predicated region
      $region21: #{bottleneck_block.7} parent=11 // pred_check
        %p201 = pneg %p102
      $region22: #{bottleneck_block.7} parent=11 // pred_check_branch
        %203 = sbr.rel (%p201) target = $region24
      $region23: #{bottleneck_block.7} parent=11 // pred_region
        _
      $region24: #{bottleneck_block.7} parent=11 // pred_fallthru
        _
    $region12: #{bottleneck_block.7} parent=5 // pred_fallthru
      _
    %p204 = scmp.lt.s32.totalorder %s13, 2
    // Predicated region
    $region25: #{bottleneck_block.7} parent=5 // pred_check
      %p205 = pneg %p204
    $region26: #{bottleneck_block.7} parent=5 // pred_check_branch
      %207 = sbr.rel (%p205) target = $region28
    $region27: #{bottleneck_block.7} parent=5 // pred_region
      // Predicated region
      $region29: #{bottleneck_block.7} parent=27 // pred_check
        %p208 = pneg %p33
      $region30: #{bottleneck_block.7} parent=27 // pred_check_branch
        %210 = sbr.rel (%p208) target = $region32
      $region31: #{bottleneck_block.7} parent=27 // pred_region
        %p211 = scmp.lt.s32.totalorder %s13, 1
        %s212 = scalar_select %p211, %s13, 1
        %s213 = smul.addr %s212, 32
        %s214 = smul.addr %s213, 4
        %s215 = scalar_lea.vmem %s0, %s214
      $region32: #{bottleneck_block.7} parent=27 // pred_fallthru
        _
    $region28: #{bottleneck_block.7} parent=5 // pred_fallthru
      _
    %p216 = scmp.le.s32.totalorder 1, %s13
    %p217 = scmp.lt.s32.totalorder %s13, 3
    %p218 = pnand %p216, %p217
    %p219 = pneg %p218
    // Predicated region
    $region33: #{bottleneck_block.7} parent=5 // pred_check
      _
    $region34: #{bottleneck_block.7} parent=5 // pred_check_branch
      %221 = sbr.rel (%p218) target = $region36
    $region35: #{bottleneck_block.7} parent=5 // pred_region
      %s222 = ssub.s32 %s13, 1
      %p223 = scmp.lt.s32.totalorder %s18, 1
      %s224 = scalar_select %p223, %s18, 1
      %s225 = smul.addr %s224, 32
      %s226 = smul.addr %s225, 4
      %s227 = scalar_lea.vmem %s0, %s226
      %p228 = pneg %p39
      %p229 = pneg %p36
      %p230 = pneg %p60
      %p231 = pneg %p57
      %p232 = pneg %p81
      %p233 = pneg %p78
      %p234 = pneg %p102
      %p235 = pneg %p99
      %p236 = pneg %p128
      %p237 = pneg %p125
      %p238 = scmp.lt.s32.totalorder %s18, 1
      %s239 = scalar_select %p238, %s18, 1
      %s240 = smul.addr %s239, 32
      %s241 = smul.addr %s240, 4
      %s242 = scalar_lea.vmem %s4, %s241
      %p243 = pneg %p154
      %p244 = pneg %p151
      %p245 = scmp.lt.s32.totalorder %s18, 1
      %s246 = scalar_select %p245, %s18, 1
      %s247 = scalar_lea.vmem %s5, %s246
      %p248 = pneg %p180
      %p249 = pneg %p177
      %p250 = scmp.lt.s32.totalorder %s18, 1
      %s251 = scalar_select %p250, %s18, 1
      %s252 = scalar_lea.vmem %s6, %s251
      %p253 = scmp.lt.s32.totalorder %s18, 1
      %s254 = scalar_select %p253, %s18, 1
      %s255 = smul.addr %s254, 32
      %s256 = smul.addr %s255, 4
      %s257 = scalar_lea.vmem %s0, %s256
      %p258 = scmp.lt.s32.totalorder %s18, 1
      %s259 = scalar_select %p258, %s18, 1
      %s260 = smul.addr %s259, 32
      %s261 = smul.addr %s260, 4
      %s262 = scalar_lea.vmem %s4, %s261
      %p263 = scmp.lt.s32.totalorder %s18, 1
      %s264 = scalar_select %p263, %s18, 1
      %s265 = scalar_lea.vmem %s5, %s264
      %p266 = scmp.lt.s32.totalorder %s18, 1
      %s267 = scalar_select %p266, %s18, 1
      %s268 = scalar_lea.vmem %s6, %s267
      %v269 = vld [vmem:[%s1] sm:$0x1]
      %v270 = vld [vmem:[%s2] sm:$0x1]
      %v271 = vld [vmem:[%s257] sm:$0xf]
      %v272 = vld [vmem:[%s257 + $0x4] sm:$0xf]
      %v273 = vld [vmem:[%s257 + $0x8] sm:$0xf]
      %v274 = vld [vmem:[%s257 + $0xc] sm:$0xf]
      %v275 = vld [vmem:[%s257 + $0x10] sm:$0xf]
      %v276 = vld [vmem:[%s257 + $0x14] sm:$0xf]
      %v277 = vld [vmem:[%s257 + $0x18] sm:$0xf]
      %v278 = vld [vmem:[%s257 + $0x1c] sm:$0xf]
      %v279 = vld [vmem:[%s257 + $0x20] sm:$0xf]
      %v280 = vld [vmem:[%s257 + $0x24] sm:$0xf]
      %v281 = vld [vmem:[%s257 + $0x28] sm:$0xf]
      %v282 = vld [vmem:[%s257 + $0x2c] sm:$0xf]
      %v283 = vld [vmem:[%s257 + $0x30] sm:$0xf]
      %v284 = vld [vmem:[%s257 + $0x34] sm:$0xf]
      %v285 = vld [vmem:[%s257 + $0x38] sm:$0xf]
      %v286 = vld [vmem:[%s257 + $0x3c] sm:$0xf]
      %v287 = vld [vmem:[%s257 + $0x40] sm:$0xf]
      %v288 = vld [vmem:[%s257 + $0x44] sm:$0xf]
      %v289 = vld [vmem:[%s257 + $0x48] sm:$0xf]
      %v290 = vld [vmem:[%s257 + $0x4c] sm:$0xf]
      %v291 = vld [vmem:[%s257 + $0x50] sm:$0xf]
      %v292 = vld [vmem:[%s257 + $0x54] sm:$0xf]
      %v293 = vld [vmem:[%s257 + $0x58] sm:$0xf]
      %v294 = vld [vmem:[%s257 + $0x5c] sm:$0xf]
      %v295 = vld [vmem:[%s257 + $0x60] sm:$0xf]
      %v296 = vld [vmem:[%s257 + $0x64] sm:$0xf]
      %v297 = vld [vmem:[%s257 + $0x68] sm:$0xf]
      %v298 = vld [vmem:[%s257 + $0x6c] sm:$0xf]
      %v299 = vld [vmem:[%s257 + $0x70] sm:$0xf]
      %v300 = vld [vmem:[%s257 + $0x74] sm:$0xf]
      %v301 = vld [vmem:[%s257 + $0x78] sm:$0xf]
      %v302 = vld [vmem:[%s257 + $0x7c] sm:$0xf]
      %v303 = vunpack.c.l.bf16 %v271
      %v304 = vunpack.c.l.bf16 %v272
      %v305 = vunpack.c.l.bf16 %v273
      %v306 = vunpack.c.l.bf16 %v274
      %v307 = vunpack.c.l.bf16 %v275
      %v308 = vunpack.c.l.bf16 %v276
      %v309 = vunpack.c.l.bf16 %v277
      %v310 = vunpack.c.l.bf16 %v278
      %v311 = vunpack.c.l.bf16 %v279
      %v312 = vunpack.c.l.bf16 %v280
      %v313 = vunpack.c.l.bf16 %v281
      %v314 = vunpack.c.l.bf16 %v282
      %v315 = vunpack.c.l.bf16 %v283
      %v316 = vunpack.c.l.bf16 %v284
      %v317 = vunpack.c.l.bf16 %v285
      %v318 = vunpack.c.l.bf16 %v286
      %v319 = vunpack.c.l.bf16 %v287
      %v320 = vunpack.c.l.bf16 %v288
      %v321 = vunpack.c.l.bf16 %v289
      %v322 = vunpack.c.l.bf16 %v290
      %v323 = vunpack.c.l.bf16 %v291
      %v324 = vunpack.c.l.bf16 %v292
      %v325 = vunpack.c.l.bf16 %v293
      %v326 = vunpack.c.l.bf16 %v294
      %v327 = vunpack.c.l.bf16 %v295
      %v328 = vunpack.c.l.bf16 %v296
      %v329 = vunpack.c.l.bf16 %v297
      %v330 = vunpack.c.l.bf16 %v298
      %v331 = vunpack.c.l.bf16 %v299
      %v332 = vunpack.c.l.bf16 %v300
      %v333 = vunpack.c.l.bf16 %v301
      %v334 = vunpack.c.l.bf16 %v302
      %v336 = vperm.slane %v269, 0
      %v338 = vmul.f32 %v303, %v336
      %v339 = vmul.f32 %v304, %v336
      %v340 = vmul.f32 %v305, %v336
      %v341 = vmul.f32 %v306, %v336
      %v342 = vmul.f32 %v307, %v336
      %v343 = vmul.f32 %v308, %v336
      %v344 = vmul.f32 %v309, %v336
      %v345 = vmul.f32 %v310, %v336
      %v346 = vmul.f32 %v311, %v336
      %v347 = vmul.f32 %v312, %v336
      %v348 = vmul.f32 %v313, %v336
      %v349 = vmul.f32 %v314, %v336
      %v350 = vmul.f32 %v315, %v336
      %v351 = vmul.f32 %v316, %v336
      %v352 = vmul.f32 %v317, %v336
      %v353 = vmul.f32 %v318, %v336
      %v354 = vmul.f32 %v319, %v336
      %v355 = vmul.f32 %v320, %v336
      %v356 = vmul.f32 %v321, %v336
      %v357 = vmul.f32 %v322, %v336
      %v358 = vmul.f32 %v323, %v336
      %v359 = vmul.f32 %v324, %v336
      %v360 = vmul.f32 %v325, %v336
      %v361 = vmul.f32 %v326, %v336
      %v362 = vmul.f32 %v327, %v336
      %v363 = vmul.f32 %v328, %v336
      %v364 = vmul.f32 %v329, %v336
      %v365 = vmul.f32 %v330, %v336
      %v366 = vmul.f32 %v331, %v336
      %v367 = vmul.f32 %v332, %v336
      %v368 = vmul.f32 %v333, %v336
      %v369 = vmul.f32 %v334, %v336
      %v371 = vperm.slane %v270, 0
      %v373 = vadd.f32 %v338, %v371
      %v374 = vadd.f32 %v339, %v371
      %v375 = vadd.f32 %v340, %v371
      %v376 = vadd.f32 %v341, %v371
      %v377 = vadd.f32 %v342, %v371
      %v378 = vadd.f32 %v343, %v371
      %v379 = vadd.f32 %v344, %v371
      %v380 = vadd.f32 %v345, %v371
      %v381 = vadd.f32 %v346, %v371
      %v382 = vadd.f32 %v347, %v371
      %v383 = vadd.f32 %v348, %v371
      %v384 = vadd.f32 %v349, %v371
      %v385 = vadd.f32 %v350, %v371
      %v386 = vadd.f32 %v351, %v371
      %v387 = vadd.f32 %v352, %v371
      %v388 = vadd.f32 %v353, %v371
      %v389 = vadd.f32 %v354, %v371
      %v390 = vadd.f32 %v355, %v371
      %v391 = vadd.f32 %v356, %v371
      %v392 = vadd.f32 %v357, %v371
      %v393 = vadd.f32 %v358, %v371
      %v394 = vadd.f32 %v359, %v371
      %v395 = vadd.f32 %v360, %v371
      %v396 = vadd.f32 %v361, %v371
      %v397 = vadd.f32 %v362, %v371
      %v398 = vadd.f32 %v363, %v371
      %v399 = vadd.f32 %v364, %v371
      %v400 = vadd.f32 %v365, %v371
      %v401 = vadd.f32 %v366, %v371
      %v402 = vadd.f32 %v367, %v371
      %v403 = vadd.f32 %v368, %v371
      %v404 = vadd.f32 %v369, %v371
      %v405 = vmax.f32 %v373, 0.0
      %v406 = vmax.f32 %v374, 0.0
      %v407 = vmax.f32 %v375, 0.0
      %v408 = vmax.f32 %v376, 0.0
      %v409 = vmax.f32 %v377, 0.0
      %v410 = vmax.f32 %v378, 0.0
      %v411 = vmax.f32 %v379, 0.0
      %v412 = vmax.f32 %v380, 0.0
      %v413 = vmax.f32 %v381, 0.0
      %v414 = vmax.f32 %v382, 0.0
      %v415 = vmax.f32 %v383, 0.0
      %v416 = vmax.f32 %v384, 0.0
      %v417 = vmax.f32 %v385, 0.0
      %v418 = vmax.f32 %v386, 0.0
      %v419 = vmax.f32 %v387, 0.0
      %v420 = vmax.f32 %v388, 0.0
      %v421 = vmax.f32 %v389, 0.0
      %v422 = vmax.f32 %v390, 0.0
      %v423 = vmax.f32 %v391, 0.0
      %v424 = vmax.f32 %v392, 0.0
      %v425 = vmax.f32 %v393, 0.0
      %v426 = vmax.f32 %v394, 0.0
      %v427 = vmax.f32 %v395, 0.0
      %v428 = vmax.f32 %v396, 0.0
      %v429 = vmax.f32 %v397, 0.0
      %v430 = vmax.f32 %v398, 0.0
      %v431 = vmax.f32 %v399, 0.0
      %v432 = vmax.f32 %v400, 0.0
      %v433 = vmax.f32 %v401, 0.0
      %v434 = vmax.f32 %v402, 0.0
      %v435 = vmax.f32 %v403, 0.0
      %v436 = vmax.f32 %v404, 0.0
      %437 = vst [vmem:[#allocation2] sm:$0xff] 0.0
      %438 = vst [vmem:[#allocation2 + $0x8] sm:$0xff] 0.0
      %439 = vst [vmem:[#allocation2 + $0x10] sm:$0x3] 0.0
      %s440 = scalar_lea.vmem [#allocation2], 408
      %441 = vst [vmem:[%s440] sm:$0xff] 0.0
      %442 = vst [vmem:[%s440 + $0x8] sm:$0xff] 0.0
      %443 = vst [vmem:[%s440 + $0x10] sm:$0x3] 0.0
      %s444 = scalar_lea.vmem [#allocation2], 24
      %445 = vst [vmem:[%s444] sm:$0x1] 0.0
      %446 = vst [vmem:[%s444 + $0x18] sm:$0x1] 0.0
      %447 = vst [vmem:[%s444 + $0x30] sm:$0x1] 0.0
      %448 = vst [vmem:[%s444 + $0x48] sm:$0x1] 0.0
      %449 = vst [vmem:[%s444 + $0x60] sm:$0x1] 0.0
      %450 = vst [vmem:[%s444 + $0x78] sm:$0x1] 0.0
      %451 = vst [vmem:[%s444 + $0x90] sm:$0x1] 0.0
      %452 = vst [vmem:[%s444 + $0xa8] sm:$0x1] 0.0
      %453 = vst [vmem:[%s444 + $0xc0] sm:$0x1] 0.0
      %454 = vst [vmem:[%s444 + $0xd8] sm:$0x1] 0.0
      %455 = vst [vmem:[%s444 + $0xf0] sm:$0x1] 0.0
      %456 = vst [vmem:[%s444 + $0x108] sm:$0x1] 0.0
      %457 = vst [vmem:[%s444 + $0x120] sm:$0x1] 0.0
      %458 = vst [vmem:[%s444 + $0x138] sm:$0x1] 0.0
      %459 = vst [vmem:[%s444 + $0x150] sm:$0x1] 0.0
      %460 = vst [vmem:[%s444 + $0x168] sm:$0x1] 0.0
      %461 = vst [vmem:[%s444 + $0x11] sm:$0x1] 0.0
      %462 = vst [vmem:[%s444 + $0x29] sm:$0x1] 0.0
      %463 = vst [vmem:[%s444 + $0x41] sm:$0x1] 0.0
      %464 = vst [vmem:[%s444 + $0x59] sm:$0x1] 0.0
      %465 = vst [vmem:[%s444 + $0x71] sm:$0x1] 0.0
      %466 = vst [vmem:[%s444 + $0x89] sm:$0x1] 0.0
      %467 = vst [vmem:[%s444 + $0xa1] sm:$0x1] 0.0
      %468 = vst [vmem:[%s444 + $0xb9] sm:$0x1] 0.0
      %469 = vst [vmem:[%s444 + $0xd1] sm:$0x1] 0.0
      %470 = vst [vmem:[%s444 + $0xe9] sm:$0x1] 0.0
      %471 = vst [vmem:[%s444 + $0x101] sm:$0x1] 0.0
      %472 = vst [vmem:[%s444 + $0x119] sm:$0x1] 0.0
      %473 = vst [vmem:[%s444 + $0x131] sm:$0x1] 0.0
      %474 = vst [vmem:[%s444 + $0x149] sm:$0x1] 0.0
      %475 = vst [vmem:[%s444 + $0x161] sm:$0x1] 0.0
      %476 = vst [vmem:[%s444 + $0x179] sm:$0x1] 0.0
      %477 = vst [vmem:[%s444 + $0x1] sm:$0xff] %v405
      %478 = vst [vmem:[%s444 + $0x9] sm:$0xff] %v406
      %479 = vst [vmem:[%s444 + $0x19] sm:$0xff] %v407
      %480 = vst [vmem:[%s444 + $0x21] sm:$0xff] %v408
      %481 = vst [vmem:[%s444 + $0x31] sm:$0xff] %v409
      %482 = vst [vmem:[%s444 + $0x39] sm:$0xff] %v410
      %483 = vst [vmem:[%s444 + $0x49] sm:$0xff] %v411
      %484 = vst [vmem:[%s444 + $0x51] sm:$0xff] %v412
      %485 = vst [vmem:[%s444 + $0x61] sm:$0xff] %v413
      %486 = vst [vmem:[%s444 + $0x69] sm:$0xff] %v414
      %487 = vst [vmem:[%s444 + $0x79] sm:$0xff] %v415
      %488 = vst [vmem:[%s444 + $0x81] sm:$0xff] %v416
      %489 = vst [vmem:[%s444 + $0x91] sm:$0xff] %v417
      %490 = vst [vmem:[%s444 + $0x99] sm:$0xff] %v418
      %491 = vst [vmem:[%s444 + $0xa9] sm:$0xff] %v419
      %492 = vst [vmem:[%s444 + $0xb1] sm:$0xff] %v420
      %493 = vst [vmem:[%s444 + $0xc1] sm:$0xff] %v421
      %494 = vst [vmem:[%s444 + $0xc9] sm:$0xff] %v422
      %495 = vst [vmem:[%s444 + $0xd9] sm:$0xff] %v423
      %496 = vst [vmem:[%s444 + $0xe1] sm:$0xff] %v424
      %497 = vst [vmem:[%s444 + $0xf1] sm:$0xff] %v425
      %498 = vst [vmem:[%s444 + $0xf9] sm:$0xff] %v426
      %499 = vst [vmem:[%s444 + $0x109] sm:$0xff] %v427
      %500 = vst [vmem:[%s444 + $0x111] sm:$0xff] %v428
      %501 = vst [vmem:[%s444 + $0x121] sm:$0xff] %v429
      %502 = vst [vmem:[%s444 + $0x129] sm:$0xff] %v430
      %503 = vst [vmem:[%s444 + $0x139] sm:$0xff] %v431
      %504 = vst [vmem:[%s444 + $0x141] sm:$0xff] %v432
      %505 = vst [vmem:[%s444 + $0x151] sm:$0xff] %v433
      %506 = vst [vmem:[%s444 + $0x159] sm:$0xff] %v434
      %507 = vst [vmem:[%s444 + $0x169] sm:$0xff] %v435
      %508 = vst [vmem:[%s444 + $0x171] sm:$0xff] %v436
      %v509 = vld [vmem:[#allocation2] sm:$0xff]
      %v510 = vld [vmem:[#allocation2 + $0x8] sm:$0xff]
      %v511 = vld [vmem:[#allocation2 + $0x18] sm:$0xff]
      %v512 = vld [vmem:[#allocation2 + $0x20] sm:$0xff]
      %v513 = vld [vmem:[#allocation2 + $0x30] sm:$0xff]
      %v514 = vld [vmem:[#allocation2 + $0x38] sm:$0xff]
      %v515 = vld [vmem:[#allocation2 + $0x48] sm:$0xff]
      %v516 = vld [vmem:[#allocation2 + $0x50] sm:$0xff]
      %v517 = vld [vmem:[#allocation2 + $0x60] sm:$0xff]
      %v518 = vld [vmem:[#allocation2 + $0x68] sm:$0xff]
      %v519 = vld [vmem:[#allocation2 + $0x78] sm:$0xff]
      %v520 = vld [vmem:[#allocation2 + $0x80] sm:$0xff]
      %v521 = vld [vmem:[#allocation2 + $0x90] sm:$0xff]
      %v522 = vld [vmem:[#allocation2 + $0x98] sm:$0xff]
      %v523 = vld [vmem:[#allocation2 + $0xa8] sm:$0xff]
      %v524 = vld [vmem:[#allocation2 + $0xb0] sm:$0xff]
      %v525 = vld [vmem:[#allocation2 + $0xc0] sm:$0xff]
      %v526 = vld [vmem:[#allocation2 + $0xc8] sm:$0xff]
      %v527 = vld [vmem:[#allocation2 + $0xd8] sm:$0xff]
      %v528 = vld [vmem:[#allocation2 + $0xe0] sm:$0xff]
      %v529 = vld [vmem:[#allocation2 + $0xf0] sm:$0xff]
      %v530 = vld [vmem:[#allocation2 + $0xf8] sm:$0xff]
      %v531 = vld [vmem:[#allocation2 + $0x108] sm:$0xff]
      %v532 = vld [vmem:[#allocation2 + $0x110] sm:$0xff]
      %v533 = vld [vmem:[#allocation2 + $0x120] sm:$0xff]
      %v534 = vld [vmem:[#allocation2 + $0x128] sm:$0xff]
      %v535 = vld [vmem:[#allocation2 + $0x138] sm:$0xff]
      %v536 = vld [vmem:[#allocation2 + $0x140] sm:$0xff]
      %v537 = vld [vmem:[#allocation2 + $0x150] sm:$0xff]
      %v538 = vld [vmem:[#allocation2 + $0x158] sm:$0xff]
      %v539 = vld [vmem:[#allocation2 + $0x168] sm:$0xff]
      %v540 = vld [vmem:[#allocation2 + $0x170] sm:$0xff]
      %v541 = vld [vmem:[#allocation2 + $0x1] sm:$0xff]
      %v542 = vld [vmem:[#allocation2 + $0x9] sm:$0xff]
      %v543 = vld [vmem:[#allocation2 + $0x19] sm:$0xff]
      %v544 = vld [vmem:[#allocation2 + $0x21] sm:$0xff]
      %v545 = vld [vmem:[#allocation2 + $0x31] sm:$0xff]
      %v546 = vld [vmem:[#allocation2 + $0x39] sm:$0xff]
      %v547 = vld [vmem:[#allocation2 + $0x49] sm:$0xff]
      %v548 = vld [vmem:[#allocation2 + $0x51] sm:$0xff]
      %v549 = vld [vmem:[#allocation2 + $0x61] sm:$0xff]
      %v550 = vld [vmem:[#allocation2 + $0x69] sm:$0xff]
      %v551 = vld [vmem:[#allocation2 + $0x79] sm:$0xff]
      %v552 = vld [vmem:[#allocation2 + $0x81] sm:$0xff]
      %v553 = vld [vmem:[#allocation2 + $0x91] sm:$0xff]
      %v554 = vld [vmem:[#allocation2 + $0x99] sm:$0xff]
      %v555 = vld [vmem:[#allocation2 + $0xa9] sm:$0xff]
      %v556 = vld [vmem:[#allocation2 + $0xb1] sm:$0xff]
      %v557 = vld [vmem:[#allocation2 + $0xc1] sm:$0xff]
      %v558 = vld [vmem:[#allocation2 + $0xc9] sm:$0xff]
      %v559 = vld [vmem:[#allocation2 + $0xd9] sm:$0xff]
      %v560 = vld [vmem:[#allocation2 + $0xe1] sm:$0xff]
      %v561 = vld [vmem:[#allocation2 + $0xf1] sm:$0xff]
      %v562 = vld [vmem:[#allocation2 + $0xf9] sm:$0xff]
      %v563 = vld [vmem:[#allocation2 + $0x109] sm:$0xff]
      %v564 = vld [vmem:[#allocation2 + $0x111] sm:$0xff]
      %v565 = vld [vmem:[#allocation2 + $0x121] sm:$0xff]
      %v566 = vld [vmem:[#allocation2 + $0x129] sm:$0xff]
      %v567 = vld [vmem:[#allocation2 + $0x139] sm:$0xff]
      %v568 = vld [vmem:[#allocation2 + $0x141] sm:$0xff]
      %v569 = vld [vmem:[#allocation2 + $0x151] sm:$0xff]
      %v570 = vld [vmem:[#allocation2 + $0x159] sm:$0xff]
      %v571 = vld [vmem:[#allocation2 + $0x169] sm:$0xff]
      %v572 = vld [vmem:[#allocation2 + $0x171] sm:$0xff]
      %v573 = vld [vmem:[#allocation2 + $0x2] sm:$0xff]
      %v574 = vld [vmem:[#allocation2 + $0xa] sm:$0xff]
      %v575 = vld [vmem:[#allocation2 + $0x1a] sm:$0xff]
      %v576 = vld [vmem:[#allocation2 + $0x22] sm:$0xff]
      %v577 = vld [vmem:[#allocation2 + $0x32] sm:$0xff]
      %v578 = vld [vmem:[#allocation2 + $0x3a] sm:$0xff]
      %v579 = vld [vmem:[#allocation2 + $0x4a] sm:$0xff]
      %v580 = vld [vmem:[#allocation2 + $0x52] sm:$0xff]
      %v581 = vld [vmem:[#allocation2 + $0x62] sm:$0xff]
      %v582 = vld [vmem:[#allocation2 + $0x6a] sm:$0xff]
      %v583 = vld [vmem:[#allocation2 + $0x7a] sm:$0xff]
      %v584 = vld [vmem:[#allocation2 + $0x82] sm:$0xff]
      %v585 = vld [vmem:[#allocation2 + $0x92] sm:$0xff]
      %v586 = vld [vmem:[#allocation2 + $0x9a] sm:$0xff]
      %v587 = vld [vmem:[#allocation2 + $0xaa] sm:$0xff]
      %v588 = vld [vmem:[#allocation2 + $0xb2] sm:$0xff]
      %v589 = vld [vmem:[#allocation2 + $0xc2] sm:$0xff]
      %v590 = vld [vmem:[#allocation2 + $0xca] sm:$0xff]
      %v591 = vld [vmem:[#allocation2 + $0xda] sm:$0xff]
      %v592 = vld [vmem:[#allocation2 + $0xe2] sm:$0xff]
      %v593 = vld [vmem:[#allocation2 + $0xf2] sm:$0xff]
      %v594 = vld [vmem:[#allocation2 + $0xfa] sm:$0xff]
      %v595 = vld [vmem:[#allocation2 + $0x10a] sm:$0xff]
      %v596 = vld [vmem:[#allocation2 + $0x112] sm:$0xff]
      %v597 = vld [vmem:[#allocation2 + $0x122] sm:$0xff]
      %v598 = vld [vmem:[#allocation2 + $0x12a] sm:$0xff]
      %v599 = vld [vmem:[#allocation2 + $0x13a] sm:$0xff]
      %v600 = vld [vmem:[#allocation2 + $0x142] sm:$0xff]
      %v601 = vld [vmem:[#allocation2 + $0x152] sm:$0xff]
      %v602 = vld [vmem:[#allocation2 + $0x15a] sm:$0xff]
      %v603 = vld [vmem:[#allocation2 + $0x16a] sm:$0xff]
      %v604 = vld [vmem:[#allocation2 + $0x172] sm:$0xff]
      %v605 = vpack.c.bf16 %v510, %v509
      %v606 = vpack.c.bf16 %v542, %v541
      %v607 = vpack.c.bf16 %v574, %v573
      %v608 = vpack.c.bf16 %v512, %v511
      %v609 = vpack.c.bf16 %v544, %v543
      %v610 = vpack.c.bf16 %v576, %v575
      %v611 = vpack.c.bf16 %v514, %v513
      %v612 = vpack.c.bf16 %v546, %v545
      %v613 = vpack.c.bf16 %v578, %v577
      %v614 = vpack.c.bf16 %v516, %v515
      %v615 = vpack.c.bf16 %v548, %v547
      %v616 = vpack.c.bf16 %v580, %v579
      %v617 = vpack.c.bf16 %v518, %v517
      %v618 = vpack.c.bf16 %v550, %v549
      %v619 = vpack.c.bf16 %v582, %v581
      %v620 = vpack.c.bf16 %v520, %v519
      %v621 = vpack.c.bf16 %v552, %v551
      %v622 = vpack.c.bf16 %v584, %v583
      %v623 = vpack.c.bf16 %v522, %v521
      %v624 = vpack.c.bf16 %v554, %v553
      %v625 = vpack.c.bf16 %v586, %v585
      %v626 = vpack.c.bf16 %v524, %v523
      %v627 = vpack.c.bf16 %v556, %v555
      %v628 = vpack.c.bf16 %v588, %v587
      %v629 = vpack.c.bf16 %v526, %v525
      %v630 = vpack.c.bf16 %v558, %v557
      %v631 = vpack.c.bf16 %v590, %v589
      %v632 = vpack.c.bf16 %v528, %v527
      %v633 = vpack.c.bf16 %v560, %v559
      %v634 = vpack.c.bf16 %v592, %v591
      %v635 = vpack.c.bf16 %v530, %v529
      %v636 = vpack.c.bf16 %v562, %v561
      %v637 = vpack.c.bf16 %v594, %v593
      %v638 = vpack.c.bf16 %v532, %v531
      %v639 = vpack.c.bf16 %v564, %v563
      %v640 = vpack.c.bf16 %v596, %v595
      %v641 = vpack.c.bf16 %v534, %v533
      %v642 = vpack.c.bf16 %v566, %v565
      %v643 = vpack.c.bf16 %v598, %v597
      %v644 = vpack.c.bf16 %v536, %v535
      %v645 = vpack.c.bf16 %v568, %v567
      %v646 = vpack.c.bf16 %v600, %v599
      %v647 = vpack.c.bf16 %v538, %v537
      %v648 = vpack.c.bf16 %v570, %v569
      %v649 = vpack.c.bf16 %v602, %v601
      %v650 = vpack.c.bf16 %v540, %v539
      %v651 = vpack.c.bf16 %v572, %v571
      %v652 = vpack.c.bf16 %v604, %v603
      %v653 = vld [vmem:[%s3] sm:$0xf]
      %v654 = vld [vmem:[%s3 + $0x4] sm:$0xf]
      %v655 = vld [vmem:[%s3 + $0x8] sm:$0xf]
      %v656 = vld [vmem:[%s3 + $0xc] sm:$0xf]
      %v657 = vld [vmem:[%s3 + $0x10] sm:$0xf]
      %v658 = vld [vmem:[%s3 + $0x14] sm:$0xf]
      %v659 = vld [vmem:[%s3 + $0x18] sm:$0xf]
      %v660 = vld [vmem:[%s3 + $0x1c] sm:$0xf]
      %v661 = vld [vmem:[%s3 + $0x20] sm:$0xf]
      %v662 = vld [vmem:[%s3 + $0x24] sm:$0xf]
      %v663 = vld [vmem:[%s3 + $0x28] sm:$0xf]
      %v664 = vld [vmem:[%s3 + $0x2c] sm:$0xf]
      %v665 = vld [vmem:[%s3 + $0x30] sm:$0xf]
      %v666 = vld [vmem:[%s3 + $0x34] sm:$0xf]
      %v667 = vld [vmem:[%s3 + $0x38] sm:$0xf]
      %v668 = vld [vmem:[%s3 + $0x3c] sm:$0xf]
      %v669 = vld [vmem:[%s3 + $0x40] sm:$0xf]
      %v670 = vld [vmem:[%s3 + $0x44] sm:$0xf]
      %v671 = vld [vmem:[%s3 + $0x48] sm:$0xf]
      %v672 = vld [vmem:[%s3 + $0x4c] sm:$0xf]
      %v673 = vld [vmem:[%s3 + $0x50] sm:$0xf]
      %v674 = vld [vmem:[%s3 + $0x54] sm:$0xf]
      %v675 = vld [vmem:[%s3 + $0x58] sm:$0xf]
      %v676 = vld [vmem:[%s3 + $0x5c] sm:$0xf]
      %v677 = vld [vmem:[%s3 + $0x60] sm:$0xf]
      %v678 = vld [vmem:[%s3 + $0x64] sm:$0xf]
      %v679 = vld [vmem:[%s3 + $0x68] sm:$0xf]
      %v680 = vld [vmem:[%s3 + $0x6c] sm:$0xf]
      %v681 = vld [vmem:[%s3 + $0x70] sm:$0xf]
      %v682 = vld [vmem:[%s3 + $0x74] sm:$0xf]
      %v683 = vld [vmem:[%s3 + $0x78] sm:$0xf]
      %v684 = vld [vmem:[%s3 + $0x7c] sm:$0xf]
      %v685 = vld [vmem:[%s3 + $0x80] sm:$0xf]
      %v686 = vld [vmem:[%s3 + $0x84] sm:$0xf]
      %v687 = vld [vmem:[%s3 + $0x88] sm:$0xf]
      %v688 = vld [vmem:[%s3 + $0x8c] sm:$0xf]
      %v689 = vld [vmem:[%s3 + $0x90] sm:$0xf]
      %v690 = vld [vmem:[%s3 + $0x94] sm:$0xf]
      %v691 = vld [vmem:[%s3 + $0x98] sm:$0xf]
      %v692 = vld [vmem:[%s3 + $0x9c] sm:$0xf]
      %v693 = vld [vmem:[%s3 + $0xa0] sm:$0xf]
      %v694 = vld [vmem:[%s3 + $0xa4] sm:$0xf]
      %v695 = vld [vmem:[%s3 + $0xa8] sm:$0xf]
      %v696 = vld [vmem:[%s3 + $0xac] sm:$0xf]
      %v697 = vld [vmem:[%s3 + $0xb0] sm:$0xf]
      %v698 = vld [vmem:[%s3 + $0xb4] sm:$0xf]
      %v699 = vld [vmem:[%s3 + $0xb8] sm:$0xf]
      %v700 = vld [vmem:[%s3 + $0xbc] sm:$0xf]
      %v701 = vld [vmem:[%s444] sm:$0xff]
      %v702 = vld [vmem:[%s444 + $0x8] sm:$0xff]
      %v703 = vld [vmem:[%s444 + $0x18] sm:$0xff]
      %v704 = vld [vmem:[%s444 + $0x20] sm:$0xff]
      %v705 = vld [vmem:[%s444 + $0x30] sm:$0xff]
      %v706 = vld [vmem:[%s444 + $0x38] sm:$0xff]
      %v707 = vld [vmem:[%s444 + $0x48] sm:$0xff]
      %v708 = vld [vmem:[%s444 + $0x50] sm:$0xff]
      %v709 = vld [vmem:[%s444 + $0x60] sm:$0xff]
      %v710 = vld [vmem:[%s444 + $0x68] sm:$0xff]
      %v711 = vld [vmem:[%s444 + $0x78] sm:$0xff]
      %v712 = vld [vmem:[%s444 + $0x80] sm:$0xff]
      %v713 = vld [vmem:[%s444 + $0x90] sm:$0xff]
      %v714 = vld [vmem:[%s444 + $0x98] sm:$0xff]
      %v715 = vld [vmem:[%s444 + $0xa8] sm:$0xff]
      %v716 = vld [vmem:[%s444 + $0xb0] sm:$0xff]
      %v717 = vld [vmem:[%s444 + $0xc0] sm:$0xff]
      %v718 = vld [vmem:[%s444 + $0xc8] sm:$0xff]
      %v719 = vld [vmem:[%s444 + $0xd8] sm:$0xff]
      %v720 = vld [vmem:[%s444 + $0xe0] sm:$0xff]
      %v721 = vld [vmem:[%s444 + $0xf0] sm:$0xff]
      %v722 = vld [vmem:[%s444 + $0xf8] sm:$0xff]
      %v723 = vld [vmem:[%s444 + $0x108] sm:$0xff]
      %v724 = vld [vmem:[%s444 + $0x110] sm:$0xff]
      %v725 = vld [vmem:[%s444 + $0x120] sm:$0xff]
      %v726 = vld [vmem:[%s444 + $0x128] sm:$0xff]
      %v727 = vld [vmem:[%s444 + $0x138] sm:$0xff]
      %v728 = vld [vmem:[%s444 + $0x140] sm:$0xff]
      %v729 = vld [vmem:[%s444 + $0x150] sm:$0xff]
      %v730 = vld [vmem:[%s444 + $0x158] sm:$0xff]
      %v731 = vld [vmem:[%s444 + $0x168] sm:$0xff]
      %v732 = vld [vmem:[%s444 + $0x170] sm:$0xff]
      %v733 = vld [vmem:[%s444 + $0x1] sm:$0xff]
      %v734 = vld [vmem:[%s444 + $0x9] sm:$0xff]
      %v735 = vld [vmem:[%s444 + $0x19] sm:$0xff]
      %v736 = vld [vmem:[%s444 + $0x21] sm:$0xff]
      %v737 = vld [vmem:[%s444 + $0x31] sm:$0xff]
      %v738 = vld [vmem:[%s444 + $0x39] sm:$0xff]
      %v739 = vld [vmem:[%s444 + $0x49] sm:$0xff]
      %v740 = vld [vmem:[%s444 + $0x51] sm:$0xff]
      %v741 = vld [vmem:[%s444 + $0x61] sm:$0xff]
      %v742 = vld [vmem:[%s444 + $0x69] sm:$0xff]
      %v743 = vld [vmem:[%s444 + $0x79] sm:$0xff]
      %v744 = vld [vmem:[%s444 + $0x81] sm:$0xff]
      %v745 = vld [vmem:[%s444 + $0x91] sm:$0xff]
      %v746 = vld [vmem:[%s444 + $0x99] sm:$0xff]
      %v747 = vld [vmem:[%s444 + $0xa9] sm:$0xff]
      %v748 = vld [vmem:[%s444 + $0xb1] sm:$0xff]
      %v749 = vld [vmem:[%s444 + $0xc1] sm:$0xff]
      %v750 = vld [vmem:[%s444 + $0xc9] sm:$0xff]
      %v751 = vld [vmem:[%s444 + $0xd9] sm:$0xff]
      %v752 = vld [vmem:[%s444 + $0xe1] sm:$0xff]
      %v753 = vld [vmem:[%s444 + $0xf1] sm:$0xff]
      %v754 = vld [vmem:[%s444 + $0xf9] sm:$0xff]
      %v755 = vld [vmem:[%s444 + $0x109] sm:$0xff]
      %v756 = vld [vmem:[%s444 + $0x111] sm:$0xff]
      %v757 = vld [vmem:[%s444 + $0x121] sm:$0xff]
      %v758 = vld [vmem:[%s444 + $0x129] sm:$0xff]
      %v759 = vld [vmem:[%s444 + $0x139] sm:$0xff]
      %v760 = vld [vmem:[%s444 + $0x141] sm:$0xff]
      %v761 = vld [vmem:[%s444 + $0x151] sm:$0xff]
      %v762 = vld [vmem:[%s444 + $0x159] sm:$0xff]
      %v763 = vld [vmem:[%s444 + $0x169] sm:$0xff]
      %v764 = vld [vmem:[%s444 + $0x171] sm:$0xff]
      %v765 = vld [vmem:[%s444 + $0x2] sm:$0xff]
      %v766 = vld [vmem:[%s444 + $0xa] sm:$0xff]
      %v767 = vld [vmem:[%s444 + $0x1a] sm:$0xff]
      %v768 = vld [vmem:[%s444 + $0x22] sm:$0xff]
      %v769 = vld [vmem:[%s444 + $0x32] sm:$0xff]
      %v770 = vld [vmem:[%s444 + $0x3a] sm:$0xff]
      %v771 = vld [vmem:[%s444 + $0x4a] sm:$0xff]
      %v772 = vld [vmem:[%s444 + $0x52] sm:$0xff]
      %v773 = vld [vmem:[%s444 + $0x62] sm:$0xff]
      %v774 = vld [vmem:[%s444 + $0x6a] sm:$0xff]
      %v775 = vld [vmem:[%s444 + $0x7a] sm:$0xff]
      %v776 = vld [vmem:[%s444 + $0x82] sm:$0xff]
      %v777 = vld [vmem:[%s444 + $0x92] sm:$0xff]
      %v778 = vld [vmem:[%s444 + $0x9a] sm:$0xff]
      %v779 = vld [vmem:[%s444 + $0xaa] sm:$0xff]
      %v780 = vld [vmem:[%s444 + $0xb2] sm:$0xff]
      %v781 = vld [vmem:[%s444 + $0xc2] sm:$0xff]
      %v782 = vld [vmem:[%s444 + $0xca] sm:$0xff]
      %v783 = vld [vmem:[%s444 + $0xda] sm:$0xff]
      %v784 = vld [vmem:[%s444 + $0xe2] sm:$0xff]
      %v785 = vld [vmem:[%s444 + $0xf2] sm:$0xff]
      %v786 = vld [vmem:[%s444 + $0xfa] sm:$0xff]
      %v787 = vld [vmem:[%s444 + $0x10a] sm:$0xff]
      %v788 = vld [vmem:[%s444 + $0x112] sm:$0xff]
      %v789 = vld [vmem:[%s444 + $0x122] sm:$0xff]
      %v790 = vld [vmem:[%s444 + $0x12a] sm:$0xff]
      %v791 = vld [vmem:[%s444 + $0x13a] sm:$0xff]
      %v792 = vld [vmem:[%s444 + $0x142] sm:$0xff]
      %v793 = vld [vmem:[%s444 + $0x152] sm:$0xff]
      %v794 = vld [vmem:[%s444 + $0x15a] sm:$0xff]
      %v795 = vld [vmem:[%s444 + $0x16a] sm:$0xff]
      %v796 = vld [vmem:[%s444 + $0x172] sm:$0xff]
      %v797 = vpack.c.bf16 %v702, %v701
      %v798 = vpack.c.bf16 %v734, %v733
      %v799 = vpack.c.bf16 %v766, %v765
      %v800 = vpack.c.bf16 %v704, %v703
      %v801 = vpack.c.bf16 %v736, %v735
      %v802 = vpack.c.bf16 %v768, %v767
      %v803 = vpack.c.bf16 %v706, %v705
      %v804 = vpack.c.bf16 %v738, %v737
      %v805 = vpack.c.bf16 %v770, %v769
      %v806 = vpack.c.bf16 %v708, %v707
      %v807 = vpack.c.bf16 %v740, %v739
      %v808 = vpack.c.bf16 %v772, %v771
      %v809 = vpack.c.bf16 %v710, %v709
      %v810 = vpack.c.bf16 %v742, %v741
      %v811 = vpack.c.bf16 %v774, %v773
      %v812 = vpack.c.bf16 %v712, %v711
      %v813 = vpack.c.bf16 %v744, %v743
      %v814 = vpack.c.bf16 %v776, %v775
      %v815 = vpack.c.bf16 %v714, %v713
      %v816 = vpack.c.bf16 %v746, %v745
      %v817 = vpack.c.bf16 %v778, %v777
      %v818 = vpack.c.bf16 %v716, %v715
      %v819 = vpack.c.bf16 %v748, %v747
      %v820 = vpack.c.bf16 %v780, %v779
      %v821 = vpack.c.bf16 %v718, %v717
      %v822 = vpack.c.bf16 %v750, %v749
      %v823 = vpack.c.bf16 %v782, %v781
      %v824 = vpack.c.bf16 %v720, %v719
      %v825 = vpack.c.bf16 %v752, %v751
      %v826 = vpack.c.bf16 %v784, %v783
      %v827 = vpack.c.bf16 %v722, %v721
      %v828 = vpack.c.bf16 %v754, %v753
      %v829 = vpack.c.bf16 %v786, %v785
      %v830 = vpack.c.bf16 %v724, %v723
      %v831 = vpack.c.bf16 %v756, %v755
      %v832 = vpack.c.bf16 %v788, %v787
      %v833 = vpack.c.bf16 %v726, %v725
      %v834 = vpack.c.bf16 %v758, %v757
      %v835 = vpack.c.bf16 %v790, %v789
      %v836 = vpack.c.bf16 %v728, %v727
      %v837 = vpack.c.bf16 %v760, %v759
      %v838 = vpack.c.bf16 %v792, %v791
      %v839 = vpack.c.bf16 %v730, %v729
      %v840 = vpack.c.bf16 %v762, %v761
      %v841 = vpack.c.bf16 %v794, %v793
      %v842 = vpack.c.bf16 %v732, %v731
      %v843 = vpack.c.bf16 %v764, %v763
      %v844 = vpack.c.bf16 %v796, %v795
      %s845 = scalar_lea.vmem %s3, 192
      %v846 = vld [vmem:[%s845] sm:$0xf]
      %v847 = vld [vmem:[%s845 + $0x4] sm:$0xf]
      %v848 = vld [vmem:[%s845 + $0x8] sm:$0xf]
      %v849 = vld [vmem:[%s845 + $0xc] sm:$0xf]
      %v850 = vld [vmem:[%s845 + $0x10] sm:$0xf]
      %v851 = vld [vmem:[%s845 + $0x14] sm:$0xf]
      %v852 = vld [vmem:[%s845 + $0x18] sm:$0xf]
      %v853 = vld [vmem:[%s845 + $0x1c] sm:$0xf]
      %v854 = vld [vmem:[%s845 + $0x20] sm:$0xf]
      %v855 = vld [vmem:[%s845 + $0x24] sm:$0xf]
      %v856 = vld [vmem:[%s845 + $0x28] sm:$0xf]
      %v857 = vld [vmem:[%s845 + $0x2c] sm:$0xf]
      %v858 = vld [vmem:[%s845 + $0x30] sm:$0xf]
      %v859 = vld [vmem:[%s845 + $0x34] sm:$0xf]
      %v860 = vld [vmem:[%s845 + $0x38] sm:$0xf]
      %v861 = vld [vmem:[%s845 + $0x3c] sm:$0xf]
      %v862 = vld [vmem:[%s845 + $0x40] sm:$0xf]
      %v863 = vld [vmem:[%s845 + $0x44] sm:$0xf]
      %v864 = vld [vmem:[%s845 + $0x48] sm:$0xf]
      %v865 = vld [vmem:[%s845 + $0x4c] sm:$0xf]
      %v866 = vld [vmem:[%s845 + $0x50] sm:$0xf]
      %v867 = vld [vmem:[%s845 + $0x54] sm:$0xf]
      %v868 = vld [vmem:[%s845 + $0x58] sm:$0xf]
      %v869 = vld [vmem:[%s845 + $0x5c] sm:$0xf]
      %v870 = vld [vmem:[%s845 + $0x60] sm:$0xf]
      %v871 = vld [vmem:[%s845 + $0x64] sm:$0xf]
      %v872 = vld [vmem:[%s845 + $0x68] sm:$0xf]
      %v873 = vld [vmem:[%s845 + $0x6c] sm:$0xf]
      %v874 = vld [vmem:[%s845 + $0x70] sm:$0xf]
      %v875 = vld [vmem:[%s845 + $0x74] sm:$0xf]
      %v876 = vld [vmem:[%s845 + $0x78] sm:$0xf]
      %v877 = vld [vmem:[%s845 + $0x7c] sm:$0xf]
      %v878 = vld [vmem:[%s845 + $0x80] sm:$0xf]
      %v879 = vld [vmem:[%s845 + $0x84] sm:$0xf]
      %v880 = vld [vmem:[%s845 + $0x88] sm:$0xf]
      %v881 = vld [vmem:[%s845 + $0x8c] sm:$0xf]
      %v882 = vld [vmem:[%s845 + $0x90] sm:$0xf]
      %v883 = vld [vmem:[%s845 + $0x94] sm:$0xf]
      %v884 = vld [vmem:[%s845 + $0x98] sm:$0xf]
      %v885 = vld [vmem:[%s845 + $0x9c] sm:$0xf]
      %v886 = vld [vmem:[%s845 + $0xa0] sm:$0xf]
      %v887 = vld [vmem:[%s845 + $0xa4] sm:$0xf]
      %v888 = vld [vmem:[%s845 + $0xa8] sm:$0xf]
      %v889 = vld [vmem:[%s845 + $0xac] sm:$0xf]
      %v890 = vld [vmem:[%s845 + $0xb0] sm:$0xf]
      %v891 = vld [vmem:[%s845 + $0xb4] sm:$0xf]
      %v892 = vld [vmem:[%s845 + $0xb8] sm:$0xf]
      %v893 = vld [vmem:[%s845 + $0xbc] sm:$0xf]
      %v942 = vunpack.c.l.b16 %v846
      %v943 = vunpack.c.l.b16 %v847
      %v944 = vunpack.c.l.b16 %v848
      %v945 = vunpack.c.l.b16 %v849
      %v946 = vunpack.c.l.b16 %v850
      %v947 = vunpack.c.l.b16 %v851
      %v948 = vunpack.c.l.b16 %v852
      %v949 = vunpack.c.l.b16 %v853
      %v950 = vunpack.c.l.b16 %v854
      %v951 = vunpack.c.l.b16 %v855
      %v952 = vunpack.c.l.b16 %v856
      %v953 = vunpack.c.l.b16 %v857
      %v954 = vunpack.c.l.b16 %v858
      %v955 = vunpack.c.l.b16 %v859
      %v956 = vunpack.c.l.b16 %v860
      %v957 = vunpack.c.l.b16 %v861
      %v958 = vunpack.c.l.b16 %v862
      %v959 = vunpack.c.l.b16 %v863
      %v960 = vunpack.c.l.b16 %v864
      %v961 = vunpack.c.l.b16 %v865
      %v962 = vunpack.c.l.b16 %v866
      %v963 = vunpack.c.l.b16 %v867
      %v964 = vunpack.c.l.b16 %v868
      %v965 = vunpack.c.l.b16 %v869
      %v966 = vunpack.c.l.b16 %v870
      %v967 = vunpack.c.l.b16 %v871
      %v968 = vunpack.c.l.b16 %v872
      %v969 = vunpack.c.l.b16 %v873
      %v970 = vunpack.c.l.b16 %v874
      %v971 = vunpack.c.l.b16 %v875
      %v972 = vunpack.c.l.b16 %v876
      %v973 = vunpack.c.l.b16 %v877
      %v974 = vunpack.c.l.b16 %v878
      %v975 = vunpack.c.l.b16 %v879
      %v976 = vunpack.c.l.b16 %v880
      %v977 = vunpack.c.l.b16 %v881
      %v978 = vunpack.c.l.b16 %v882
      %v979 = vunpack.c.l.b16 %v883
      %v980 = vunpack.c.l.b16 %v884
      %v981 = vunpack.c.l.b16 %v885
      %v982 = vunpack.c.l.b16 %v886
      %v983 = vunpack.c.l.b16 %v887
      %v984 = vunpack.c.l.b16 %v888
      %v985 = vunpack.c.l.b16 %v889
      %v986 = vunpack.c.l.b16 %v890
      %v987 = vunpack.c.l.b16 %v891
      %v988 = vunpack.c.l.b16 %v892
      %v989 = vunpack.c.l.b16 %v893
      %v990 = vpack.c.b16 %v943, %v942
      %v991 = vpack.c.b16 %v945, %v944
      %v992 = vpack.c.b16 %v947, %v946
      %v993 = vpack.c.b16 %v949, %v948
      %v994 = vpack.c.b16 %v951, %v950
      %v995 = vpack.c.b16 %v953, %v952
      %v996 = vpack.c.b16 %v955, %v954
      %v997 = vpack.c.b16 %v957, %v956
      %v998 = vpack.c.b16 %v959, %v958
      %v999 = vpack.c.b16 %v961, %v960
      %v1000 = vpack.c.b16 %v963, %v962
      %v1001 = vpack.c.b16 %v965, %v964
      %v1002 = vpack.c.b16 %v967, %v966
      %v1003 = vpack.c.b16 %v969, %v968
      %v1004 = vpack.c.b16 %v971, %v970
      %v1005 = vpack.c.b16 %v973, %v972
      %v1006 = vpack.c.b16 %v975, %v974
      %v1007 = vpack.c.b16 %v977, %v976
      %v1008 = vpack.c.b16 %v979, %v978
      %v1009 = vpack.c.b16 %v981, %v980
      %v1010 = vpack.c.b16 %v983, %v982
      %v1011 = vpack.c.b16 %v985, %v984
      %v1012 = vpack.c.b16 %v987, %v986
      %v1013 = vpack.c.b16 %v989, %v988
      %1038 = vmatpush.bf16.msra.mxu0 %v997
      %1039 = vmatpush.bf16.msra.mxu0 %v996
      %1040 = vmatpush.bf16.msra.mxu0 %v995
      %1041 = vmatpush.bf16.msra.mxu0 %v994
      %1042 = vmatpush.bf16.msra.mxu0 %v993
      %1043 = vmatpush.bf16.msra.mxu0 %v992
      %1044 = vmatpush.bf16.msra.mxu0 %v991
      %1045 = vmatpush.bf16.msra.mxu0 %v990
      %1046 = vmatmul.bf16.gmra.mxu0 %v797
      %v1047 = vpop.f32.mrf.mxu0
      %v1048 = vadd.f32 0.0, %v1047
      %v1049 = vpop.f32.mrf.mxu0
      %v1050 = vadd.f32 0.0, %v1049
      %1051 = vmatmul.bf16.gmra.mxu0 %v800
      %v1052 = vpop.f32.mrf.mxu0
      %v1053 = vadd.f32 0.0, %v1052
      %v1054 = vpop.f32.mrf.mxu0
      %v1055 = vadd.f32 0.0, %v1054
      %1056 = vmatmul.bf16.gmra.mxu0 %v803
      %v1057 = vpop.f32.mrf.mxu0
      %v1058 = vadd.f32 0.0, %v1057
      %v1059 = vpop.f32.mrf.mxu0
      %v1060 = vadd.f32 0.0, %v1059
      %1061 = vmatmul.bf16.gmra.mxu0 %v806
      %v1062 = vpop.f32.mrf.mxu0
      %v1063 = vadd.f32 0.0, %v1062
      %v1064 = vpop.f32.mrf.mxu0
      %v1065 = vadd.f32 0.0, %v1064
      %1066 = vmatmul.bf16.gmra.mxu0 %v809
      %v1067 = vpop.f32.mrf.mxu0
      %v1068 = vadd.f32 0.0, %v1067
      %v1069 = vpop.f32.mrf.mxu0
      %v1070 = vadd.f32 0.0, %v1069
      %1071 = vmatmul.bf16.gmra.mxu0 %v812
      %v1072 = vpop.f32.mrf.mxu0
      %v1073 = vadd.f32 0.0, %v1072
      %v1074 = vpop.f32.mrf.mxu0
      %v1075 = vadd.f32 0.0, %v1074
      %1076 = vmatmul.bf16.gmra.mxu0 %v815
      %v1077 = vpop.f32.mrf.mxu0
      %v1078 = vadd.f32 0.0, %v1077
      %v1079 = vpop.f32.mrf.mxu0
      %v1080 = vadd.f32 0.0, %v1079
      %1081 = vmatmul.bf16.gmra.mxu0 %v818
      %v1082 = vpop.f32.mrf.mxu0
      %v1083 = vadd.f32 0.0, %v1082
      %v1084 = vpop.f32.mrf.mxu0
      %v1085 = vadd.f32 0.0, %v1084
      %1086 = vmatmul.bf16.gmra.mxu0 %v821
      %v1087 = vpop.f32.mrf.mxu0
      %v1088 = vadd.f32 0.0, %v1087
      %v1089 = vpop.f32.mrf.mxu0
      %v1090 = vadd.f32 0.0, %v1089
      %1091 = vmatmul.bf16.gmra.mxu0 %v824
      %v1092 = vpop.f32.mrf.mxu0
      %v1093 = vadd.f32 0.0, %v1092
      %v1094 = vpop.f32.mrf.mxu0
      %v1095 = vadd.f32 0.0, %v1094
      %1096 = vmatmul.bf16.gmra.mxu0 %v827
      %v1097 = vpop.f32.mrf.mxu0
      %v1098 = vadd.f32 0.0, %v1097
      %v1099 = vpop.f32.mrf.mxu0
      %v1100 = vadd.f32 0.0, %v1099
      %1101 = vmatmul.bf16.gmra.mxu0 %v830
      %v1102 = vpop.f32.mrf.mxu0
      %v1103 = vadd.f32 0.0, %v1102
      %v1104 = vpop.f32.mrf.mxu0
      %v1105 = vadd.f32 0.0, %v1104
      %1106 = vmatmul.bf16.gmra.mxu0 %v833
      %v1107 = vpop.f32.mrf.mxu0
      %v1108 = vadd.f32 0.0, %v1107
      %v1109 = vpop.f32.mrf.mxu0
      %v1110 = vadd.f32 0.0, %v1109
      %1111 = vmatmul.bf16.gmra.mxu0 %v836
      %v1112 = vpop.f32.mrf.mxu0
      %v1113 = vadd.f32 0.0, %v1112
      %v1114 = vpop.f32.mrf.mxu0
      %v1115 = vadd.f32 0.0, %v1114
      %1116 = vmatmul.bf16.gmra.mxu0 %v839
      %v1117 = vpop.f32.mrf.mxu0
      %v1118 = vadd.f32 0.0, %v1117
      %v1119 = vpop.f32.mrf.mxu0
      %v1120 = vadd.f32 0.0, %v1119
      %1121 = vmatmul.bf16.gmra.mxu0 %v842
      %v1122 = vpop.f32.mrf.mxu0
      %v1123 = vadd.f32 0.0, %v1122
      %v1124 = vpop.f32.mrf.mxu0
      %v1125 = vadd.f32 0.0, %v1124
      %1126 = vdwg.mxu0
      %1127 = vmatpush.bf16.msra.mxu0 %v1005
      %1128 = vmatpush.bf16.msra.mxu0 %v1004
      %1129 = vmatpush.bf16.msra.mxu0 %v1003
      %1130 = vmatpush.bf16.msra.mxu0 %v1002
      %1131 = vmatpush.bf16.msra.mxu0 %v1001
      %1132 = vmatpush.bf16.msra.mxu0 %v1000
      %1133 = vmatpush.bf16.msra.mxu0 %v999
      %1134 = vmatpush.bf16.msra.mxu0 %v998
      %1135 = vmatmul.bf16.gmra.mxu0 %v798
      %v1136 = vpop.f32.mrf.mxu0
      %v1137 = vadd.f32 %v1048, %v1136
      %v1138 = vpop.f32.mrf.mxu0
      %v1139 = vadd.f32 %v1050, %v1138
      %1140 = vmatmul.bf16.gmra.mxu0 %v801
      %v1141 = vpop.f32.mrf.mxu0
      %v1142 = vadd.f32 %v1053, %v1141
      %v1143 = vpop.f32.mrf.mxu0
      %v1144 = vadd.f32 %v1055, %v1143
      %1145 = vmatmul.bf16.gmra.mxu0 %v804
      %v1146 = vpop.f32.mrf.mxu0
      %v1147 = vadd.f32 %v1058, %v1146
      %v1148 = vpop.f32.mrf.mxu0
      %v1149 = vadd.f32 %v1060, %v1148
      %1150 = vmatmul.bf16.gmra.mxu0 %v807
      %v1151 = vpop.f32.mrf.mxu0
      %v1152 = vadd.f32 %v1063, %v1151
      %v1153 = vpop.f32.mrf.mxu0
      %v1154 = vadd.f32 %v1065, %v1153
      %1155 = vmatmul.bf16.gmra.mxu0 %v810
      %v1156 = vpop.f32.mrf.mxu0
      %v1157 = vadd.f32 %v1068, %v1156
      %v1158 = vpop.f32.mrf.mxu0
      %v1159 = vadd.f32 %v1070, %v1158
      %1160 = vmatmul.bf16.gmra.mxu0 %v813
      %v1161 = vpop.f32.mrf.mxu0
      %v1162 = vadd.f32 %v1073, %v1161
      %v1163 = vpop.f32.mrf.mxu0
      %v1164 = vadd.f32 %v1075, %v1163
      %1165 = vmatmul.bf16.gmra.mxu0 %v816
      %v1166 = vpop.f32.mrf.mxu0
      %v1167 = vadd.f32 %v1078, %v1166
      %v1168 = vpop.f32.mrf.mxu0
      %v1169 = vadd.f32 %v1080, %v1168
      %1170 = vmatmul.bf16.gmra.mxu0 %v819
      %v1171 = vpop.f32.mrf.mxu0
      %v1172 = vadd.f32 %v1083, %v1171
      %v1173 = vpop.f32.mrf.mxu0
      %v1174 = vadd.f32 %v1085, %v1173
      %1175 = vmatmul.bf16.gmra.mxu0 %v822
      %v1176 = vpop.f32.mrf.mxu0
      %v1177 = vadd.f32 %v1088, %v1176
      %v1178 = vpop.f32.mrf.mxu0
      %v1179 = vadd.f32 %v1090, %v1178
      %1180 = vmatmul.bf16.gmra.mxu0 %v825
      %v1181 = vpop.f32.mrf.mxu0
      %v1182 = vadd.f32 %v1093, %v1181
      %v1183 = vpop.f32.mrf.mxu0
      %v1184 = vadd.f32 %v1095, %v1183
      %1185 = vmatmul.bf16.gmra.mxu0 %v828
      %v1186 = vpop.f32.mrf.mxu0
      %v1187 = vadd.f32 %v1098, %v1186
      %v1188 = vpop.f32.mrf.mxu0
      %v1189 = vadd.f32 %v1100, %v1188
      %1190 = vmatmul.bf16.gmra.mxu0 %v831
      %v1191 = vpop.f32.mrf.mxu0
      %v1192 = vadd.f32 %v1103, %v1191
      %v1193 = vpop.f32.mrf.mxu0
      %v1194 = vadd.f32 %v1105, %v1193
      %1195 = vmatmul.bf16.gmra.mxu0 %v834
      %v1196 = vpop.f32.mrf.mxu0
      %v1197 = vadd.f32 %v1108, %v1196
      %v1198 = vpop.f32.mrf.mxu0
      %v1199 = vadd.f32 %v1110, %v1198
      %1200 = vmatmul.bf16.gmra.mxu0 %v837
      %v1201 = vpop.f32.mrf.mxu0
      %v1202 = vadd.f32 %v1113, %v1201
      %v1203 = vpop.f32.mrf.mxu0
      %v1204 = vadd.f32 %v1115, %v1203
      %1205 = vmatmul.bf16.gmra.mxu0 %v840
      %v1206 = vpop.f32.mrf.mxu0
      %v1207 = vadd.f32 %v1118, %v1206
      %v1208 = vpop.f32.mrf.mxu0
      %v1209 = vadd.f32 %v1120, %v1208
      %1210 = vmatmul.bf16.gmra.mxu0 %v843
      %v1211 = vpop.f32.mrf.mxu0
      %v1212 = vadd.f32 %v1123, %v1211
      %v1213 = vpop.f32.mrf.mxu0
      %v1214 = vadd.f32 %v1125, %v1213
      %1215 = vdwg.mxu0
      %1216 = vmatpush.bf16.msra.mxu0 %v1013
      %1217 = vmatpush.bf16.msra.mxu0 %v1012
      %1218 = vmatpush.bf16.msra.mxu0 %v1011
      %1219 = vmatpush.bf16.msra.mxu0 %v1010
      %1220 = vmatpush.bf16.msra.mxu0 %v1009
      %1221 = vmatpush.bf16.msra.mxu0 %v1008
      %1222 = vmatpush.bf16.msra.mxu0 %v1007
      %1223 = vmatpush.bf16.msra.mxu0 %v1006
      %1224 = vmatmul.bf16.gmra.mxu0 %v799
      %v1225 = vpop.f32.mrf.mxu0
      %v1226 = vadd.f32 %v1137, %v1225
      %v1227 = vpop.f32.mrf.mxu0
      %v1228 = vadd.f32 %v1139, %v1227
      %1229 = vmatmul.bf16.gmra.mxu0 %v802
      %v1230 = vpop.f32.mrf.mxu0
      %v1231 = vadd.f32 %v1142, %v1230
      %v1232 = vpop.f32.mrf.mxu0
      %v1233 = vadd.f32 %v1144, %v1232
      %1234 = vmatmul.bf16.gmra.mxu0 %v805
      %v1235 = vpop.f32.mrf.mxu0
      %v1236 = vadd.f32 %v1147, %v1235
      %v1237 = vpop.f32.mrf.mxu0
      %v1238 = vadd.f32 %v1149, %v1237
      %1239 = vmatmul.bf16.gmra.mxu0 %v808
      %v1240 = vpop.f32.mrf.mxu0
      %v1241 = vadd.f32 %v1152, %v1240
      %v1242 = vpop.f32.mrf.mxu0
      %v1243 = vadd.f32 %v1154, %v1242
      %1244 = vmatmul.bf16.gmra.mxu0 %v811
      %v1245 = vpop.f32.mrf.mxu0
      %v1246 = vadd.f32 %v1157, %v1245
      %v1247 = vpop.f32.mrf.mxu0
      %v1248 = vadd.f32 %v1159, %v1247
      %1249 = vmatmul.bf16.gmra.mxu0 %v814
      %v1250 = vpop.f32.mrf.mxu0
      %v1251 = vadd.f32 %v1162, %v1250
      %v1252 = vpop.f32.mrf.mxu0
      %v1253 = vadd.f32 %v1164, %v1252
      %1254 = vmatmul.bf16.gmra.mxu0 %v817
      %v1255 = vpop.f32.mrf.mxu0
      %v1256 = vadd.f32 %v1167, %v1255
      %v1257 = vpop.f32.mrf.mxu0
      %v1258 = vadd.f32 %v1169, %v1257
      %1259 = vmatmul.bf16.gmra.mxu0 %v820
      %v1260 = vpop.f32.mrf.mxu0
      %v1261 = vadd.f32 %v1172, %v1260
      %v1262 = vpop.f32.mrf.mxu0
      %v1263 = vadd.f32 %v1174, %v1262
      %1264 = vmatmul.bf16.gmra.mxu0 %v823
      %v1265 = vpop.f32.mrf.mxu0
      %v1266 = vadd.f32 %v1177, %v1265
      %v1267 = vpop.f32.mrf.mxu0
      %v1268 = vadd.f32 %v1179, %v1267
      %1269 = vmatmul.bf16.gmra.mxu0 %v826
      %v1270 = vpop.f32.mrf.mxu0
      %v1271 = vadd.f32 %v1182, %v1270
      %v1272 = vpop.f32.mrf.mxu0
      %v1273 = vadd.f32 %v1184, %v1272
      %1274 = vmatmul.bf16.gmra.mxu0 %v829
      %v1275 = vpop.f32.mrf.mxu0
      %v1276 = vadd.f32 %v1187, %v1275
      %v1277 = vpop.f32.mrf.mxu0
      %v1278 = vadd.f32 %v1189, %v1277
      %1279 = vmatmul.bf16.gmra.mxu0 %v832
      %v1280 = vpop.f32.mrf.mxu0
      %v1281 = vadd.f32 %v1192, %v1280
      %v1282 = vpop.f32.mrf.mxu0
      %v1283 = vadd.f32 %v1194, %v1282
      %1284 = vmatmul.bf16.gmra.mxu0 %v835
      %v1285 = vpop.f32.mrf.mxu0
      %v1286 = vadd.f32 %v1197, %v1285
      %v1287 = vpop.f32.mrf.mxu0
      %v1288 = vadd.f32 %v1199, %v1287
      %1289 = vmatmul.bf16.gmra.mxu0 %v838
      %v1290 = vpop.f32.mrf.mxu0
      %v1291 = vadd.f32 %v1202, %v1290
      %v1292 = vpop.f32.mrf.mxu0
      %v1293 = vadd.f32 %v1204, %v1292
      %1294 = vmatmul.bf16.gmra.mxu0 %v841
      %v1295 = vpop.f32.mrf.mxu0
      %v1296 = vadd.f32 %v1207, %v1295
      %v1297 = vpop.f32.mrf.mxu0
      %v1298 = vadd.f32 %v1209, %v1297
      %1299 = vmatmul.bf16.gmra.mxu0 %v844
      %v1300 = vpop.f32.mrf.mxu0
      %v1301 = vadd.f32 %v1212, %v1300
      %v1302 = vpop.f32.mrf.mxu0
      %v1303 = vadd.f32 %v1214, %v1302
      %1304 = vdwg.mxu0
      %v1353 = vunpack.c.l.b16 %v653
      %v1354 = vunpack.c.l.b16 %v654
      %v1355 = vunpack.c.l.b16 %v655
      %v1356 = vunpack.c.l.b16 %v656
      %v1357 = vunpack.c.l.b16 %v657
      %v1358 = vunpack.c.l.b16 %v658
      %v1359 = vunpack.c.l.b16 %v659
      %v1360 = vunpack.c.l.b16 %v660
      %v1361 = vunpack.c.l.b16 %v661
      %v1362 = vunpack.c.l.b16 %v662
      %v1363 = vunpack.c.l.b16 %v663
      %v1364 = vunpack.c.l.b16 %v664
      %v1365 = vunpack.c.l.b16 %v665
      %v1366 = vunpack.c.l.b16 %v666
      %v1367 = vunpack.c.l.b16 %v667
      %v1368 = vunpack.c.l.b16 %v668
      %v1369 = vunpack.c.l.b16 %v669
      %v1370 = vunpack.c.l.b16 %v670
      %v1371 = vunpack.c.l.b16 %v671
      %v1372 = vunpack.c.l.b16 %v672
      %v1373 = vunpack.c.l.b16 %v673
      %v1374 = vunpack.c.l.b16 %v674
      %v1375 = vunpack.c.l.b16 %v675
      %v1376 = vunpack.c.l.b16 %v676
      %v1377 = vunpack.c.l.b16 %v677
      %v1378 = vunpack.c.l.b16 %v678
      %v1379 = vunpack.c.l.b16 %v679
      %v1380 = vunpack.c.l.b16 %v680
      %v1381 = vunpack.c.l.b16 %v681
      %v1382 = vunpack.c.l.b16 %v682
      %v1383 = vunpack.c.l.b16 %v683
      %v1384 = vunpack.c.l.b16 %v684
      %v1385 = vunpack.c.l.b16 %v685
      %v1386 = vunpack.c.l.b16 %v686
      %v1387 = vunpack.c.l.b16 %v687
      %v1388 = vunpack.c.l.b16 %v688
      %v1389 = vunpack.c.l.b16 %v689
      %v1390 = vunpack.c.l.b16 %v690
      %v1391 = vunpack.c.l.b16 %v691
      %v1392 = vunpack.c.l.b16 %v692
      %v1393 = vunpack.c.l.b16 %v693
      %v1394 = vunpack.c.l.b16 %v694
      %v1395 = vunpack.c.l.b16 %v695
      %v1396 = vunpack.c.l.b16 %v696
      %v1397 = vunpack.c.l.b16 %v697
      %v1398 = vunpack.c.l.b16 %v698
      %v1399 = vunpack.c.l.b16 %v699
      %v1400 = vunpack.c.l.b16 %v700
      %v1401 = vpack.c.b16 %v1354, %v1353
      %v1402 = vpack.c.b16 %v1356, %v1355
      %v1403 = vpack.c.b16 %v1358, %v1357
      %v1404 = vpack.c.b16 %v1360, %v1359
      %v1405 = vpack.c.b16 %v1362, %v1361
      %v1406 = vpack.c.b16 %v1364, %v1363
      %v1407 = vpack.c.b16 %v1366, %v1365
      %v1408 = vpack.c.b16 %v1368, %v1367
      %v1409 = vpack.c.b16 %v1370, %v1369
      %v1410 = vpack.c.b16 %v1372, %v1371
      %v1411 = vpack.c.b16 %v1374, %v1373
      %v1412 = vpack.c.b16 %v1376, %v1375
      %v1413 = vpack.c.b16 %v1378, %v1377
      %v1414 = vpack.c.b16 %v1380, %v1379
      %v1415 = vpack.c.b16 %v1382, %v1381
      %v1416 = vpack.c.b16 %v1384, %v1383
      %v1417 = vpack.c.b16 %v1386, %v1385
      %v1418 = vpack.c.b16 %v1388, %v1387
      %v1419 = vpack.c.b16 %v1390, %v1389
      %v1420 = vpack.c.b16 %v1392, %v1391
      %v1421 = vpack.c.b16 %v1394, %v1393
      %v1422 = vpack.c.b16 %v1396, %v1395
      %v1423 = vpack.c.b16 %v1398, %v1397
      %v1424 = vpack.c.b16 %v1400, %v1399
      %1449 = vmatpush.bf16.msra.mxu0 %v1408
      %1450 = vmatpush.bf16.msra.mxu0 %v1407
      %1451 = vmatpush.bf16.msra.mxu0 %v1406
      %1452 = vmatpush.bf16.msra.mxu0 %v1405
      %1453 = vmatpush.bf16.msra.mxu0 %v1404
      %1454 = vmatpush.bf16.msra.mxu0 %v1403
      %1455 = vmatpush.bf16.msra.mxu0 %v1402
      %1456 = vmatpush.bf16.msra.mxu0 %v1401
      %1457 = vmatmul.bf16.gmra.mxu0 %v605
      %v1458 = vpop.f32.mrf.mxu0
      %v1459 = vadd.f32 %v1226, %v1458
      %v1460 = vpop.f32.mrf.mxu0
      %v1461 = vadd.f32 %v1228, %v1460
      %1462 = vmatmul.bf16.gmra.mxu0 %v608
      %v1463 = vpop.f32.mrf.mxu0
      %v1464 = vadd.f32 %v1231, %v1463
      %v1465 = vpop.f32.mrf.mxu0
      %v1466 = vadd.f32 %v1233, %v1465
      %1467 = vmatmul.bf16.gmra.mxu0 %v611
      %v1468 = vpop.f32.mrf.mxu0
      %v1469 = vadd.f32 %v1236, %v1468
      %v1470 = vpop.f32.mrf.mxu0
      %v1471 = vadd.f32 %v1238, %v1470
      %1472 = vmatmul.bf16.gmra.mxu0 %v614
      %v1473 = vpop.f32.mrf.mxu0
      %v1474 = vadd.f32 %v1241, %v1473
      %v1475 = vpop.f32.mrf.mxu0
      %v1476 = vadd.f32 %v1243, %v1475
      %1477 = vmatmul.bf16.gmra.mxu0 %v617
      %v1478 = vpop.f32.mrf.mxu0
      %v1479 = vadd.f32 %v1246, %v1478
      %v1480 = vpop.f32.mrf.mxu0
      %v1481 = vadd.f32 %v1248, %v1480
      %1482 = vmatmul.bf16.gmra.mxu0 %v620
      %v1483 = vpop.f32.mrf.mxu0
      %v1484 = vadd.f32 %v1251, %v1483
      %v1485 = vpop.f32.mrf.mxu0
      %v1486 = vadd.f32 %v1253, %v1485
      %1487 = vmatmul.bf16.gmra.mxu0 %v623
      %v1488 = vpop.f32.mrf.mxu0
      %v1489 = vadd.f32 %v1256, %v1488
      %v1490 = vpop.f32.mrf.mxu0
      %v1491 = vadd.f32 %v1258, %v1490
      %1492 = vmatmul.bf16.gmra.mxu0 %v626
      %v1493 = vpop.f32.mrf.mxu0
      %v1494 = vadd.f32 %v1261, %v1493
      %v1495 = vpop.f32.mrf.mxu0
      %v1496 = vadd.f32 %v1263, %v1495
      %1497 = vmatmul.bf16.gmra.mxu0 %v629
      %v1498 = vpop.f32.mrf.mxu0
      %v1499 = vadd.f32 %v1266, %v1498
      %v1500 = vpop.f32.mrf.mxu0
      %v1501 = vadd.f32 %v1268, %v1500
      %1502 = vmatmul.bf16.gmra.mxu0 %v632
      %v1503 = vpop.f32.mrf.mxu0
      %v1504 = vadd.f32 %v1271, %v1503
      %v1505 = vpop.f32.mrf.mxu0
      %v1506 = vadd.f32 %v1273, %v1505
      %1507 = vmatmul.bf16.gmra.mxu0 %v635
      %v1508 = vpop.f32.mrf.mxu0
      %v1509 = vadd.f32 %v1276, %v1508
      %v1510 = vpop.f32.mrf.mxu0
      %v1511 = vadd.f32 %v1278, %v1510
      %1512 = vmatmul.bf16.gmra.mxu0 %v638
      %v1513 = vpop.f32.mrf.mxu0
      %v1514 = vadd.f32 %v1281, %v1513
      %v1515 = vpop.f32.mrf.mxu0
      %v1516 = vadd.f32 %v1283, %v1515
      %1517 = vmatmul.bf16.gmra.mxu0 %v641
      %v1518 = vpop.f32.mrf.mxu0
      %v1519 = vadd.f32 %v1286, %v1518
      %v1520 = vpop.f32.mrf.mxu0
      %v1521 = vadd.f32 %v1288, %v1520
      %1522 = vmatmul.bf16.gmra.mxu0 %v644
      %v1523 = vpop.f32.mrf.mxu0
      %v1524 = vadd.f32 %v1291, %v1523
      %v1525 = vpop.f32.mrf.mxu0
      %v1526 = vadd.f32 %v1293, %v1525
      %1527 = vmatmul.bf16.gmra.mxu0 %v647
      %v1528 = vpop.f32.mrf.mxu0
      %v1529 = vadd.f32 %v1296, %v1528
      %v1530 = vpop.f32.mrf.mxu0
      %v1531 = vadd.f32 %v1298, %v1530
      %1532 = vmatmul.bf16.gmra.mxu0 %v650
      %v1533 = vpop.f32.mrf.mxu0
      %v1534 = vadd.f32 %v1301, %v1533
      %v1535 = vpop.f32.mrf.mxu0
      %v1536 = vadd.f32 %v1303, %v1535
      %1537 = vdwg.mxu0
      %1538 = vmatpush.bf16.msra.mxu0 %v1416
      %1539 = vmatpush.bf16.msra.mxu0 %v1415
      %1540 = vmatpush.bf16.msra.mxu0 %v1414
      %1541 = vmatpush.bf16.msra.mxu0 %v1413
      %1542 = vmatpush.bf16.msra.mxu0 %v1412
      %1543 = vmatpush.bf16.msra.mxu0 %v1411
      %1544 = vmatpush.bf16.msra.mxu0 %v1410
      %1545 = vmatpush.bf16.msra.mxu0 %v1409
      %1546 = vmatmul.bf16.gmra.mxu0 %v606
      %v1547 = vpop.f32.mrf.mxu0
      %v1548 = vadd.f32 %v1459, %v1547
      %v1549 = vpop.f32.mrf.mxu0
      %v1550 = vadd.f32 %v1461, %v1549
      %1551 = vmatmul.bf16.gmra.mxu0 %v609
      %v1552 = vpop.f32.mrf.mxu0
      %v1553 = vadd.f32 %v1464, %v1552
      %v1554 = vpop.f32.mrf.mxu0
      %v1555 = vadd.f32 %v1466, %v1554
      %1556 = vmatmul.bf16.gmra.mxu0 %v612
      %v1557 = vpop.f32.mrf.mxu0
      %v1558 = vadd.f32 %v1469, %v1557
      %v1559 = vpop.f32.mrf.mxu0
      %v1560 = vadd.f32 %v1471, %v1559
      %1561 = vmatmul.bf16.gmra.mxu0 %v615
      %v1562 = vpop.f32.mrf.mxu0
      %v1563 = vadd.f32 %v1474, %v1562
      %v1564 = vpop.f32.mrf.mxu0
      %v1565 = vadd.f32 %v1476, %v1564
      %1566 = vmatmul.bf16.gmra.mxu0 %v618
      %v1567 = vpop.f32.mrf.mxu0
      %v1568 = vadd.f32 %v1479, %v1567
      %v1569 = vpop.f32.mrf.mxu0
      %v1570 = vadd.f32 %v1481, %v1569
      %1571 = vmatmul.bf16.gmra.mxu0 %v621
      %v1572 = vpop.f32.mrf.mxu0
      %v1573 = vadd.f32 %v1484, %v1572
      %v1574 = vpop.f32.mrf.mxu0
      %v1575 = vadd.f32 %v1486, %v1574
      %1576 = vmatmul.bf16.gmra.mxu0 %v624
      %v1577 = vpop.f32.mrf.mxu0
      %v1578 = vadd.f32 %v1489, %v1577
      %v1579 = vpop.f32.mrf.mxu0
      %v1580 = vadd.f32 %v1491, %v1579
      %1581 = vmatmul.bf16.gmra.mxu0 %v627
      %v1582 = vpop.f32.mrf.mxu0
      %v1583 = vadd.f32 %v1494, %v1582
      %v1584 = vpop.f32.mrf.mxu0
      %v1585 = vadd.f32 %v1496, %v1584
      %1586 = vmatmul.bf16.gmra.mxu0 %v630
      %v1587 = vpop.f32.mrf.mxu0
      %v1588 = vadd.f32 %v1499, %v1587
      %v1589 = vpop.f32.mrf.mxu0
      %v1590 = vadd.f32 %v1501, %v1589
      %1591 = vmatmul.bf16.gmra.mxu0 %v633
      %v1592 = vpop.f32.mrf.mxu0
      %v1593 = vadd.f32 %v1504, %v1592
      %v1594 = vpop.f32.mrf.mxu0
      %v1595 = vadd.f32 %v1506, %v1594
      %1596 = vmatmul.bf16.gmra.mxu0 %v636
      %v1597 = vpop.f32.mrf.mxu0
      %v1598 = vadd.f32 %v1509, %v1597
      %v1599 = vpop.f32.mrf.mxu0
      %v1600 = vadd.f32 %v1511, %v1599
      %1601 = vmatmul.bf16.gmra.mxu0 %v639
      %v1602 = vpop.f32.mrf.mxu0
      %v1603 = vadd.f32 %v1514, %v1602
      %v1604 = vpop.f32.mrf.mxu0
      %v1605 = vadd.f32 %v1516, %v1604
      %1606 = vmatmul.bf16.gmra.mxu0 %v642
      %v1607 = vpop.f32.mrf.mxu0
      %v1608 = vadd.f32 %v1519, %v1607
      %v1609 = vpop.f32.mrf.mxu0
      %v1610 = vadd.f32 %v1521, %v1609
      %1611 = vmatmul.bf16.gmra.mxu0 %v645
      %v1612 = vpop.f32.mrf.mxu0
      %v1613 = vadd.f32 %v1524, %v1612
      %v1614 = vpop.f32.mrf.mxu0
      %v1615 = vadd.f32 %v1526, %v1614
      %1616 = vmatmul.bf16.gmra.mxu0 %v648
      %v1617 = vpop.f32.mrf.mxu0
      %v1618 = vadd.f32 %v1529, %v1617
      %v1619 = vpop.f32.mrf.mxu0
      %v1620 = vadd.f32 %v1531, %v1619
      %1621 = vmatmul.bf16.gmra.mxu0 %v651
      %v1622 = vpop.f32.mrf.mxu0
      %v1623 = vadd.f32 %v1534, %v1622
      %v1624 = vpop.f32.mrf.mxu0
      %v1625 = vadd.f32 %v1536, %v1624
      %1626 = vdwg.mxu0
      %1627 = vmatpush.bf16.msra.mxu0 %v1424
      %1628 = vmatpush.bf16.msra.mxu0 %v1423
      %1629 = vmatpush.bf16.msra.mxu0 %v1422
      %1630 = vmatpush.bf16.msra.mxu0 %v1421
      %1631 = vmatpush.bf16.msra.mxu0 %v1420
      %1632 = vmatpush.bf16.msra.mxu0 %v1419
      %1633 = vmatpush.bf16.msra.mxu0 %v1418
      %1634 = vmatpush.bf16.msra.mxu0 %v1417
      %1635 = vmatmul.bf16.gmra.mxu0 %v607
      %v1636 = vpop.f32.mrf.mxu0
      %v1637 = vadd.f32 %v1548, %v1636
      %v1638 = vpop.f32.mrf.mxu0
      %v1639 = vadd.f32 %v1550, %v1638
      %1640 = vmatmul.bf16.gmra.mxu0 %v610
      %v1641 = vpop.f32.mrf.mxu0
      %v1642 = vadd.f32 %v1553, %v1641
      %v1643 = vpop.f32.mrf.mxu0
      %v1644 = vadd.f32 %v1555, %v1643
      %1645 = vmatmul.bf16.gmra.mxu0 %v613
      %v1646 = vpop.f32.mrf.mxu0
      %v1647 = vadd.f32 %v1558, %v1646
      %v1648 = vpop.f32.mrf.mxu0
      %v1649 = vadd.f32 %v1560, %v1648
      %1650 = vmatmul.bf16.gmra.mxu0 %v616
      %v1651 = vpop.f32.mrf.mxu0
      %v1652 = vadd.f32 %v1563, %v1651
      %v1653 = vpop.f32.mrf.mxu0
      %v1654 = vadd.f32 %v1565, %v1653
      %1655 = vmatmul.bf16.gmra.mxu0 %v619
      %v1656 = vpop.f32.mrf.mxu0
      %v1657 = vadd.f32 %v1568, %v1656
      %v1658 = vpop.f32.mrf.mxu0
      %v1659 = vadd.f32 %v1570, %v1658
      %1660 = vmatmul.bf16.gmra.mxu0 %v622
      %v1661 = vpop.f32.mrf.mxu0
      %v1662 = vadd.f32 %v1573, %v1661
      %v1663 = vpop.f32.mrf.mxu0
      %v1664 = vadd.f32 %v1575, %v1663
      %1665 = vmatmul.bf16.gmra.mxu0 %v625
      %v1666 = vpop.f32.mrf.mxu0
      %v1667 = vadd.f32 %v1578, %v1666
      %v1668 = vpop.f32.mrf.mxu0
      %v1669 = vadd.f32 %v1580, %v1668
      %1670 = vmatmul.bf16.gmra.mxu0 %v628
      %v1671 = vpop.f32.mrf.mxu0
      %v1672 = vadd.f32 %v1583, %v1671
      %v1673 = vpop.f32.mrf.mxu0
      %v1674 = vadd.f32 %v1585, %v1673
      %1675 = vmatmul.bf16.gmra.mxu0 %v631
      %v1676 = vpop.f32.mrf.mxu0
      %v1677 = vadd.f32 %v1588, %v1676
      %v1678 = vpop.f32.mrf.mxu0
      %v1679 = vadd.f32 %v1590, %v1678
      %1680 = vmatmul.bf16.gmra.mxu0 %v634
      %v1681 = vpop.f32.mrf.mxu0
      %v1682 = vadd.f32 %v1593, %v1681
      %v1683 = vpop.f32.mrf.mxu0
      %v1684 = vadd.f32 %v1595, %v1683
      %1685 = vmatmul.bf16.gmra.mxu0 %v637
      %v1686 = vpop.f32.mrf.mxu0
      %v1687 = vadd.f32 %v1598, %v1686
      %v1688 = vpop.f32.mrf.mxu0
      %v1689 = vadd.f32 %v1600, %v1688
      %1690 = vmatmul.bf16.gmra.mxu0 %v640
      %v1691 = vpop.f32.mrf.mxu0
      %v1692 = vadd.f32 %v1603, %v1691
      %v1693 = vpop.f32.mrf.mxu0
      %v1694 = vadd.f32 %v1605, %v1693
      %1695 = vmatmul.bf16.gmra.mxu0 %v643
      %v1696 = vpop.f32.mrf.mxu0
      %v1697 = vadd.f32 %v1608, %v1696
      %v1698 = vpop.f32.mrf.mxu0
      %v1699 = vadd.f32 %v1610, %v1698
      %1700 = vmatmul.bf16.gmra.mxu0 %v646
      %v1701 = vpop.f32.mrf.mxu0
      %v1702 = vadd.f32 %v1613, %v1701
      %v1703 = vpop.f32.mrf.mxu0
      %v1704 = vadd.f32 %v1615, %v1703
      %1705 = vmatmul.bf16.gmra.mxu0 %v649
      %v1706 = vpop.f32.mrf.mxu0
      %v1707 = vadd.f32 %v1618, %v1706
      %v1708 = vpop.f32.mrf.mxu0
      %v1709 = vadd.f32 %v1620, %v1708
      %1710 = vmatmul.bf16.gmra.mxu0 %v652
      %v1711 = vpop.f32.mrf.mxu0
      %v1712 = vadd.f32 %v1623, %v1711
      %v1713 = vpop.f32.mrf.mxu0
      %v1714 = vadd.f32 %v1625, %v1713
      %1715 = vdwg.mxu0
      %s1716 = scalar_lea.vmem [#allocation2], 48
      %v1717 = vld [vmem:[%s1716] sm:$0xff]
      %v1718 = vld [vmem:[%s1716 + $0x8] sm:$0xff]
      %v1719 = vld [vmem:[%s1716 + $0x18] sm:$0xff]
      %v1720 = vld [vmem:[%s1716 + $0x20] sm:$0xff]
      %v1721 = vld [vmem:[%s1716 + $0x30] sm:$0xff]
      %v1722 = vld [vmem:[%s1716 + $0x38] sm:$0xff]
      %v1723 = vld [vmem:[%s1716 + $0x48] sm:$0xff]
      %v1724 = vld [vmem:[%s1716 + $0x50] sm:$0xff]
      %v1725 = vld [vmem:[%s1716 + $0x60] sm:$0xff]
      %v1726 = vld [vmem:[%s1716 + $0x68] sm:$0xff]
      %v1727 = vld [vmem:[%s1716 + $0x78] sm:$0xff]
      %v1728 = vld [vmem:[%s1716 + $0x80] sm:$0xff]
      %v1729 = vld [vmem:[%s1716 + $0x90] sm:$0xff]
      %v1730 = vld [vmem:[%s1716 + $0x98] sm:$0xff]
      %v1731 = vld [vmem:[%s1716 + $0xa8] sm:$0xff]
      %v1732 = vld [vmem:[%s1716 + $0xb0] sm:$0xff]
      %v1733 = vld [vmem:[%s1716 + $0xc0] sm:$0xff]
      %v1734 = vld [vmem:[%s1716 + $0xc8] sm:$0xff]
      %v1735 = vld [vmem:[%s1716 + $0xd8] sm:$0xff]
      %v1736 = vld [vmem:[%s1716 + $0xe0] sm:$0xff]
      %v1737 = vld [vmem:[%s1716 + $0xf0] sm:$0xff]
      %v1738 = vld [vmem:[%s1716 + $0xf8] sm:$0xff]
      %v1739 = vld [vmem:[%s1716 + $0x108] sm:$0xff]
      %v1740 = vld [vmem:[%s1716 + $0x110] sm:$0xff]
      %v1741 = vld [vmem:[%s1716 + $0x120] sm:$0xff]
      %v1742 = vld [vmem:[%s1716 + $0x128] sm:$0xff]
      %v1743 = vld [vmem:[%s1716 + $0x138] sm:$0xff]
      %v1744 = vld [vmem:[%s1716 + $0x140] sm:$0xff]
      %v1745 = vld [vmem:[%s1716 + $0x150] sm:$0xff]
      %v1746 = vld [vmem:[%s1716 + $0x158] sm:$0xff]
      %v1747 = vld [vmem:[%s1716 + $0x168] sm:$0xff]
      %v1748 = vld [vmem:[%s1716 + $0x170] sm:$0xff]
      %v1749 = vld [vmem:[%s1716 + $0x1] sm:$0xff]
      %v1750 = vld [vmem:[%s1716 + $0x9] sm:$0xff]
      %v1751 = vld [vmem:[%s1716 + $0x19] sm:$0xff]
      %v1752 = vld [vmem:[%s1716 + $0x21] sm:$0xff]
      %v1753 = vld [vmem:[%s1716 + $0x31] sm:$0xff]
      %v1754 = vld [vmem:[%s1716 + $0x39] sm:$0xff]
      %v1755 = vld [vmem:[%s1716 + $0x49] sm:$0xff]
      %v1756 = vld [vmem:[%s1716 + $0x51] sm:$0xff]
      %v1757 = vld [vmem:[%s1716 + $0x61] sm:$0xff]
      %v1758 = vld [vmem:[%s1716 + $0x69] sm:$0xff]
      %v1759 = vld [vmem:[%s1716 + $0x79] sm:$0xff]
      %v1760 = vld [vmem:[%s1716 + $0x81] sm:$0xff]
      %v1761 = vld [vmem:[%s1716 + $0x91] sm:$0xff]
      %v1762 = vld [vmem:[%s1716 + $0x99] sm:$0xff]
      %v1763 = vld [vmem:[%s1716 + $0xa9] sm:$0xff]
      %v1764 = vld [vmem:[%s1716 + $0xb1] sm:$0xff]
      %v1765 = vld [vmem:[%s1716 + $0xc1] sm:$0xff]
      %v1766 = vld [vmem:[%s1716 + $0xc9] sm:$0xff]
      %v1767 = vld [vmem:[%s1716 + $0xd9] sm:$0xff]
      %v1768 = vld [vmem:[%s1716 + $0xe1] sm:$0xff]
      %v1769 = vld [vmem:[%s1716 + $0xf1] sm:$0xff]
      %v1770 = vld [vmem:[%s1716 + $0xf9] sm:$0xff]
      %v1771 = vld [vmem:[%s1716 + $0x109] sm:$0xff]
      %v1772 = vld [vmem:[%s1716 + $0x111] sm:$0xff]
      %v1773 = vld [vmem:[%s1716 + $0x121] sm:$0xff]
      %v1774 = vld [vmem:[%s1716 + $0x129] sm:$0xff]
      %v1775 = vld [vmem:[%s1716 + $0x139] sm:$0xff]
      %v1776 = vld [vmem:[%s1716 + $0x141] sm:$0xff]
      %v1777 = vld [vmem:[%s1716 + $0x151] sm:$0xff]
      %v1778 = vld [vmem:[%s1716 + $0x159] sm:$0xff]
      %v1779 = vld [vmem:[%s1716 + $0x169] sm:$0xff]
      %v1780 = vld [vmem:[%s1716 + $0x171] sm:$0xff]
      %v1781 = vld [vmem:[%s1716 + $0x2] sm:$0xff]
      %v1782 = vld [vmem:[%s1716 + $0xa] sm:$0xff]
      %v1783 = vld [vmem:[%s1716 + $0x1a] sm:$0xff]
      %v1784 = vld [vmem:[%s1716 + $0x22] sm:$0xff]
      %v1785 = vld [vmem:[%s1716 + $0x32] sm:$0xff]
      %v1786 = vld [vmem:[%s1716 + $0x3a] sm:$0xff]
      %v1787 = vld [vmem:[%s1716 + $0x4a] sm:$0xff]
      %v1788 = vld [vmem:[%s1716 + $0x52] sm:$0xff]
      %v1789 = vld [vmem:[%s1716 + $0x62] sm:$0xff]
      %v1790 = vld [vmem:[%s1716 + $0x6a] sm:$0xff]
      %v1791 = vld [vmem:[%s1716 + $0x7a] sm:$0xff]
      %v1792 = vld [vmem:[%s1716 + $0x82] sm:$0xff]
      %v1793 = vld [vmem:[%s1716 + $0x92] sm:$0xff]
      %v1794 = vld [vmem:[%s1716 + $0x9a] sm:$0xff]
      %v1795 = vld [vmem:[%s1716 + $0xaa] sm:$0xff]
      %v1796 = vld [vmem:[%s1716 + $0xb2] sm:$0xff]
      %v1797 = vld [vmem:[%s1716 + $0xc2] sm:$0xff]
      %v1798 = vld [vmem:[%s1716 + $0xca] sm:$0xff]
      %v1799 = vld [vmem:[%s1716 + $0xda] sm:$0xff]
      %v1800 = vld [vmem:[%s1716 + $0xe2] sm:$0xff]
      %v1801 = vld [vmem:[%s1716 + $0xf2] sm:$0xff]
      %v1802 = vld [vmem:[%s1716 + $0xfa] sm:$0xff]
      %v1803 = vld [vmem:[%s1716 + $0x10a] sm:$0xff]
      %v1804 = vld [vmem:[%s1716 + $0x112] sm:$0xff]
      %v1805 = vld [vmem:[%s1716 + $0x122] sm:$0xff]
      %v1806 = vld [vmem:[%s1716 + $0x12a] sm:$0xff]
      %v1807 = vld [vmem:[%s1716 + $0x13a] sm:$0xff]
      %v1808 = vld [vmem:[%s1716 + $0x142] sm:$0xff]
      %v1809 = vld [vmem:[%s1716 + $0x152] sm:$0xff]
      %v1810 = vld [vmem:[%s1716 + $0x15a] sm:$0xff]
      %v1811 = vld [vmem:[%s1716 + $0x16a] sm:$0xff]
      %v1812 = vld [vmem:[%s1716 + $0x172] sm:$0xff]
      %v1813 = vpack.c.bf16 %v1718, %v1717
      %v1814 = vpack.c.bf16 %v1750, %v1749
      %v1815 = vpack.c.bf16 %v1782, %v1781
      %v1816 = vpack.c.bf16 %v1720, %v1719
      %v1817 = vpack.c.bf16 %v1752, %v1751
      %v1818 = vpack.c.bf16 %v1784, %v1783
      %v1819 = vpack.c.bf16 %v1722, %v1721
      %v1820 = vpack.c.bf16 %v1754, %v1753
      %v1821 = vpack.c.bf16 %v1786, %v1785
      %v1822 = vpack.c.bf16 %v1724, %v1723
      %v1823 = vpack.c.bf16 %v1756, %v1755
      %v1824 = vpack.c.bf16 %v1788, %v1787
      %v1825 = vpack.c.bf16 %v1726, %v1725
      %v1826 = vpack.c.bf16 %v1758, %v1757
      %v1827 = vpack.c.bf16 %v1790, %v1789
      %v1828 = vpack.c.bf16 %v1728, %v1727
      %v1829 = vpack.c.bf16 %v1760, %v1759
      %v1830 = vpack.c.bf16 %v1792, %v1791
      %v1831 = vpack.c.bf16 %v1730, %v1729
      %v1832 = vpack.c.bf16 %v1762, %v1761
      %v1833 = vpack.c.bf16 %v1794, %v1793
      %v1834 = vpack.c.bf16 %v1732, %v1731
      %v1835 = vpack.c.bf16 %v1764, %v1763
      %v1836 = vpack.c.bf16 %v1796, %v1795
      %v1837 = vpack.c.bf16 %v1734, %v1733
      %v1838 = vpack.c.bf16 %v1766, %v1765
      %v1839 = vpack.c.bf16 %v1798, %v1797
      %v1840 = vpack.c.bf16 %v1736, %v1735
      %v1841 = vpack.c.bf16 %v1768, %v1767
      %v1842 = vpack.c.bf16 %v1800, %v1799
      %v1843 = vpack.c.bf16 %v1738, %v1737
      %v1844 = vpack.c.bf16 %v1770, %v1769
      %v1845 = vpack.c.bf16 %v1802, %v1801
      %v1846 = vpack.c.bf16 %v1740, %v1739
      %v1847 = vpack.c.bf16 %v1772, %v1771
      %v1848 = vpack.c.bf16 %v1804, %v1803
      %v1849 = vpack.c.bf16 %v1742, %v1741
      %v1850 = vpack.c.bf16 %v1774, %v1773
      %v1851 = vpack.c.bf16 %v1806, %v1805
      %v1852 = vpack.c.bf16 %v1744, %v1743
      %v1853 = vpack.c.bf16 %v1776, %v1775
      %v1854 = vpack.c.bf16 %v1808, %v1807
      %v1855 = vpack.c.bf16 %v1746, %v1745
      %v1856 = vpack.c.bf16 %v1778, %v1777
      %v1857 = vpack.c.bf16 %v1810, %v1809
      %v1858 = vpack.c.bf16 %v1748, %v1747
      %v1859 = vpack.c.bf16 %v1780, %v1779
      %v1860 = vpack.c.bf16 %v1812, %v1811
      %s1861 = scalar_lea.vmem %s3, 384
      %v1862 = vld [vmem:[%s1861] sm:$0xf]
      %v1863 = vld [vmem:[%s1861 + $0x4] sm:$0xf]
      %v1864 = vld [vmem:[%s1861 + $0x8] sm:$0xf]
      %v1865 = vld [vmem:[%s1861 + $0xc] sm:$0xf]
      %v1866 = vld [vmem:[%s1861 + $0x10] sm:$0xf]
      %v1867 = vld [vmem:[%s1861 + $0x14] sm:$0xf]
      %v1868 = vld [vmem:[%s1861 + $0x18] sm:$0xf]
      %v1869 = vld [vmem:[%s1861 + $0x1c] sm:$0xf]
      %v1870 = vld [vmem:[%s1861 + $0x20] sm:$0xf]
      %v1871 = vld [vmem:[%s1861 + $0x24] sm:$0xf]
      %v1872 = vld [vmem:[%s1861 + $0x28] sm:$0xf]
      %v1873 = vld [vmem:[%s1861 + $0x2c] sm:$0xf]
      %v1874 = vld [vmem:[%s1861 + $0x30] sm:$0xf]
      %v1875 = vld [vmem:[%s1861 + $0x34] sm:$0xf]
      %v1876 = vld [vmem:[%s1861 + $0x38] sm:$0xf]
      %v1877 = vld [vmem:[%s1861 + $0x3c] sm:$0xf]
      %v1878 = vld [vmem:[%s1861 + $0x40] sm:$0xf]
      %v1879 = vld [vmem:[%s1861 + $0x44] sm:$0xf]
      %v1880 = vld [vmem:[%s1861 + $0x48] sm:$0xf]
      %v1881 = vld [vmem:[%s1861 + $0x4c] sm:$0xf]
      %v1882 = vld [vmem:[%s1861 + $0x50] sm:$0xf]
      %v1883 = vld [vmem:[%s1861 + $0x54] sm:$0xf]
      %v1884 = vld [vmem:[%s1861 + $0x58] sm:$0xf]
      %v1885 = vld [vmem:[%s1861 + $0x5c] sm:$0xf]
      %v1886 = vld [vmem:[%s1861 + $0x60] sm:$0xf]
      %v1887 = vld [vmem:[%s1861 + $0x64] sm:$0xf]
      %v1888 = vld [vmem:[%s1861 + $0x68] sm:$0xf]
      %v1889 = vld [vmem:[%s1861 + $0x6c] sm:$0xf]
      %v1890 = vld [vmem:[%s1861 + $0x70] sm:$0xf]
      %v1891 = vld [vmem:[%s1861 + $0x74] sm:$0xf]
      %v1892 = vld [vmem:[%s1861 + $0x78] sm:$0xf]
      %v1893 = vld [vmem:[%s1861 + $0x7c] sm:$0xf]
      %v1894 = vld [vmem:[%s1861 + $0x80] sm:$0xf]
      %v1895 = vld [vmem:[%s1861 + $0x84] sm:$0xf]
      %v1896 = vld [vmem:[%s1861 + $0x88] sm:$0xf]
      %v1897 = vld [vmem:[%s1861 + $0x8c] sm:$0xf]
      %v1898 = vld [vmem:[%s1861 + $0x90] sm:$0xf]
      %v1899 = vld [vmem:[%s1861 + $0x94] sm:$0xf]
      %v1900 = vld [vmem:[%s1861 + $0x98] sm:$0xf]
      %v1901 = vld [vmem:[%s1861 + $0x9c] sm:$0xf]
      %v1902 = vld [vmem:[%s1861 + $0xa0] sm:$0xf]
      %v1903 = vld [vmem:[%s1861 + $0xa4] sm:$0xf]
      %v1904 = vld [vmem:[%s1861 + $0xa8] sm:$0xf]
      %v1905 = vld [vmem:[%s1861 + $0xac] sm:$0xf]
      %v1906 = vld [vmem:[%s1861 + $0xb0] sm:$0xf]
      %v1907 = vld [vmem:[%s1861 + $0xb4] sm:$0xf]
      %v1908 = vld [vmem:[%s1861 + $0xb8] sm:$0xf]
      %v1909 = vld [vmem:[%s1861 + $0xbc] sm:$0xf]
      %v1958 = vunpack.c.l.b16 %v1862
      %v1959 = vunpack.c.l.b16 %v1863
      %v1960 = vunpack.c.l.b16 %v1864
      %v1961 = vunpack.c.l.b16 %v1865
      %v1962 = vunpack.c.l.b16 %v1866
      %v1963 = vunpack.c.l.b16 %v1867
      %v1964 = vunpack.c.l.b16 %v1868
      %v1965 = vunpack.c.l.b16 %v1869
      %v1966 = vunpack.c.l.b16 %v1870
      %v1967 = vunpack.c.l.b16 %v1871
      %v1968 = vunpack.c.l.b16 %v1872
      %v1969 = vunpack.c.l.b16 %v1873
      %v1970 = vunpack.c.l.b16 %v1874
      %v1971 = vunpack.c.l.b16 %v1875
      %v1972 = vunpack.c.l.b16 %v1876
      %v1973 = vunpack.c.l.b16 %v1877
      %v1974 = vunpack.c.l.b16 %v1878
      %v1975 = vunpack.c.l.b16 %v1879
      %v1976 = vunpack.c.l.b16 %v1880
      %v1977 = vunpack.c.l.b16 %v1881
      %v1978 = vunpack.c.l.b16 %v1882
      %v1979 = vunpack.c.l.b16 %v1883
      %v1980 = vunpack.c.l.b16 %v1884
      %v1981 = vunpack.c.l.b16 %v1885
      %v1982 = vunpack.c.l.b16 %v1886
      %v1983 = vunpack.c.l.b16 %v1887
      %v1984 = vunpack.c.l.b16 %v1888
      %v1985 = vunpack.c.l.b16 %v1889
      %v1986 = vunpack.c.l.b16 %v1890
      %v1987 = vunpack.c.l.b16 %v1891
      %v1988 = vunpack.c.l.b16 %v1892
      %v1989 = vunpack.c.l.b16 %v1893
      %v1990 = vunpack.c.l.b16 %v1894
      %v1991 = vunpack.c.l.b16 %v1895
      %v1992 = vunpack.c.l.b16 %v1896
      %v1993 = vunpack.c.l.b16 %v1897
      %v1994 = vunpack.c.l.b16 %v1898
      %v1995 = vunpack.c.l.b16 %v1899
      %v1996 = vunpack.c.l.b16 %v1900
      %v1997 = vunpack.c.l.b16 %v1901
      %v1998 = vunpack.c.l.b16 %v1902
      %v1999 = vunpack.c.l.b16 %v1903
      %v2000 = vunpack.c.l.b16 %v1904
      %v2001 = vunpack.c.l.b16 %v1905
      %v2002 = vunpack.c.l.b16 %v1906
      %v2003 = vunpack.c.l.b16 %v1907
      %v2004 = vunpack.c.l.b16 %v1908
      %v2005 = vunpack.c.l.b16 %v1909
      %v2006 = vpack.c.b16 %v1959, %v1958
      %v2007 = vpack.c.b16 %v1961, %v1960
      %v2008 = vpack.c.b16 %v1963, %v1962
      %v2009 = vpack.c.b16 %v1965, %v1964
      %v2010 = vpack.c.b16 %v1967, %v1966
      %v2011 = vpack.c.b16 %v1969, %v1968
      %v2012 = vpack.c.b16 %v1971, %v1970
      %v2013 = vpack.c.b16 %v1973, %v1972
      %v2014 = vpack.c.b16 %v1975, %v1974
      %v2015 = vpack.c.b16 %v1977, %v1976
      %v2016 = vpack.c.b16 %v1979, %v1978
      %v2017 = vpack.c.b16 %v1981, %v1980
      %v2018 = vpack.c.b16 %v1983, %v1982
      %v2019 = vpack.c.b16 %v1985, %v1984
      %v2020 = vpack.c.b16 %v1987, %v1986
      %v2021 = vpack.c.b16 %v1989, %v1988
      %v2022 = vpack.c.b16 %v1991, %v1990
      %v2023 = vpack.c.b16 %v1993, %v1992
      %v2024 = vpack.c.b16 %v1995, %v1994
      %v2025 = vpack.c.b16 %v1997, %v1996
      %v2026 = vpack.c.b16 %v1999, %v1998
      %v2027 = vpack.c.b16 %v2001, %v2000
      %v2028 = vpack.c.b16 %v2003, %v2002
      %v2029 = vpack.c.b16 %v2005, %v2004
      %2054 = vmatpush.bf16.msra.mxu0 %v2013
      %2055 = vmatpush.bf16.msra.mxu0 %v2012
      %2056 = vmatpush.bf16.msra.mxu0 %v2011
      %2057 = vmatpush.bf16.msra.mxu0 %v2010
      %2058 = vmatpush.bf16.msra.mxu0 %v2009
      %2059 = vmatpush.bf16.msra.mxu0 %v2008
      %2060 = vmatpush.bf16.msra.mxu0 %v2007
      %2061 = vmatpush.bf16.msra.mxu0 %v2006
      %2062 = vmatmul.bf16.gmra.mxu0 %v1813
      %v2063 = vpop.f32.mrf.mxu0
      %v2064 = vadd.f32 0.0, %v2063
      %v2065 = vpop.f32.mrf.mxu0
      %v2066 = vadd.f32 0.0, %v2065
      %2067 = vmatmul.bf16.gmra.mxu0 %v1816
      %v2068 = vpop.f32.mrf.mxu0
      %v2069 = vadd.f32 0.0, %v2068
      %v2070 = vpop.f32.mrf.mxu0
      %v2071 = vadd.f32 0.0, %v2070
      %2072 = vmatmul.bf16.gmra.mxu0 %v1819
      %v2073 = vpop.f32.mrf.mxu0
      %v2074 = vadd.f32 0.0, %v2073
      %v2075 = vpop.f32.mrf.mxu0
      %v2076 = vadd.f32 0.0, %v2075
      %2077 = vmatmul.bf16.gmra.mxu0 %v1822
      %v2078 = vpop.f32.mrf.mxu0
      %v2079 = vadd.f32 0.0, %v2078
      %v2080 = vpop.f32.mrf.mxu0
      %v2081 = vadd.f32 0.0, %v2080
      %2082 = vmatmul.bf16.gmra.mxu0 %v1825
      %v2083 = vpop.f32.mrf.mxu0
      %v2084 = vadd.f32 0.0, %v2083
      %v2085 = vpop.f32.mrf.mxu0
      %v2086 = vadd.f32 0.0, %v2085
      %2087 = vmatmul.bf16.gmra.mxu0 %v1828
      %v2088 = vpop.f32.mrf.mxu0
      %v2089 = vadd.f32 0.0, %v2088
      %v2090 = vpop.f32.mrf.mxu0
      %v2091 = vadd.f32 0.0, %v2090
      %2092 = vmatmul.bf16.gmra.mxu0 %v1831
      %v2093 = vpop.f32.mrf.mxu0
      %v2094 = vadd.f32 0.0, %v2093
      %v2095 = vpop.f32.mrf.mxu0
      %v2096 = vadd.f32 0.0, %v2095
      %2097 = vmatmul.bf16.gmra.mxu0 %v1834
      %v2098 = vpop.f32.mrf.mxu0
      %v2099 = vadd.f32 0.0, %v2098
      %v2100 = vpop.f32.mrf.mxu0
      %v2101 = vadd.f32 0.0, %v2100
      %2102 = vmatmul.bf16.gmra.mxu0 %v1837
      %v2103 = vpop.f32.mrf.mxu0
      %v2104 = vadd.f32 0.0, %v2103
      %v2105 = vpop.f32.mrf.mxu0
      %v2106 = vadd.f32 0.0, %v2105
      %2107 = vmatmul.bf16.gmra.mxu0 %v1840
      %v2108 = vpop.f32.mrf.mxu0
      %v2109 = vadd.f32 0.0, %v2108
      %v2110 = vpop.f32.mrf.mxu0
      %v2111 = vadd.f32 0.0, %v2110
      %2112 = vmatmul.bf16.gmra.mxu0 %v1843
      %v2113 = vpop.f32.mrf.mxu0
      %v2114 = vadd.f32 0.0, %v2113
      %v2115 = vpop.f32.mrf.mxu0
      %v2116 = vadd.f32 0.0, %v2115
      %2117 = vmatmul.bf16.gmra.mxu0 %v1846
      %v2118 = vpop.f32.mrf.mxu0
      %v2119 = vadd.f32 0.0, %v2118
      %v2120 = vpop.f32.mrf.mxu0
      %v2121 = vadd.f32 0.0, %v2120
      %2122 = vmatmul.bf16.gmra.mxu0 %v1849
      %v2123 = vpop.f32.mrf.mxu0
      %v2124 = vadd.f32 0.0, %v2123
      %v2125 = vpop.f32.mrf.mxu0
      %v2126 = vadd.f32 0.0, %v2125
      %2127 = vmatmul.bf16.gmra.mxu0 %v1852
      %v2128 = vpop.f32.mrf.mxu0
      %v2129 = vadd.f32 0.0, %v2128
      %v2130 = vpop.f32.mrf.mxu0
      %v2131 = vadd.f32 0.0, %v2130
      %2132 = vmatmul.bf16.gmra.mxu0 %v1855
      %v2133 = vpop.f32.mrf.mxu0
      %v2134 = vadd.f32 0.0, %v2133
      %v2135 = vpop.f32.mrf.mxu0
      %v2136 = vadd.f32 0.0, %v2135
      %2137 = vmatmul.bf16.gmra.mxu0 %v1858
      %v2138 = vpop.f32.mrf.mxu0
      %v2139 = vadd.f32 0.0, %v2138
      %v2140 = vpop.f32.mrf.mxu0
      %v2141 = vadd.f32 0.0, %v2140
      %2142 = vdwg.mxu0
      %2143 = vmatpush.bf16.msra.mxu0 %v2021
      %2144 = vmatpush.bf16.msra.mxu0 %v2020
      %2145 = vmatpush.bf16.msra.mxu0 %v2019
      %2146 = vmatpush.bf16.msra.mxu0 %v2018
      %2147 = vmatpush.bf16.msra.mxu0 %v2017
      %2148 = vmatpush.bf16.msra.mxu0 %v2016
      %2149 = vmatpush.bf16.msra.mxu0 %v2015
      %2150 = vmatpush.bf16.msra.mxu0 %v2014
      %2151 = vmatmul.bf16.gmra.mxu0 %v1814
      %v2152 = vpop.f32.mrf.mxu0
      %v2153 = vadd.f32 %v2064, %v2152
      %v2154 = vpop.f32.mrf.mxu0
      %v2155 = vadd.f32 %v2066, %v2154
      %2156 = vmatmul.bf16.gmra.mxu0 %v1817
      %v2157 = vpop.f32.mrf.mxu0
      %v2158 = vadd.f32 %v2069, %v2157
      %v2159 = vpop.f32.mrf.mxu0
      %v2160 = vadd.f32 %v2071, %v2159
      %2161 = vmatmul.bf16.gmra.mxu0 %v1820
      %v2162 = vpop.f32.mrf.mxu0
      %v2163 = vadd.f32 %v2074, %v2162
      %v2164 = vpop.f32.mrf.mxu0
      %v2165 = vadd.f32 %v2076, %v2164
      %2166 = vmatmul.bf16.gmra.mxu0 %v1823
      %v2167 = vpop.f32.mrf.mxu0
      %v2168 = vadd.f32 %v2079, %v2167
      %v2169 = vpop.f32.mrf.mxu0
      %v2170 = vadd.f32 %v2081, %v2169
      %2171 = vmatmul.bf16.gmra.mxu0 %v1826
      %v2172 = vpop.f32.mrf.mxu0
      %v2173 = vadd.f32 %v2084, %v2172
      %v2174 = vpop.f32.mrf.mxu0
      %v2175 = vadd.f32 %v2086, %v2174
      %2176 = vmatmul.bf16.gmra.mxu0 %v1829
      %v2177 = vpop.f32.mrf.mxu0
      %v2178 = vadd.f32 %v2089, %v2177
      %v2179 = vpop.f32.mrf.mxu0
      %v2180 = vadd.f32 %v2091, %v2179
      %2181 = vmatmul.bf16.gmra.mxu0 %v1832
      %v2182 = vpop.f32.mrf.mxu0
      %v2183 = vadd.f32 %v2094, %v2182
      %v2184 = vpop.f32.mrf.mxu0
      %v2185 = vadd.f32 %v2096, %v2184
      %2186 = vmatmul.bf16.gmra.mxu0 %v1835
      %v2187 = vpop.f32.mrf.mxu0
      %v2188 = vadd.f32 %v2099, %v2187
      %v2189 = vpop.f32.mrf.mxu0
      %v2190 = vadd.f32 %v2101, %v2189
      %2191 = vmatmul.bf16.gmra.mxu0 %v1838
      %v2192 = vpop.f32.mrf.mxu0
      %v2193 = vadd.f32 %v2104, %v2192
      %v2194 = vpop.f32.mrf.mxu0
      %v2195 = vadd.f32 %v2106, %v2194
      %2196 = vmatmul.bf16.gmra.mxu0 %v1841
      %v2197 = vpop.f32.mrf.mxu0
      %v2198 = vadd.f32 %v2109, %v2197
      %v2199 = vpop.f32.mrf.mxu0
      %v2200 = vadd.f32 %v2111, %v2199
      %2201 = vmatmul.bf16.gmra.mxu0 %v1844
      %v2202 = vpop.f32.mrf.mxu0
      %v2203 = vadd.f32 %v2114, %v2202
      %v2204 = vpop.f32.mrf.mxu0
      %v2205 = vadd.f32 %v2116, %v2204
      %2206 = vmatmul.bf16.gmra.mxu0 %v1847
      %v2207 = vpop.f32.mrf.mxu0
      %v2208 = vadd.f32 %v2119, %v2207
      %v2209 = vpop.f32.mrf.mxu0
      %v2210 = vadd.f32 %v2121, %v2209
      %2211 = vmatmul.bf16.gmra.mxu0 %v1850
      %v2212 = vpop.f32.mrf.mxu0
      %v2213 = vadd.f32 %v2124, %v2212
      %v2214 = vpop.f32.mrf.mxu0
      %v2215 = vadd.f32 %v2126, %v2214
      %2216 = vmatmul.bf16.gmra.mxu0 %v1853
      %v2217 = vpop.f32.mrf.mxu0
      %v2218 = vadd.f32 %v2129, %v2217
      %v2219 = vpop.f32.mrf.mxu0
      %v2220 = vadd.f32 %v2131, %v2219
      %2221 = vmatmul.bf16.gmra.mxu0 %v1856
      %v2222 = vpop.f32.mrf.mxu0
      %v2223 = vadd.f32 %v2134, %v2222
      %v2224 = vpop.f32.mrf.mxu0
      %v2225 = vadd.f32 %v2136, %v2224
      %2226 = vmatmul.bf16.gmra.mxu0 %v1859
      %v2227 = vpop.f32.mrf.mxu0
      %v2228 = vadd.f32 %v2139, %v2227
      %v2229 = vpop.f32.mrf.mxu0
      %v2230 = vadd.f32 %v2141, %v2229
      %2231 = vdwg.mxu0
      %2232 = vmatpush.bf16.msra.mxu0 %v2029
      %2233 = vmatpush.bf16.msra.mxu0 %v2028
      %2234 = vmatpush.bf16.msra.mxu0 %v2027
      %2235 = vmatpush.bf16.msra.mxu0 %v2026
      %2236 = vmatpush.bf16.msra.mxu0 %v2025
      %2237 = vmatpush.bf16.msra.mxu0 %v2024
      %2238 = vmatpush.bf16.msra.mxu0 %v2023
      %2239 = vmatpush.bf16.msra.mxu0 %v2022
      %2240 = vmatmul.bf16.gmra.mxu0 %v1815
      %v2241 = vpop.f32.mrf.mxu0
      %v2242 = vadd.f32 %v2153, %v2241
      %v2243 = vpop.f32.mrf.mxu0
      %v2244 = vadd.f32 %v2155, %v2243
      %2245 = vmatmul.bf16.gmra.mxu0 %v1818
      %v2246 = vpop.f32.mrf.mxu0
      %v2247 = vadd.f32 %v2158, %v2246
      %v2248 = vpop.f32.mrf.mxu0
      %v2249 = vadd.f32 %v2160, %v2248
      %2250 = vmatmul.bf16.gmra.mxu0 %v1821
      %v2251 = vpop.f32.mrf.mxu0
      %v2252 = vadd.f32 %v2163, %v2251
      %v2253 = vpop.f32.mrf.mxu0
      %v2254 = vadd.f32 %v2165, %v2253
      %2255 = vmatmul.bf16.gmra.mxu0 %v1824
      %v2256 = vpop.f32.mrf.mxu0
      %v2257 = vadd.f32 %v2168, %v2256
      %v2258 = vpop.f32.mrf.mxu0
      %v2259 = vadd.f32 %v2170, %v2258
      %2260 = vmatmul.bf16.gmra.mxu0 %v1827
      %v2261 = vpop.f32.mrf.mxu0
      %v2262 = vadd.f32 %v2173, %v2261
      %v2263 = vpop.f32.mrf.mxu0
      %v2264 = vadd.f32 %v2175, %v2263
      %2265 = vmatmul.bf16.gmra.mxu0 %v1830
      %v2266 = vpop.f32.mrf.mxu0
      %v2267 = vadd.f32 %v2178, %v2266
      %v2268 = vpop.f32.mrf.mxu0
      %v2269 = vadd.f32 %v2180, %v2268
      %2270 = vmatmul.bf16.gmra.mxu0 %v1833
      %v2271 = vpop.f32.mrf.mxu0
      %v2272 = vadd.f32 %v2183, %v2271
      %v2273 = vpop.f32.mrf.mxu0
      %v2274 = vadd.f32 %v2185, %v2273
      %2275 = vmatmul.bf16.gmra.mxu0 %v1836
      %v2276 = vpop.f32.mrf.mxu0
      %v2277 = vadd.f32 %v2188, %v2276
      %v2278 = vpop.f32.mrf.mxu0
      %v2279 = vadd.f32 %v2190, %v2278
      %2280 = vmatmul.bf16.gmra.mxu0 %v1839
      %v2281 = vpop.f32.mrf.mxu0
      %v2282 = vadd.f32 %v2193, %v2281
      %v2283 = vpop.f32.mrf.mxu0
      %v2284 = vadd.f32 %v2195, %v2283
      %2285 = vmatmul.bf16.gmra.mxu0 %v1842
      %v2286 = vpop.f32.mrf.mxu0
      %v2287 = vadd.f32 %v2198, %v2286
      %v2288 = vpop.f32.mrf.mxu0
      %v2289 = vadd.f32 %v2200, %v2288
      %2290 = vmatmul.bf16.gmra.mxu0 %v1845
      %v2291 = vpop.f32.mrf.mxu0
      %v2292 = vadd.f32 %v2203, %v2291
      %v2293 = vpop.f32.mrf.mxu0
      %v2294 = vadd.f32 %v2205, %v2293
      %2295 = vmatmul.bf16.gmra.mxu0 %v1848
      %v2296 = vpop.f32.mrf.mxu0
      %v2297 = vadd.f32 %v2208, %v2296
      %v2298 = vpop.f32.mrf.mxu0
      %v2299 = vadd.f32 %v2210, %v2298
      %2300 = vmatmul.bf16.gmra.mxu0 %v1851
      %v2301 = vpop.f32.mrf.mxu0
      %v2302 = vadd.f32 %v2213, %v2301
      %v2303 = vpop.f32.mrf.mxu0
      %v2304 = vadd.f32 %v2215, %v2303
      %2305 = vmatmul.bf16.gmra.mxu0 %v1854
      %v2306 = vpop.f32.mrf.mxu0
      %v2307 = vadd.f32 %v2218, %v2306
      %v2308 = vpop.f32.mrf.mxu0
      %v2309 = vadd.f32 %v2220, %v2308
      %2310 = vmatmul.bf16.gmra.mxu0 %v1857
      %v2311 = vpop.f32.mrf.mxu0
      %v2312 = vadd.f32 %v2223, %v2311
      %v2313 = vpop.f32.mrf.mxu0
      %v2314 = vadd.f32 %v2225, %v2313
      %2315 = vmatmul.bf16.gmra.mxu0 %v1860
      %v2316 = vpop.f32.mrf.mxu0
      %v2317 = vadd.f32 %v2228, %v2316
      %v2318 = vpop.f32.mrf.mxu0
      %v2319 = vadd.f32 %v2230, %v2318
      %2320 = vdwg.mxu0
      %v2321 = vadd.f32 %v1637, %v2242
      %v2322 = vadd.f32 %v1639, %v2244
      %v2323 = vadd.f32 %v1642, %v2247
      %v2324 = vadd.f32 %v1644, %v2249
      %v2325 = vadd.f32 %v1647, %v2252
      %v2326 = vadd.f32 %v1649, %v2254
      %v2327 = vadd.f32 %v1652, %v2257
      %v2328 = vadd.f32 %v1654, %v2259
      %v2329 = vadd.f32 %v1657, %v2262
      %v2330 = vadd.f32 %v1659, %v2264
      %v2331 = vadd.f32 %v1662, %v2267
      %v2332 = vadd.f32 %v1664, %v2269
      %v2333 = vadd.f32 %v1667, %v2272
      %v2334 = vadd.f32 %v1669, %v2274
      %v2335 = vadd.f32 %v1672, %v2277
      %v2336 = vadd.f32 %v1674, %v2279
      %v2337 = vadd.f32 %v1677, %v2282
      %v2338 = vadd.f32 %v1679, %v2284
      %v2339 = vadd.f32 %v1682, %v2287
      %v2340 = vadd.f32 %v1684, %v2289
      %v2341 = vadd.f32 %v1687, %v2292
      %v2342 = vadd.f32 %v1689, %v2294
      %v2343 = vadd.f32 %v1692, %v2297
      %v2344 = vadd.f32 %v1694, %v2299
      %v2345 = vadd.f32 %v1697, %v2302
      %v2346 = vadd.f32 %v1699, %v2304
      %v2347 = vadd.f32 %v1702, %v2307
      %v2348 = vadd.f32 %v1704, %v2309
      %v2349 = vadd.f32 %v1707, %v2312
      %v2350 = vadd.f32 %v1709, %v2314
      %v2351 = vadd.f32 %v1712, %v2317
      %v2352 = vadd.f32 %v1714, %v2319
      %v2353 = vadd.f32 %v2321, %v2322
      %v2354 = vadd.f32 %v2353, %v2323
      %v2355 = vadd.f32 %v2354, %v2324
      %v2356 = vadd.f32 %v2355, %v2325
      %v2357 = vadd.f32 %v2356, %v2326
      %v2358 = vadd.f32 %v2357, %v2327
      %v2359 = vadd.f32 %v2358, %v2328
      %v2360 = vadd.f32 %v2359, %v2329
      %v2361 = vadd.f32 %v2360, %v2330
      %v2362 = vadd.f32 %v2361, %v2331
      %v2363 = vadd.f32 %v2362, %v2332
      %v2364 = vadd.f32 %v2363, %v2333
      %v2365 = vadd.f32 %v2364, %v2334
      %v2366 = vadd.f32 %v2365, %v2335
      %v2367 = vadd.f32 %v2366, %v2336
      %v2368 = vadd.f32 %v2367, %v2337
      %v2369 = vadd.f32 %v2368, %v2338
      %v2370 = vadd.f32 %v2369, %v2339
      %v2371 = vadd.f32 %v2370, %v2340
      %v2372 = vadd.f32 %v2371, %v2341
      %v2373 = vadd.f32 %v2372, %v2342
      %v2374 = vadd.f32 %v2373, %v2343
      %v2375 = vadd.f32 %v2374, %v2344
      %v2376 = vadd.f32 %v2375, %v2345
      %v2377 = vadd.f32 %v2376, %v2346
      %v2378 = vadd.f32 %v2377, %v2347
      %v2379 = vadd.f32 %v2378, %v2348
      %v2380 = vadd.f32 %v2379, %v2349
      %v2381 = vadd.f32 %v2380, %v2350
      %v2382 = vadd.f32 %v2381, %v2351
      %v2383 = vadd.f32 %v2382, %v2352
      %v2384 = vrot.slane %v2383, 4
      %v2385 = vadd.f32 %v2383, %v2384
      %v2386 = vrot.slane %v2385, 2
      %v2387 = vadd.f32 %v2385, %v2386
      %v2388 = vrot.slane %v2387, 1
      %v2389 = vadd.f32 %v2387, %v2388
      %v2390 = vmul.f32 %v2389, 0.00390625
      %v2391 = vsub.f32 %v2321, %v2390
      %v2392 = vsub.f32 %v2322, %v2390
      %v2393 = vsub.f32 %v2323, %v2390
      %v2394 = vsub.f32 %v2324, %v2390
      %v2395 = vsub.f32 %v2325, %v2390
      %v2396 = vsub.f32 %v2326, %v2390
      %v2397 = vsub.f32 %v2327, %v2390
      %v2398 = vsub.f32 %v2328, %v2390
      %v2399 = vsub.f32 %v2329, %v2390
      %v2400 = vsub.f32 %v2330, %v2390
      %v2401 = vsub.f32 %v2331, %v2390
      %v2402 = vsub.f32 %v2332, %v2390
      %v2403 = vsub.f32 %v2333, %v2390
      %v2404 = vsub.f32 %v2334, %v2390
      %v2405 = vsub.f32 %v2335, %v2390
      %v2406 = vsub.f32 %v2336, %v2390
      %v2407 = vsub.f32 %v2337, %v2390
      %v2408 = vsub.f32 %v2338, %v2390
      %v2409 = vsub.f32 %v2339, %v2390
      %v2410 = vsub.f32 %v2340, %v2390
      %v2411 = vsub.f32 %v2341, %v2390
      %v2412 = vsub.f32 %v2342, %v2390
      %v2413 = vsub.f32 %v2343, %v2390
      %v2414 = vsub.f32 %v2344, %v2390
      %v2415 = vsub.f32 %v2345, %v2390
      %v2416 = vsub.f32 %v2346, %v2390
      %v2417 = vsub.f32 %v2347, %v2390
      %v2418 = vsub.f32 %v2348, %v2390
      %v2419 = vsub.f32 %v2349, %v2390
      %v2420 = vsub.f32 %v2350, %v2390
      %v2421 = vsub.f32 %v2351, %v2390
      %v2422 = vsub.f32 %v2352, %v2390
      %v2423 = vmul.f32 %v2391, %v2391
      %v2424 = vmul.f32 %v2392, %v2392
      %v2425 = vmul.f32 %v2393, %v2393
      %v2426 = vmul.f32 %v2394, %v2394
      %v2427 = vmul.f32 %v2395, %v2395
      %v2428 = vmul.f32 %v2396, %v2396
      %v2429 = vmul.f32 %v2397, %v2397
      %v2430 = vmul.f32 %v2398, %v2398
      %v2431 = vmul.f32 %v2399, %v2399
      %v2432 = vmul.f32 %v2400, %v2400
      %v2433 = vmul.f32 %v2401, %v2401
      %v2434 = vmul.f32 %v2402, %v2402
      %v2435 = vmul.f32 %v2403, %v2403
      %v2436 = vmul.f32 %v2404, %v2404
      %v2437 = vmul.f32 %v2405, %v2405
      %v2438 = vmul.f32 %v2406, %v2406
      %v2439 = vmul.f32 %v2407, %v2407
      %v2440 = vmul.f32 %v2408, %v2408
      %v2441 = vmul.f32 %v2409, %v2409
      %v2442 = vmul.f32 %v2410, %v2410
      %v2443 = vmul.f32 %v2411, %v2411
      %v2444 = vmul.f32 %v2412, %v2412
      %v2445 = vmul.f32 %v2413, %v2413
      %v2446 = vmul.f32 %v2414, %v2414
      %v2447 = vmul.f32 %v2415, %v2415
      %v2448 = vmul.f32 %v2416, %v2416
      %v2449 = vmul.f32 %v2417, %v2417
      %v2450 = vmul.f32 %v2418, %v2418
      %v2451 = vmul.f32 %v2419, %v2419
      %v2452 = vmul.f32 %v2420, %v2420
      %v2453 = vmul.f32 %v2421, %v2421
      %v2454 = vmul.f32 %v2422, %v2422
      %v2455 = vadd.f32 %v2423, %v2424
      %v2456 = vadd.f32 %v2455, %v2425
      %v2457 = vadd.f32 %v2456, %v2426
      %v2458 = vadd.f32 %v2457, %v2427
      %v2459 = vadd.f32 %v2458, %v2428
      %v2460 = vadd.f32 %v2459, %v2429
      %v2461 = vadd.f32 %v2460, %v2430
      %v2462 = vadd.f32 %v2461, %v2431
      %v2463 = vadd.f32 %v2462, %v2432
      %v2464 = vadd.f32 %v2463, %v2433
      %v2465 = vadd.f32 %v2464, %v2434
      %v2466 = vadd.f32 %v2465, %v2435
      %v2467 = vadd.f32 %v2466, %v2436
      %v2468 = vadd.f32 %v2467, %v2437
      %v2469 = vadd.f32 %v2468, %v2438
      %v2470 = vadd.f32 %v2469, %v2439
      %v2471 = vadd.f32 %v2470, %v2440
      %v2472 = vadd.f32 %v2471, %v2441
      %v2473 = vadd.f32 %v2472, %v2442
      %v2474 = vadd.f32 %v2473, %v2443
      %v2475 = vadd.f32 %v2474, %v2444
      %v2476 = vadd.f32 %v2475, %v2445
      %v2477 = vadd.f32 %v2476, %v2446
      %v2478 = vadd.f32 %v2477, %v2447
      %v2479 = vadd.f32 %v2478, %v2448
      %v2480 = vadd.f32 %v2479, %v2449
      %v2481 = vadd.f32 %v2480, %v2450
      %v2482 = vadd.f32 %v2481, %v2451
      %v2483 = vadd.f32 %v2482, %v2452
      %v2484 = vadd.f32 %v2483, %v2453
      %v2485 = vadd.f32 %v2484, %v2454
      %v2486 = vrot.slane %v2485, 4
      %v2487 = vadd.f32 %v2485, %v2486
      %v2488 = vrot.slane %v2487, 2
      %v2489 = vadd.f32 %v2487, %v2488
      %v2490 = vrot.slane %v2489, 1
      %v2491 = vadd.f32 %v2489, %v2490
      %2492 = vst [vmem:[%s265] sm:$0x1] %v2389
      %2493 = vst [vmem:[%s268] sm:$0x1] %v2491
      %v2494 = vpack.c.bf16 %v2321, %v2321
      %v2495 = vpack.c.bf16 %v2322, %v2322
      %v2496 = vpack.c.bf16 %v2323, %v2323
      %v2497 = vpack.c.bf16 %v2324, %v2324
      %v2498 = vpack.c.bf16 %v2325, %v2325
      %v2499 = vpack.c.bf16 %v2326, %v2326
      %v2500 = vpack.c.bf16 %v2327, %v2327
      %v2501 = vpack.c.bf16 %v2328, %v2328
      %v2502 = vpack.c.bf16 %v2329, %v2329
      %v2503 = vpack.c.bf16 %v2330, %v2330
      %v2504 = vpack.c.bf16 %v2331, %v2331
      %v2505 = vpack.c.bf16 %v2332, %v2332
      %v2506 = vpack.c.bf16 %v2333, %v2333
      %v2507 = vpack.c.bf16 %v2334, %v2334
      %v2508 = vpack.c.bf16 %v2335, %v2335
      %v2509 = vpack.c.bf16 %v2336, %v2336
      %v2510 = vpack.c.bf16 %v2337, %v2337
      %v2511 = vpack.c.bf16 %v2338, %v2338
      %v2512 = vpack.c.bf16 %v2339, %v2339
      %v2513 = vpack.c.bf16 %v2340, %v2340
      %v2514 = vpack.c.bf16 %v2341, %v2341
      %v2515 = vpack.c.bf16 %v2342, %v2342
      %v2516 = vpack.c.bf16 %v2343, %v2343
      %v2517 = vpack.c.bf16 %v2344, %v2344
      %v2518 = vpack.c.bf16 %v2345, %v2345
      %v2519 = vpack.c.bf16 %v2346, %v2346
      %v2520 = vpack.c.bf16 %v2347, %v2347
      %v2521 = vpack.c.bf16 %v2348, %v2348
      %v2522 = vpack.c.bf16 %v2349, %v2349
      %v2523 = vpack.c.bf16 %v2350, %v2350
      %v2524 = vpack.c.bf16 %v2351, %v2351
      %v2525 = vpack.c.bf16 %v2352, %v2352
      %2526 = vst [vmem:[%s262] sm:$0xf] %v2494
      %2527 = vst [vmem:[%s262 + $0x4] sm:$0xf] %v2495
      %2528 = vst [vmem:[%s262 + $0x8] sm:$0xf] %v2496
      %2529 = vst [vmem:[%s262 + $0xc] sm:$0xf] %v2497
      %2530 = vst [vmem:[%s262 + $0x10] sm:$0xf] %v2498
      %2531 = vst [vmem:[%s262 + $0x14] sm:$0xf] %v2499
      %2532 = vst [vmem:[%s262 + $0x18] sm:$0xf] %v2500
      %2533 = vst [vmem:[%s262 + $0x1c] sm:$0xf] %v2501
      %2534 = vst [vmem:[%s262 + $0x20] sm:$0xf] %v2502
      %2535 = vst [vmem:[%s262 + $0x24] sm:$0xf] %v2503
      %2536 = vst [vmem:[%s262 + $0x28] sm:$0xf] %v2504
      %2537 = vst [vmem:[%s262 + $0x2c] sm:$0xf] %v2505
      %2538 = vst [vmem:[%s262 + $0x30] sm:$0xf] %v2506
      %2539 = vst [vmem:[%s262 + $0x34] sm:$0xf] %v2507
      %2540 = vst [vmem:[%s262 + $0x38] sm:$0xf] %v2508
      %2541 = vst [vmem:[%s262 + $0x3c] sm:$0xf] %v2509
      %2542 = vst [vmem:[%s262 + $0x40] sm:$0xf] %v2510
      %2543 = vst [vmem:[%s262 + $0x44] sm:$0xf] %v2511
      %2544 = vst [vmem:[%s262 + $0x48] sm:$0xf] %v2512
      %2545 = vst [vmem:[%s262 + $0x4c] sm:$0xf] %v2513
      %2546 = vst [vmem:[%s262 + $0x50] sm:$0xf] %v2514
      %2547 = vst [vmem:[%s262 + $0x54] sm:$0xf] %v2515
      %2548 = vst [vmem:[%s262 + $0x58] sm:$0xf] %v2516
      %2549 = vst [vmem:[%s262 + $0x5c] sm:$0xf] %v2517
      %2550 = vst [vmem:[%s262 + $0x60] sm:$0xf] %v2518
      %2551 = vst [vmem:[%s262 + $0x64] sm:$0xf] %v2519
      %2552 = vst [vmem:[%s262 + $0x68] sm:$0xf] %v2520
      %2553 = vst [vmem:[%s262 + $0x6c] sm:$0xf] %v2521
      %2554 = vst [vmem:[%s262 + $0x70] sm:$0xf] %v2522
      %2555 = vst [vmem:[%s262 + $0x74] sm:$0xf] %v2523
      %2556 = vst [vmem:[%s262 + $0x78] sm:$0xf] %v2524
      %2557 = vst [vmem:[%s262 + $0x7c] sm:$0xf] %v2525
      %p2558 = scmp.lt.s32.totalorder %s18, 1
      %s2559 = scalar_select %p2558, %s18, 1
      %s2560 = smul.addr %s2559, 32
      %s2561 = smul.addr %s2560, 4
      %s2562 = scalar_lea.vmem %s4, %s2561
      %p2563 = scmp.lt.s32.totalorder %s18, 1
      %s2564 = scalar_select %p2563, %s18, 1
      %s2565 = scalar_lea.vmem %s5, %s2564
      %p2566 = scmp.lt.s32.totalorder %s18, 1
      %s2567 = scalar_select %p2566, %s18, 1
      %s2568 = scalar_lea.vmem %s6, %s2567
      // Predicated region
      $region37: #{bottleneck_block.7} parent=35 // pred_check
        %p2569 = pneg %p125
      $region38: #{bottleneck_block.7} parent=35 // pred_check_branch
        %2571 = sbr.rel (%p2569) target = $region40
      $region39: #{bottleneck_block.7} parent=35 // pred_region
        _
      $region40: #{bottleneck_block.7} parent=35 // pred_fallthru
        _
      // Predicated region
      $region41: #{bottleneck_block.7} parent=35 // pred_check
        %p2572 = pneg %p151
      $region42: #{bottleneck_block.7} parent=35 // pred_check_branch
        %2574 = sbr.rel (%p2572) target = $region44
      $region43: #{bottleneck_block.7} parent=35 // pred_region
        _
      $region44: #{bottleneck_block.7} parent=35 // pred_fallthru
        _
      // Predicated region
      $region45: #{bottleneck_block.7} parent=35 // pred_check
        %p2575 = pneg %p177
      $region46: #{bottleneck_block.7} parent=35 // pred_check_branch
        %2577 = sbr.rel (%p2575) target = $region48
      $region47: #{bottleneck_block.7} parent=35 // pred_region
        _
      $region48: #{bottleneck_block.7} parent=35 // pred_fallthru
        _
    $region36: #{bottleneck_block.7} parent=5 // pred_fallthru
      _
    %p2578 = scmp.le.s32.totalorder 2, %s13
    // Predicated region
    $region49: #{bottleneck_block.7} parent=5 // pred_check
      %p2579 = pneg %p2578
    $region50: #{bottleneck_block.7} parent=5 // pred_check_branch
      %2581 = sbr.rel (%p2579) target = $region52
    $region51: #{bottleneck_block.7} parent=5 // pred_region
      %s2582 = ssub.s32 %s13, 2
      // Predicated region
      $region53: #{bottleneck_block.7} parent=51 // pred_check
        %p2583 = pneg %p131
      $region54: #{bottleneck_block.7} parent=51 // pred_check_branch
        %2585 = sbr.rel (%p2583) target = $region56
      $region55: #{bottleneck_block.7} parent=51 // pred_region
        %p2586 = scmp.lt.s32.totalorder %s19, 1
        %s2587 = scalar_select %p2586, %s19, 1
        %s2588 = smul.addr %s2587, 32
        %s2589 = smul.addr %s2588, 4
        %s2590 = scalar_lea.vmem %s4, %s2589
      $region56: #{bottleneck_block.7} parent=51 // pred_fallthru
        _
      // Predicated region
      $region57: #{bottleneck_block.7} parent=51 // pred_check
        %p2591 = pneg %p157
      $region58: #{bottleneck_block.7} parent=51 // pred_check_branch
        %2593 = sbr.rel (%p2591) target = $region60
      $region59: #{bottleneck_block.7} parent=51 // pred_region
        %p2594 = scmp.lt.s32.totalorder %s19, 1
        %s2595 = scalar_select %p2594, %s19, 1
        %s2596 = scalar_lea.vmem %s5, %s2595
      $region60: #{bottleneck_block.7} parent=51 // pred_fallthru
        _
      // Predicated region
      $region61: #{bottleneck_block.7} parent=51 // pred_check
        %p2597 = pneg %p183
      $region62: #{bottleneck_block.7} parent=51 // pred_check_branch
        %2599 = sbr.rel (%p2597) target = $region64
      $region63: #{bottleneck_block.7} parent=51 // pred_region
        %p2600 = scmp.lt.s32.totalorder %s19, 1
        %s2601 = scalar_select %p2600, %s19, 1
        %s2602 = scalar_lea.vmem %s6, %s2601
      $region64: #{bottleneck_block.7} parent=51 // pred_fallthru
        _
    $region52: #{bottleneck_block.7} parent=5 // pred_fallthru
      _
  $region6: #{bottleneck_block.7} parent=0 // loop_footer
    %s17 = sadd.s32 1, %s13
  $region7: #{bottleneck_block.7} parent=0 // loop_footer_branch
    %12 = sbr.rel target = $region3
  $region8: #{bottleneck_block.7} parent=0 // loop_exit
    _

</llo_original>
